<compile_context>
chip_gen: v7x
topology: tpu7x:2x2x1
jax: 0.10.0
libtpu: 0.0.40
codegen_flags: <defaults>
</compile_context>

<pallas_src>
import numpy as np
import jax
import jax.numpy as jnp
from jax.experimental import pallas as pl
from jax.experimental.pallas import tpu as pltpu

# ----------------------------- static geometry ------------------------------
C1, C2, NCLS = 8, 16, 10
MARG = 62                 # conv2 halo in sparse-lane units (60*1 + 2*1)
L_IN = 1024               # 62 zeros | 30*30 zero-padded input | 62 zeros
L_R1 = 962                # conv1 output lanes  (g = 62 + 30*i + j)
L_V = 931                 # masked pool1 lanes  (g = 62 + 60*a + 2*b)
L_R2 = 807                # conv2 output lanes  (r = 60*a + 2*b)
L_U2 = 745                # pool2 lanes         (q = 120*e + 4*f)
KP = 128                  # per-channel (7*7 -> 128) padded flatten width

TAPS1 = tuple(30 * kh + kw for kh in range(3) for kw in range(3))
TAPS2 = tuple(60 * kh + 2 * kw for kh in range(3) for kw in range(3))


def _pool1_mask() -> np.ndarray:
    # 1.0 exactly at lanes g = 62 + 60*a + 2*b (valid pool1 pixels), else 0.
    m = np.zeros((1, L_V), np.float32)
    for a in range(14):
        for b in range(14):
            m[0, MARG + 60 * a + 2 * b] = 1.0
    return m


def _pool2_select() -> np.ndarray:
    # One-hot map: sparse pool2 lane (120*e + 4*f) -> dense slot (7*e + f).
    s = np.zeros((L_U2, KP), np.float32)
    for e in range(7):
        for f in range(7):
            s[120 * e + 4 * f, 7 * e + f] = 1.0
    return s


_POOL1_MASK = _pool1_mask()
_POOL2_SEL = _pool2_select()


# ------------------------------ fused kernel --------------------------------

def _cnn_fused_kernel(x_ref, w1_ref, b1_ref, w2_ref, b2_ref, mask_ref, sel_ref,
                      fc1w_ref, fc1b_ref, fc2w_ref, fc2b_ref, fc3w_ref,
                      fc3b_ref, o_ref):
    tb = x_ref.shape[0]
    x = x_ref[...]          # (TB, 1, L_IN)   flattened, zero-margined input
    w1 = w1_ref[...]        # (8, 9)
    b1 = b1_ref[...]        # (8, 1)
    w2 = w2_ref[...]        # (16, 72)
    b2 = b2_ref[...]        # (16, 1)
    mask = mask_ref[...]    # (1, L_V)
    sel = sel_ref[...]      # (L_U2, KP)

    flat_rows = []
    for t in range(tb):
        x0 = x[t]                                            # (1, L_IN)

        # conv1 (3x3, pad 1, 1->8) + bias + ReLU: 9 lane-shifted broadcast MACs
        acc1 = jnp.zeros((C1, L_R1), jnp.float32)
        for k, d in enumerate(TAPS1):
            acc1 = acc1 + w1[:, k:k + 1] * x0[:, d:d + L_R1]
        r1 = jnp.maximum(acc1 + b1, 0.0)                     # (8, L_R1)

        # 2x2 maxpool #1 (kept in sparse lane coords) + zero invalid lanes
        u1 = jnp.maximum(jnp.maximum(r1[:, 0:L_V], r1[:, 1:1 + L_V]),
                         jnp.maximum(r1[:, 30:30 + L_V], r1[:, 31:31 + L_V]))
        v = u1 * mask                                        # (8, L_V)

        # conv2 (3x3, pad 1, 8->16): im2col built in VMEM + single GEMM
        patches = jnp.concatenate([v[:, s:s + L_R2] for s in TAPS2], axis=0)
        r2 = jnp.dot(w2, patches, preferred_element_type=jnp.float32)
        r2 = jnp.maximum(r2 + b2, 0.0)                       # (16, L_R2)

        # 2x2 maxpool #2
        u2 = jnp.maximum(jnp.maximum(r2[:, 0:L_U2], r2[:, 2:2 + L_U2]),
                         jnp.maximum(r2[:, 60:60 + L_U2], r2[:, 62:62 + L_U2]))

        # compact sparse lanes -> dense (128-padded) 7x7 block per channel
        u2d = jnp.dot(u2, sel, preferred_element_type=jnp.float32)  # (16, KP)

        # flatten in torch NCHW order (channel-major), lane-tile aligned
        flat_rows.append(
            jnp.concatenate([u2d[c:c + 1, :] for c in range(C2)], axis=1))

    afc = flat_rows[0] if tb == 1 else jnp.concatenate(flat_rows, axis=0)

    # fc1 -> fc2 -> ReLU -> fc3, batched across the TB images of this tile
    h = jnp.dot(afc, fc1w_ref[...], preferred_element_type=jnp.float32)
    h = h + fc1b_ref[...]
    h = jnp.dot(h, fc2w_ref[...], preferred_element_type=jnp.float32)
    h = jnp.maximum(h + fc2b_ref[...], 0.0)
    out = jnp.dot(h, fc3w_ref[...], preferred_element_type=jnp.float32)
    out = out + fc3b_ref[...]                                # (TB, NCLS)

    for t in range(tb):
        o_ref[t] = out[t:t + 1, :]


# ------------------------------ wrapper --------------------------------------

def cnn_forward(x_nchw, params, batch_tile=None):
    n = x_nchw.shape[0]
    if batch_tile is None:
        batch_tile = max(1, min(8, n // 2))
    tb = max(1, int(batch_tile))
    n_pad = -(-n // tb) * tb

    # Input glue (raw input only): zero-pad spatially, flatten, add halo lanes.
    x = x_nchw.reshape(n, 28, 28).astype(jnp.float32)
    x = jnp.pad(x, ((0, n_pad - n), (1, 1), (1, 1)))             # (n_pad,30,30)
    x = x.reshape(n_pad, 1, 900)
    x = jnp.pad(x, ((0, 0), (0, 0), (MARG, L_IN - 900 - MARG)))  # (n_pad,1,1024)

    # One-time weight packing (tiny; folded NCHW-flatten into fc1).
    w1 = jnp.transpose(params["conv1_w"], (0, 2, 3, 1)).reshape(C1, 9)
    b1 = params["conv1_b"].reshape(C1, 1)
    w2 = jnp.transpose(params["conv2_w"], (0, 2, 3, 1)).reshape(C2, 9 * C1)
    b2 = params["conv2_b"].reshape(C2, 1)
    fc1w = params["fc1_w"].T.reshape(C2, 49, 120)
    fc1w = jnp.pad(fc1w, ((0, 0), (0, KP - 49), (0, 0))).reshape(C2 * KP, 120)
    fc1b = params["fc1_b"].reshape(1, 120)
    fc2w = params["fc2_w"].T                                     # (120, 60)
    fc2b = params["fc2_b"].reshape(1, 60)
    fc3w = params["fc3_w"].T                                     # (60, 10)
    fc3b = params["fc3_b"].reshape(1, NCLS)
    mask = jnp.asarray(_POOL1_MASK)
    sel = jnp.asarray(_POOL2_SEL)

    const2 = lambda shape: pl.BlockSpec(shape, lambda i: (0, 0))

    out = pl.pallas_call(
        _cnn_fused_kernel,
        out_shape=jax.ShapeDtypeStruct((n_pad, 1, NCLS), jnp.float32),
        grid=(n_pad // tb,),
        in_specs=[
            pl.BlockSpec((tb, 1, L_IN), lambda i: (i, 0, 0)),
            const2((C1, 9)), const2((C1, 1)),
            const2((C2, 9 * C1)), const2((C2, 1)),
            const2((1, L_V)), const2((L_U2, KP)),
            const2((C2 * KP, 120)), const2((1, 120)),
            const2((120, 60)), const2((1, 60)),
            const2((60, NCLS)), const2((1, NCLS)),
        ],
        out_specs=pl.BlockSpec((tb, 1, NCLS), lambda i: (i, 0, 0)),
        compiler_params=pltpu.CompilerParams(
            dimension_semantics=("parallel",)),
    )(x, w1, b1, w2, b2, mask, sel, fc1w, fc1b, fc2w, fc2b, fc3w, fc3b)

    return out.reshape(n_pad, NCLS)[:n]


# ------------------------- pure-JAX reference --------------------------------

def reference_forward(x_nchw, p):
    x = jnp.transpose(x_nchw, (0, 2, 3, 1))
    for wk, bk in (("conv1_w", "conv1_b"), ("conv2_w", "conv2_b")):
        w = jnp.transpose(p[wk], (2, 3, 1, 0))  # HWIO
        x = jax.lax.conv_general_dilated(
            x, w, (1, 1), "SAME", dimension_numbers=("NHWC", "HWIO", "NHWC"))
        x = jax.nn.relu(x + p[bk])
        x = jax.lax.reduce_window(x, -jnp.inf, jax.lax.max,
                                  (1, 2, 2, 1), (1, 2, 2, 1), "VALID")
    x = jnp.transpose(x, (0, 3, 1, 2)).reshape(x.shape[0], -1)
    x = x @ p["fc1_w"].T + p["fc1_b"]
    x = x @ p["fc2_w"].T + p["fc2_b"]
    x = jax.nn.relu(x)
    x = x @ p["fc3_w"].T + p["fc3_b"]
    return x


# ------------------------------ params ---------------------------------------

def init_params(key):
    ks = jax.random.split(key, 10)
    s = 0.1
    return {
        "conv1_w": s * jax.random.normal(ks[0], (8, 1, 3, 3), jnp.float32),
        "conv1_b": s * jax.random.normal(ks[1], (8,), jnp.float32),
        "conv2_w": s * jax.random.normal(ks[2], (16, 8, 3, 3), jnp.float32),
        "conv2_b": s * jax.random.normal(ks[3], (16,), jnp.float32),
        "fc1_w":   s * jax.random.normal(ks[4], (120, 784), jnp.float32),
        "fc1_b":   s * jax.random.normal(ks[5], (120,), jnp.float32),
        "fc2_w":   s * jax.random.normal(ks[6], (60, 120), jnp.float32),
        "fc2_b":   s * jax.random.normal(ks[7], (60,), jnp.float32),
        "fc3_w":   s * jax.random.normal(ks[8], (10, 60), jnp.float32),
        "fc3_b":   s * jax.random.normal(ks[9], (10,), jnp.float32),
    }


if __name__ == "__main__":
    key = jax.random.PRNGKey(0)
    k_x, k_p = jax.random.split(key)
    N = 2
    x = jax.random.normal(k_x, (N, 1, 28, 28), jnp.float32)   # NCHW, 28x28
    params = init_params(k_p)

    out = jax.block_until_ready(jax.jit(cnn_forward)(x, params))
    assert out.shape == (N, 10) and out.dtype == jnp.float32

    ref = jax.block_until_ready(jax.jit(reference_forward)(x, params))
    assert jnp.allclose(out, ref, atol=5e-3, rtol=5e-3), (
        f"max abs diff {jnp.max(jnp.abs(out - ref))}")

    print("KERNEL_OK")
</pallas_src>

<mosaic_0001>
module attributes {stable_mosaic.version = 11 : i64} {
  func.func @_cnn_fused_kernel(%arg0: i32, %arg1: memref<1x1x1024xf32, #tpu.memory_space<vmem>>, %arg2: memref<8x9xf32, #tpu.memory_space<vmem>>, %arg3: memref<8x1xf32, #tpu.memory_space<vmem>>, %arg4: memref<16x72xf32, #tpu.memory_space<vmem>>, %arg5: memref<16x1xf32, #tpu.memory_space<vmem>>, %arg6: memref<1x931xf32, #tpu.memory_space<vmem>>, %arg7: memref<745x128xf32, #tpu.memory_space<vmem>>, %arg8: memref<2048x120xf32, #tpu.memory_space<vmem>>, %arg9: memref<1x120xf32, #tpu.memory_space<vmem>>, %arg10: memref<120x60xf32, #tpu.memory_space<vmem>>, %arg11: memref<1x60xf32, #tpu.memory_space<vmem>>, %arg12: memref<60x10xf32, #tpu.memory_space<vmem>>, %arg13: memref<1x10xf32, #tpu.memory_space<vmem>>, %arg14: memref<1x1x10xf32, #tpu.memory_space<vmem>>) attributes {dimension_semantics = [#tpu.dimension_semantics<parallel>], iteration_bounds = array<i64: 2>, scalar_prefetch = 0 : i64, scratch_operands = 0 : i64, tpu.core_type = #tpu.core_type<tc>, window_params = [{transform_indices = @transform_0, window_bounds = array<i64: 1, 1, 1024>}, {pipeline_mode = #tpu.pipeline_mode<synchronous>, transform_indices = @transform_1, window_bounds = array<i64: 8, 9>}, {pipeline_mode = #tpu.pipeline_mode<synchronous>, transform_indices = @transform_2, window_bounds = array<i64: 8, 1>}, {pipeline_mode = #tpu.pipeline_mode<synchronous>, transform_indices = @transform_3, window_bounds = array<i64: 16, 72>}, {pipeline_mode = #tpu.pipeline_mode<synchronous>, transform_indices = @transform_4, window_bounds = array<i64: 16, 1>}, {pipeline_mode = #tpu.pipeline_mode<synchronous>, transform_indices = @transform_5, window_bounds = array<i64: 1, 931>}, {pipeline_mode = #tpu.pipeline_mode<synchronous>, transform_indices = @transform_6, window_bounds = array<i64: 745, 128>}, {pipeline_mode = #tpu.pipeline_mode<synchronous>, transform_indices = @transform_7, window_bounds = array<i64: 2048, 120>}, {pipeline_mode = #tpu.pipeline_mode<synchronous>, transform_indices = @transform_8, window_bounds = array<i64: 1, 120>}, {pipeline_mode = #tpu.pipeline_mode<synchronous>, transform_indices = @transform_9, window_bounds = array<i64: 120, 60>}, {pipeline_mode = #tpu.pipeline_mode<synchronous>, transform_indices = @transform_10, window_bounds = array<i64: 1, 60>}, {pipeline_mode = #tpu.pipeline_mode<synchronous>, transform_indices = @transform_11, window_bounds = array<i64: 60, 10>}, {pipeline_mode = #tpu.pipeline_mode<synchronous>, transform_indices = @transform_12, window_bounds = array<i64: 1, 10>}, {transform_indices = @transform_13, window_bounds = array<i64: 1, 1, 10>}]} {
    %c0 = arith.constant 0 : index
    %c0_0 = arith.constant 0 : index
    %c0_1 = arith.constant 0 : index
    %0 = vector.load %arg1[%c0, %c0_0, %c0_1] : memref<1x1x1024xf32, #tpu.memory_space<vmem>>, vector<1x1x1024xf32>
    %c0_2 = arith.constant 0 : index
    %c0_3 = arith.constant 0 : index
    %1 = vector.load %arg2[%c0_2, %c0_3] : memref<8x9xf32, #tpu.memory_space<vmem>>, vector<8x9xf32>
    %c0_4 = arith.constant 0 : index
    %c0_5 = arith.constant 0 : index
    %2 = vector.load %arg3[%c0_4, %c0_5] : memref<8x1xf32, #tpu.memory_space<vmem>>, vector<8x1xf32>
    %c0_6 = arith.constant 0 : index
    %c0_7 = arith.constant 0 : index
    %3 = vector.load %arg4[%c0_6, %c0_7] : memref<16x72xf32, #tpu.memory_space<vmem>>, vector<16x72xf32>
    %c0_8 = arith.constant 0 : index
    %c0_9 = arith.constant 0 : index
    %4 = vector.load %arg5[%c0_8, %c0_9] : memref<16x1xf32, #tpu.memory_space<vmem>>, vector<16x1xf32>
    %c0_10 = arith.constant 0 : index
    %c0_11 = arith.constant 0 : index
    %5 = vector.load %arg6[%c0_10, %c0_11] : memref<1x931xf32, #tpu.memory_space<vmem>>, vector<1x931xf32>
    %c0_12 = arith.constant 0 : index
    %c0_13 = arith.constant 0 : index
    %6 = vector.load %arg7[%c0_12, %c0_13] : memref<745x128xf32, #tpu.memory_space<vmem>>, vector<745x128xf32>
    %7 = vector.shape_cast %0 : vector<1x1x1024xf32> to vector<1x1024xf32>
    %cst = arith.constant 0.000000e+00 : f32
    %8 = vector.broadcast %cst : f32 to vector<8x962xf32>
    %9 = vector.extract_strided_slice %1 {offsets = [0, 0], sizes = [8, 1], strides = [1, 1]} : vector<8x9xf32> to vector<8x1xf32>
    %10 = vector.extract_strided_slice %7 {offsets = [0, 0], sizes = [1, 962], strides = [1, 1]} : vector<1x1024xf32> to vector<1x962xf32>
    %11 = vector.broadcast %9 : vector<8x1xf32> to vector<8x962xf32>
    %12 = vector.broadcast %10 : vector<1x962xf32> to vector<8x962xf32>
    %13 = arith.mulf %11, %12 : vector<8x962xf32>
    %14 = arith.addf %8, %13 : vector<8x962xf32>
    %15 = vector.extract_strided_slice %1 {offsets = [0, 1], sizes = [8, 1], strides = [1, 1]} : vector<8x9xf32> to vector<8x1xf32>
    %16 = vector.extract_strided_slice %7 {offsets = [0, 1], sizes = [1, 962], strides = [1, 1]} : vector<1x1024xf32> to vector<1x962xf32>
    %17 = vector.broadcast %15 : vector<8x1xf32> to vector<8x962xf32>
    %18 = vector.broadcast %16 : vector<1x962xf32> to vector<8x962xf32>
    %19 = arith.mulf %17, %18 : vector<8x962xf32>
    %20 = arith.addf %14, %19 : vector<8x962xf32>
    %21 = vector.extract_strided_slice %1 {offsets = [0, 2], sizes = [8, 1], strides = [1, 1]} : vector<8x9xf32> to vector<8x1xf32>
    %22 = vector.extract_strided_slice %7 {offsets = [0, 2], sizes = [1, 962], strides = [1, 1]} : vector<1x1024xf32> to vector<1x962xf32>
    %23 = vector.broadcast %21 : vector<8x1xf32> to vector<8x962xf32>
    %24 = vector.broadcast %22 : vector<1x962xf32> to vector<8x962xf32>
    %25 = arith.mulf %23, %24 : vector<8x962xf32>
    %26 = arith.addf %20, %25 : vector<8x962xf32>
    %27 = vector.extract_strided_slice %1 {offsets = [0, 3], sizes = [8, 1], strides = [1, 1]} : vector<8x9xf32> to vector<8x1xf32>
    %28 = vector.extract_strided_slice %7 {offsets = [0, 30], sizes = [1, 962], strides = [1, 1]} : vector<1x1024xf32> to vector<1x962xf32>
    %29 = vector.broadcast %27 : vector<8x1xf32> to vector<8x962xf32>
    %30 = vector.broadcast %28 : vector<1x962xf32> to vector<8x962xf32>
    %31 = arith.mulf %29, %30 : vector<8x962xf32>
    %32 = arith.addf %26, %31 : vector<8x962xf32>
    %33 = vector.extract_strided_slice %1 {offsets = [0, 4], sizes = [8, 1], strides = [1, 1]} : vector<8x9xf32> to vector<8x1xf32>
    %34 = vector.extract_strided_slice %7 {offsets = [0, 31], sizes = [1, 962], strides = [1, 1]} : vector<1x1024xf32> to vector<1x962xf32>
    %35 = vector.broadcast %33 : vector<8x1xf32> to vector<8x962xf32>
    %36 = vector.broadcast %34 : vector<1x962xf32> to vector<8x962xf32>
    %37 = arith.mulf %35, %36 : vector<8x962xf32>
    %38 = arith.addf %32, %37 : vector<8x962xf32>
    %39 = vector.extract_strided_slice %1 {offsets = [0, 5], sizes = [8, 1], strides = [1, 1]} : vector<8x9xf32> to vector<8x1xf32>
    %40 = vector.extract_strided_slice %7 {offsets = [0, 32], sizes = [1, 962], strides = [1, 1]} : vector<1x1024xf32> to vector<1x962xf32>
    %41 = vector.broadcast %39 : vector<8x1xf32> to vector<8x962xf32>
    %42 = vector.broadcast %40 : vector<1x962xf32> to vector<8x962xf32>
    %43 = arith.mulf %41, %42 : vector<8x962xf32>
    %44 = arith.addf %38, %43 : vector<8x962xf32>
    %45 = vector.extract_strided_slice %1 {offsets = [0, 6], sizes = [8, 1], strides = [1, 1]} : vector<8x9xf32> to vector<8x1xf32>
    %46 = vector.extract_strided_slice %7 {offsets = [0, 60], sizes = [1, 962], strides = [1, 1]} : vector<1x1024xf32> to vector<1x962xf32>
    %47 = vector.broadcast %45 : vector<8x1xf32> to vector<8x962xf32>
    %48 = vector.broadcast %46 : vector<1x962xf32> to vector<8x962xf32>
    %49 = arith.mulf %47, %48 : vector<8x962xf32>
    %50 = arith.addf %44, %49 : vector<8x962xf32>
    %51 = vector.extract_strided_slice %1 {offsets = [0, 7], sizes = [8, 1], strides = [1, 1]} : vector<8x9xf32> to vector<8x1xf32>
    %52 = vector.extract_strided_slice %7 {offsets = [0, 61], sizes = [1, 962], strides = [1, 1]} : vector<1x1024xf32> to vector<1x962xf32>
    %53 = vector.broadcast %51 : vector<8x1xf32> to vector<8x962xf32>
    %54 = vector.broadcast %52 : vector<1x962xf32> to vector<8x962xf32>
    %55 = arith.mulf %53, %54 : vector<8x962xf32>
    %56 = arith.addf %50, %55 : vector<8x962xf32>
    %57 = vector.extract_strided_slice %1 {offsets = [0, 8], sizes = [8, 1], strides = [1, 1]} : vector<8x9xf32> to vector<8x1xf32>
    %58 = vector.extract_strided_slice %7 {offsets = [0, 62], sizes = [1, 962], strides = [1, 1]} : vector<1x1024xf32> to vector<1x962xf32>
    %59 = vector.broadcast %57 : vector<8x1xf32> to vector<8x962xf32>
    %60 = vector.broadcast %58 : vector<1x962xf32> to vector<8x962xf32>
    %61 = arith.mulf %59, %60 : vector<8x962xf32>
    %62 = arith.addf %56, %61 : vector<8x962xf32>
    %63 = vector.broadcast %2 : vector<8x1xf32> to vector<8x962xf32>
    %64 = arith.addf %62, %63 : vector<8x962xf32>
    %cst_14 = arith.constant 0.000000e+00 : f32
    %65 = vector.broadcast %cst_14 : f32 to vector<8x962xf32>
    %66 = arith.maximumf %64, %65 : vector<8x962xf32>
    %67 = vector.extract_strided_slice %66 {offsets = [0, 0], sizes = [8, 931], strides = [1, 1]} : vector<8x962xf32> to vector<8x931xf32>
    %68 = vector.extract_strided_slice %66 {offsets = [0, 1], sizes = [8, 931], strides = [1, 1]} : vector<8x962xf32> to vector<8x931xf32>
    %69 = arith.maximumf %67, %68 : vector<8x931xf32>
    %70 = vector.extract_strided_slice %66 {offsets = [0, 30], sizes = [8, 931], strides = [1, 1]} : vector<8x962xf32> to vector<8x931xf32>
    %71 = vector.extract_strided_slice %66 {offsets = [0, 31], sizes = [8, 931], strides = [1, 1]} : vector<8x962xf32> to vector<8x931xf32>
    %72 = arith.maximumf %70, %71 : vector<8x931xf32>
    %73 = arith.maximumf %69, %72 : vector<8x931xf32>
    %74 = vector.broadcast %5 : vector<1x931xf32> to vector<8x931xf32>
    %75 = arith.mulf %73, %74 : vector<8x931xf32>
    %76 = vector.extract_strided_slice %75 {offsets = [0, 0], sizes = [8, 807], strides = [1, 1]} : vector<8x931xf32> to vector<8x807xf32>
    %77 = vector.extract_strided_slice %75 {offsets = [0, 2], sizes = [8, 807], strides = [1, 1]} : vector<8x931xf32> to vector<8x807xf32>
    %78 = vector.extract_strided_slice %75 {offsets = [0, 4], sizes = [8, 807], strides = [1, 1]} : vector<8x931xf32> to vector<8x807xf32>
    %79 = vector.extract_strided_slice %75 {offsets = [0, 60], sizes = [8, 807], strides = [1, 1]} : vector<8x931xf32> to vector<8x807xf32>
    %80 = vector.extract_strided_slice %75 {offsets = [0, 62], sizes = [8, 807], strides = [1, 1]} : vector<8x931xf32> to vector<8x807xf32>
    %81 = vector.extract_strided_slice %75 {offsets = [0, 64], sizes = [8, 807], strides = [1, 1]} : vector<8x931xf32> to vector<8x807xf32>
    %82 = vector.extract_strided_slice %75 {offsets = [0, 120], sizes = [8, 807], strides = [1, 1]} : vector<8x931xf32> to vector<8x807xf32>
    %83 = vector.extract_strided_slice %75 {offsets = [0, 122], sizes = [8, 807], strides = [1, 1]} : vector<8x931xf32> to vector<8x807xf32>
    %84 = vector.extract_strided_slice %75 {offsets = [0, 124], sizes = [8, 807], strides = [1, 1]} : vector<8x931xf32> to vector<8x807xf32>
    %85 = tpu.concatenate %76, %77, %78, %79, %80, %81, %82, %83, %84 in 0 : vector<8x807xf32>, vector<8x807xf32>, vector<8x807xf32>, vector<8x807xf32>, vector<8x807xf32>, vector<8x807xf32>, vector<8x807xf32>, vector<8x807xf32>, vector<8x807xf32> -> vector<72x807xf32>
    %cst_15 = arith.constant dense<0.000000e+00> : vector<16x807xf32>
    %86 = tpu.matmul %3, %85, %cst_15 {dimension_numbers = #tpu.dot_dimension_numbers<[1], [0], [0], [1], [0, 0, 1, 1], [], []>} : vector<16x72xf32>, vector<72x807xf32>, vector<16x807xf32> -> vector<16x807xf32>
    %87 = vector.broadcast %4 : vector<16x1xf32> to vector<16x807xf32>
    %88 = arith.addf %86, %87 : vector<16x807xf32>
    %cst_16 = arith.constant 0.000000e+00 : f32
    %89 = vector.broadcast %cst_16 : f32 to vector<16x807xf32>
    %90 = arith.maximumf %88, %89 : vector<16x807xf32>
    %91 = vector.extract_strided_slice %90 {offsets = [0, 0], sizes = [16, 745], strides = [1, 1]} : vector<16x807xf32> to vector<16x745xf32>
    %92 = vector.extract_strided_slice %90 {offsets = [0, 2], sizes = [16, 745], strides = [1, 1]} : vector<16x807xf32> to vector<16x745xf32>
    %93 = arith.maximumf %91, %92 : vector<16x745xf32>
    %94 = vector.extract_strided_slice %90 {offsets = [0, 60], sizes = [16, 745], strides = [1, 1]} : vector<16x807xf32> to vector<16x745xf32>
    %95 = vector.extract_strided_slice %90 {offsets = [0, 62], sizes = [16, 745], strides = [1, 1]} : vector<16x807xf32> to vector<16x745xf32>
    %96 = arith.maximumf %94, %95 : vector<16x745xf32>
    %97 = arith.maximumf %93, %96 : vector<16x745xf32>
    %cst_17 = arith.constant dense<0.000000e+00> : vector<16x128xf32>
    %98 = tpu.matmul %97, %6, %cst_17 {dimension_numbers = #tpu.dot_dimension_numbers<[1], [0], [0], [1], [0, 0, 1, 1], [], []>} : vector<16x745xf32>, vector<745x128xf32>, vector<16x128xf32> -> vector<16x128xf32>
    %99 = vector.extract_strided_slice %98 {offsets = [0, 0], sizes = [1, 128], strides = [1, 1]} : vector<16x128xf32> to vector<1x128xf32>
    %100 = vector.extract_strided_slice %98 {offsets = [1, 0], sizes = [1, 128], strides = [1, 1]} : vector<16x128xf32> to vector<1x128xf32>
    %101 = vector.extract_strided_slice %98 {offsets = [2, 0], sizes = [1, 128], strides = [1, 1]} : vector<16x128xf32> to vector<1x128xf32>
    %102 = vector.extract_strided_slice %98 {offsets = [3, 0], sizes = [1, 128], strides = [1, 1]} : vector<16x128xf32> to vector<1x128xf32>
    %103 = vector.extract_strided_slice %98 {offsets = [4, 0], sizes = [1, 128], strides = [1, 1]} : vector<16x128xf32> to vector<1x128xf32>
    %104 = vector.extract_strided_slice %98 {offsets = [5, 0], sizes = [1, 128], strides = [1, 1]} : vector<16x128xf32> to vector<1x128xf32>
    %105 = vector.extract_strided_slice %98 {offsets = [6, 0], sizes = [1, 128], strides = [1, 1]} : vector<16x128xf32> to vector<1x128xf32>
    %106 = vector.extract_strided_slice %98 {offsets = [7, 0], sizes = [1, 128], strides = [1, 1]} : vector<16x128xf32> to vector<1x128xf32>
    %107 = vector.extract_strided_slice %98 {offsets = [8, 0], sizes = [1, 128], strides = [1, 1]} : vector<16x128xf32> to vector<1x128xf32>
    %108 = vector.extract_strided_slice %98 {offsets = [9, 0], sizes = [1, 128], strides = [1, 1]} : vector<16x128xf32> to vector<1x128xf32>
    %109 = vector.extract_strided_slice %98 {offsets = [10, 0], sizes = [1, 128], strides = [1, 1]} : vector<16x128xf32> to vector<1x128xf32>
    %110 = vector.extract_strided_slice %98 {offsets = [11, 0], sizes = [1, 128], strides = [1, 1]} : vector<16x128xf32> to vector<1x128xf32>
    %111 = vector.extract_strided_slice %98 {offsets = [12, 0], sizes = [1, 128], strides = [1, 1]} : vector<16x128xf32> to vector<1x128xf32>
    %112 = vector.extract_strided_slice %98 {offsets = [13, 0], sizes = [1, 128], strides = [1, 1]} : vector<16x128xf32> to vector<1x128xf32>
    %113 = vector.extract_strided_slice %98 {offsets = [14, 0], sizes = [1, 128], strides = [1, 1]} : vector<16x128xf32> to vector<1x128xf32>
    %114 = vector.extract_strided_slice %98 {offsets = [15, 0], sizes = [1, 128], strides = [1, 1]} : vector<16x128xf32> to vector<1x128xf32>
    %115 = tpu.concatenate %99, %100, %101, %102, %103, %104, %105, %106, %107, %108, %109, %110, %111, %112, %113, %114 in 1 : vector<1x128xf32>, vector<1x128xf32>, vector<1x128xf32>, vector<1x128xf32>, vector<1x128xf32>, vector<1x128xf32>, vector<1x128xf32>, vector<1x128xf32>, vector<1x128xf32>, vector<1x128xf32>, vector<1x128xf32>, vector<1x128xf32>, vector<1x128xf32>, vector<1x128xf32>, vector<1x128xf32>, vector<1x128xf32> -> vector<1x2048xf32>
    %c0_18 = arith.constant 0 : index
    %c0_19 = arith.constant 0 : index
    %116 = vector.load %arg8[%c0_18, %c0_19] : memref<2048x120xf32, #tpu.memory_space<vmem>>, vector<2048x120xf32>
    %cst_20 = arith.constant dense<0.000000e+00> : vector<1x120xf32>
    %117 = tpu.matmul %115, %116, %cst_20 {dimension_numbers = #tpu.dot_dimension_numbers<[1], [0], [0], [1], [0, 0, 1, 1], [], []>} : vector<1x2048xf32>, vector<2048x120xf32>, vector<1x120xf32> -> vector<1x120xf32>
    %c0_21 = arith.constant 0 : index
    %c0_22 = arith.constant 0 : index
    %118 = vector.load %arg9[%c0_21, %c0_22] : memref<1x120xf32, #tpu.memory_space<vmem>>, vector<1x120xf32>
    %119 = arith.addf %117, %118 : vector<1x120xf32>
    %c0_23 = arith.constant 0 : index
    %c0_24 = arith.constant 0 : index
    %120 = vector.load %arg10[%c0_23, %c0_24] : memref<120x60xf32, #tpu.memory_space<vmem>>, vector<120x60xf32>
    %cst_25 = arith.constant dense<0.000000e+00> : vector<1x60xf32>
    %121 = tpu.matmul %119, %120, %cst_25 {dimension_numbers = #tpu.dot_dimension_numbers<[1], [0], [0], [1], [0, 0, 1, 1], [], []>} : vector<1x120xf32>, vector<120x60xf32>, vector<1x60xf32> -> vector<1x60xf32>
    %c0_26 = arith.constant 0 : index
    %c0_27 = arith.constant 0 : index
    %122 = vector.load %arg11[%c0_26, %c0_27] : memref<1x60xf32, #tpu.memory_space<vmem>>, vector<1x60xf32>
    %123 = arith.addf %121, %122 : vector<1x60xf32>
    %cst_28 = arith.constant 0.000000e+00 : f32
    %124 = vector.broadcast %cst_28 : f32 to vector<1x60xf32>
    %125 = arith.maximumf %123, %124 : vector<1x60xf32>
    %c0_29 = arith.constant 0 : index
    %c0_30 = arith.constant 0 : index
    %126 = vector.load %arg12[%c0_29, %c0_30] : memref<60x10xf32, #tpu.memory_space<vmem>>, vector<60x10xf32>
    %cst_31 = arith.constant dense<0.000000e+00> : vector<1x10xf32>
    %127 = tpu.matmul %125, %126, %cst_31 {dimension_numbers = #tpu.dot_dimension_numbers<[1], [0], [0], [1], [0, 0, 1, 1], [], []>} : vector<1x60xf32>, vector<60x10xf32>, vector<1x10xf32> -> vector<1x10xf32>
    %c0_32 = arith.constant 0 : index
    %c0_33 = arith.constant 0 : index
    %128 = vector.load %arg13[%c0_32, %c0_33] : memref<1x10xf32, #tpu.memory_space<vmem>>, vector<1x10xf32>
    %129 = arith.addf %127, %128 : vector<1x10xf32>
    %c0_34 = arith.constant 0 : index
    %c0_35 = arith.constant 0 : index
    %c0_36 = arith.constant 0 : index
    %130 = vector.load %arg14[%c0_34, %c0_35, %c0_36] : memref<1x1x10xf32, #tpu.memory_space<vmem>>, vector<1x1x10xf32>
    %131 = vector.shape_cast %130 : vector<1x1x10xf32> to vector<1x10xf32>
    %132 = vector.shape_cast %129 : vector<1x10xf32> to vector<1x1x10xf32>
    tpu.vector_store %arg14[%c0_34, %c0_35, %c0_36], %132 {strides = array<i32>} : memref<1x1x10xf32, #tpu.memory_space<vmem>>, vector<1x1x10xf32>,
    return
  }
  func.func @transform_0(%arg0: i32) -> (i32, i32, i32) {
    %c0_i32 = arith.constant 0 : i32
    %c0_i32_0 = arith.constant 0 : i32
    %c0_i32_1 = arith.constant 0 : i32
    return %arg0, %c0_i32, %c0_i32_0 : i32, i32, i32
  }
  func.func @transform_1(%arg0: i32) -> (i32, i32) {
    %c0_i32 = arith.constant 0 : i32
    %c0_i32_0 = arith.constant 0 : i32
    %c0_i32_1 = arith.constant 0 : i32
    return %c0_i32, %c0_i32_0 : i32, i32
  }
  func.func @transform_2(%arg0: i32) -> (i32, i32) {
    %c0_i32 = arith.constant 0 : i32
    %c0_i32_0 = arith.constant 0 : i32
    %c0_i32_1 = arith.constant 0 : i32
    return %c0_i32, %c0_i32_0 : i32, i32
  }
  func.func @transform_3(%arg0: i32) -> (i32, i32) {
    %c0_i32 = arith.constant 0 : i32
    %c0_i32_0 = arith.constant 0 : i32
    %c0_i32_1 = arith.constant 0 : i32
    return %c0_i32, %c0_i32_0 : i32, i32
  }
  func.func @transform_4(%arg0: i32) -> (i32, i32) {
    %c0_i32 = arith.constant 0 : i32
    %c0_i32_0 = arith.constant 0 : i32
    %c0_i32_1 = arith.constant 0 : i32
    return %c0_i32, %c0_i32_0 : i32, i32
  }
  func.func @transform_5(%arg0: i32) -> (i32, i32) {
    %c0_i32 = arith.constant 0 : i32
    %c0_i32_0 = arith.constant 0 : i32
    %c0_i32_1 = arith.constant 0 : i32
    return %c0_i32, %c0_i32_0 : i32, i32
  }
  func.func @transform_6(%arg0: i32) -> (i32, i32) {
    %c0_i32 = arith.constant 0 : i32
    %c0_i32_0 = arith.constant 0 : i32
    %c0_i32_1 = arith.constant 0 : i32
    return %c0_i32, %c0_i32_0 : i32, i32
  }
  func.func @transform_7(%arg0: i32) -> (i32, i32) {
    %c0_i32 = arith.constant 0 : i32
    %c0_i32_0 = arith.constant 0 : i32
    %c0_i32_1 = arith.constant 0 : i32
    return %c0_i32, %c0_i32_0 : i32, i32
  }
  func.func @transform_8(%arg0: i32) -> (i32, i32) {
    %c0_i32 = arith.constant 0 : i32
    %c0_i32_0 = arith.constant 0 : i32
    %c0_i32_1 = arith.constant 0 : i32
    return %c0_i32, %c0_i32_0 : i32, i32
  }
  func.func @transform_9(%arg0: i32) -> (i32, i32) {
    %c0_i32 = arith.constant 0 : i32
    %c0_i32_0 = arith.constant 0 : i32
    %c0_i32_1 = arith.constant 0 : i32
    return %c0_i32, %c0_i32_0 : i32, i32
  }
  func.func @transform_10(%arg0: i32) -> (i32, i32) {
    %c0_i32 = arith.constant 0 : i32
    %c0_i32_0 = arith.constant 0 : i32
    %c0_i32_1 = arith.constant 0 : i32
    return %c0_i32, %c0_i32_0 : i32, i32
  }
  func.func @transform_11(%arg0: i32) -> (i32, i32) {
    %c0_i32 = arith.constant 0 : i32
    %c0_i32_0 = arith.constant 0 : i32
    %c0_i32_1 = arith.constant 0 : i32
    return %c0_i32, %c0_i32_0 : i32, i32
  }
  func.func @transform_12(%arg0: i32) -> (i32, i32) {
    %c0_i32 = arith.constant 0 : i32
    %c0_i32_0 = arith.constant 0 : i32
    %c0_i32_1 = arith.constant 0 : i32
    return %c0_i32, %c0_i32_0 : i32, i32
  }
  func.func @transform_13(%arg0: i32) -> (i32, i32, i32) {
    %c0_i32 = arith.constant 0 : i32
    %c0_i32_0 = arith.constant 0 : i32
    %c0_i32_1 = arith.constant 0 : i32
    return %arg0, %c0_i32, %c0_i32_0 : i32, i32, i32
  }
}

</mosaic_0001>

<llo_original>
// kernel: cnn_forward.1
$region0: #{cnn_forward.1}
  #allocation0 [shape = 'u32[]', space=smem, size = 0x4, offset = 0x4, fixed_abs, tag = 'smem constant byte address 0x4 - core index']
  #allocation1 [shape = 'u32[144,128]{1,0:T(1,128)}', space=vmem, size = 0x12000, scoped, tag = 'internal scratch']
  %s0 = inlined_call_operand.vmem [shape: f32[2,1,1024], index: 0, kind: input, shape index: {}]
  %s1 = inlined_call_operand.vmem [shape: f32[8,9], index: 1, kind: input, shape index: {}]
  %s2 = inlined_call_operand.vmem [shape: f32[8,1], index: 2, kind: input, shape index: {}]
  %s3 = inlined_call_operand.vmem [shape: f32[16,72], index: 3, kind: input, shape index: {}]
  %s4 = inlined_call_operand.vmem [shape: f32[16,1], index: 4, kind: input, shape index: {}]
  %s5 = inlined_call_operand.vmem [shape: f32[1,931], index: 5, kind: input, shape index: {}]
  %s6 = inlined_call_operand.vmem [shape: f32[745,128], index: 6, kind: input, shape index: {}]
  %s7 = inlined_call_operand.vmem [shape: f32[2048,120], index: 7, kind: input, shape index: {}]
  %s8 = inlined_call_operand.vmem [shape: f32[1,120], index: 8, kind: input, shape index: {}]
  %s9 = inlined_call_operand.vmem [shape: f32[120,60], index: 9, kind: input, shape index: {}]
  %s10 = inlined_call_operand.vmem [shape: f32[1,60], index: 10, kind: input, shape index: {}]
  %s11 = inlined_call_operand.vmem [shape: f32[60,10], index: 11, kind: input, shape index: {}]
  %s12 = inlined_call_operand.vmem [shape: f32[1,10], index: 12, kind: input, shape index: {}]
  %s13 = inlined_call_operand.hbm [shape: f32[2,1,10], index: 13, kind: output, shape index: {}]
  %s14 = sld [smem:[#allocation0]]
  $region85: #{cnn_forward.1} parent=0
    _
  %s16 = ssub.s32 1, %s14
  %s17 = scalar_select 0, %s16, %s14
  $region1: #{cnn_forward.1} parent=0
    #allocation2 [shape = 'u8[1024]{0}', space=vmem, size = 0x400, scoped, tag = 'output window, operand 0']
    #allocation3 [shape = 's32[2]{0}', space=sflag, size = 0x8, scoped, tag = 'scoped memory for cnn_forward.1']
    %18 = vsyncpa [#allocation3], 0
    %s19 = scalar_lea.sflag [#allocation3], 1
    %20 = vsyncpa %s19, 0
    loop: start=0, step=1, limit=4
    $region2: #{cnn_forward.1} parent=1 // loop_pre_header
      _
    $region3: #{cnn_forward.1} parent=1 // loop_header
      %s22 = sphi 0, %s26
      %p23 = scmp.ge.s32.totalorder %s22, 4
      %s32 = sphi 0, %s34
      %s35 = sphi 0, %s32
      %s36 = sphi 0, %s35
      %s52 = sphi 0, %s36
      %s56 = sphi 0, %s56
      %s58 = sphi 0, %s56
      %s59 = sphi 0, %s58
      %s73 = sphi 0, %s59
      %s77 = sphi 0, %s77
      %s79 = sphi 0, %s77
      %s80 = sphi 0, %s79
      %s94 = sphi 0, %s80
      %s98 = sphi 0, %s98
      %s100 = sphi 0, %s98
      %s101 = sphi 0, %s100
      %s115 = sphi 0, %s101
      %s119 = sphi 0, %s119
      %s121 = sphi 0, %s119
      %s122 = sphi 0, %s121
      %s136 = sphi 0, %s122
      %s140 = sphi 0, %s140
      %s142 = sphi 0, %s140
      %s143 = sphi 0, %s142
      %s157 = sphi 0, %s143
      %s161 = sphi 0, %s161
      %s163 = sphi 0, %s161
      %s164 = sphi 0, %s163
      %s178 = sphi 0, %s164
      %s182 = sphi 0, %s182
      %s184 = sphi 0, %s182
      %s185 = sphi 0, %s184
      %s199 = sphi 0, %s185
      %s203 = sphi 0, %s203
      %s205 = sphi 0, %s203
      %s206 = sphi 0, %s205
      %s220 = sphi 0, %s206
      %s224 = sphi 0, %s224
      %s226 = sphi 0, %s224
      %s227 = sphi 0, %s226
      %s241 = sphi 0, %s227
      %s245 = sphi 0, %s245
      %s247 = sphi 0, %s245
      %s248 = sphi 0, %s247
      %s262 = sphi 0, %s248
      %s266 = sphi 0, %s266
      %s268 = sphi 0, %s266
      %s269 = sphi 0, %s268
      %s283 = sphi 0, %s269
      %s287 = sphi 0, %s287
      %s289 = sphi 0, %s287
      %s290 = sphi 0, %s289
      %s304 = sphi 0, %s290
      %s310 = sphi 0, %s312
      %s313 = sphi 0, %s310
      %s314 = sphi 0, %s313
      %s330 = sphi 0, %s314
    $region4: #{cnn_forward.1} parent=1 // loop_header_branch
      %25 = sbr.rel (%p23) target = $region8
    $region5: #{cnn_forward.1} parent=1 // loop_body
      %s27 = ssub.s32 %s22, 1
      %s28 = ssub.s32 %s22, 2
      %s29 = sadd.s32 %s22, 1
      %s30 = ssub.s32 %s22, %s29
      %p31 = scmp.eq.s32.totalorder %s30, 0
      %s33 = sadd.s32 %s32, 1
      %s34 = scalar_select %p31, %s32, %s33
      %p37 = pneg %p31
      %p38 = scmp.eq.s32.totalorder %s22, 1
      %p39 = por %p37, %p38
      %p40 = scmp.ne.s32.totalorder %s32, %s35
      %p41 = scmp.eq.s32.totalorder %s22, 0
      %p42 = por %p40, %p41
      %p43 = scmp.ne.s32.totalorder %s32, %s35
      %p44 = scmp.eq.s32.totalorder %s27, 1
      %p45 = por %p43, %p44
      %p46 = scmp.ne.s32.totalorder %s35, %s36
      %p47 = scmp.eq.s32.totalorder %s27, 0
      %p48 = por %p46, %p47
      %p49 = scmp.ne.s32.totalorder %s35, %s36
      %p50 = scmp.eq.s32.totalorder %s28, 1
      %p51 = por %p49, %p50
      %p53 = scmp.ne.s32.totalorder %s36, %s52
      %p54 = scmp.eq.s32.totalorder %s28, 0
      %p55 = por %p53, %p54
      %s57 = sadd.s32 %s56, 1
      %p60 = scmp.eq.s32.totalorder %s22, 1
      %p61 = scmp.ne.s32.totalorder %s56, %s58
      %p62 = scmp.eq.s32.totalorder %s22, 0
      %p63 = por %p61, %p62
      %p64 = scmp.ne.s32.totalorder %s56, %s58
      %p65 = scmp.eq.s32.totalorder %s27, 1
      %p66 = por %p64, %p65
      %p67 = scmp.ne.s32.totalorder %s58, %s59
      %p68 = scmp.eq.s32.totalorder %s27, 0
      %p69 = por %p67, %p68
      %p70 = scmp.ne.s32.totalorder %s58, %s59
      %p71 = scmp.eq.s32.totalorder %s28, 1
      %p72 = por %p70, %p71
      %p74 = scmp.ne.s32.totalorder %s59, %s73
      %p75 = scmp.eq.s32.totalorder %s28, 0
      %p76 = por %p74, %p75
      %s78 = sadd.s32 %s77, 1
      %p81 = scmp.eq.s32.totalorder %s22, 1
      %p82 = scmp.ne.s32.totalorder %s77, %s79
      %p83 = scmp.eq.s32.totalorder %s22, 0
      %p84 = por %p82, %p83
      %p85 = scmp.ne.s32.totalorder %s77, %s79
      %p86 = scmp.eq.s32.totalorder %s27, 1
      %p87 = por %p85, %p86
      %p88 = scmp.ne.s32.totalorder %s79, %s80
      %p89 = scmp.eq.s32.totalorder %s27, 0
      %p90 = por %p88, %p89
      %p91 = scmp.ne.s32.totalorder %s79, %s80
      %p92 = scmp.eq.s32.totalorder %s28, 1
      %p93 = por %p91, %p92
      %p95 = scmp.ne.s32.totalorder %s80, %s94
      %p96 = scmp.eq.s32.totalorder %s28, 0
      %p97 = por %p95, %p96
      %s99 = sadd.s32 %s98, 1
      %p102 = scmp.eq.s32.totalorder %s22, 1
      %p103 = scmp.ne.s32.totalorder %s98, %s100
      %p104 = scmp.eq.s32.totalorder %s22, 0
      %p105 = por %p103, %p104
      %p106 = scmp.ne.s32.totalorder %s98, %s100
      %p107 = scmp.eq.s32.totalorder %s27, 1
      %p108 = por %p106, %p107
      %p109 = scmp.ne.s32.totalorder %s100, %s101
      %p110 = scmp.eq.s32.totalorder %s27, 0
      %p111 = por %p109, %p110
      %p112 = scmp.ne.s32.totalorder %s100, %s101
      %p113 = scmp.eq.s32.totalorder %s28, 1
      %p114 = por %p112, %p113
      %p116 = scmp.ne.s32.totalorder %s101, %s115
      %p117 = scmp.eq.s32.totalorder %s28, 0
      %p118 = por %p116, %p117
      %s120 = sadd.s32 %s119, 1
      %p123 = scmp.eq.s32.totalorder %s22, 1
      %p124 = scmp.ne.s32.totalorder %s119, %s121
      %p125 = scmp.eq.s32.totalorder %s22, 0
      %p126 = por %p124, %p125
      %p127 = scmp.ne.s32.totalorder %s119, %s121
      %p128 = scmp.eq.s32.totalorder %s27, 1
      %p129 = por %p127, %p128
      %p130 = scmp.ne.s32.totalorder %s121, %s122
      %p131 = scmp.eq.s32.totalorder %s27, 0
      %p132 = por %p130, %p131
      %p133 = scmp.ne.s32.totalorder %s121, %s122
      %p134 = scmp.eq.s32.totalorder %s28, 1
      %p135 = por %p133, %p134
      %p137 = scmp.ne.s32.totalorder %s122, %s136
      %p138 = scmp.eq.s32.totalorder %s28, 0
      %p139 = por %p137, %p138
      %s141 = sadd.s32 %s140, 1
      %p144 = scmp.eq.s32.totalorder %s22, 1
      %p145 = scmp.ne.s32.totalorder %s140, %s142
      %p146 = scmp.eq.s32.totalorder %s22, 0
      %p147 = por %p145, %p146
      %p148 = scmp.ne.s32.totalorder %s140, %s142
      %p149 = scmp.eq.s32.totalorder %s27, 1
      %p150 = por %p148, %p149
      %p151 = scmp.ne.s32.totalorder %s142, %s143
      %p152 = scmp.eq.s32.totalorder %s27, 0
      %p153 = por %p151, %p152
      %p154 = scmp.ne.s32.totalorder %s142, %s143
      %p155 = scmp.eq.s32.totalorder %s28, 1
      %p156 = por %p154, %p155
      %p158 = scmp.ne.s32.totalorder %s143, %s157
      %p159 = scmp.eq.s32.totalorder %s28, 0
      %p160 = por %p158, %p159
      %s162 = sadd.s32 %s161, 1
      %p165 = scmp.eq.s32.totalorder %s22, 1
      %p166 = scmp.ne.s32.totalorder %s161, %s163
      %p167 = scmp.eq.s32.totalorder %s22, 0
      %p168 = por %p166, %p167
      %p169 = scmp.ne.s32.totalorder %s161, %s163
      %p170 = scmp.eq.s32.totalorder %s27, 1
      %p171 = por %p169, %p170
      %p172 = scmp.ne.s32.totalorder %s163, %s164
      %p173 = scmp.eq.s32.totalorder %s27, 0
      %p174 = por %p172, %p173
      %p175 = scmp.ne.s32.totalorder %s163, %s164
      %p176 = scmp.eq.s32.totalorder %s28, 1
      %p177 = por %p175, %p176
      %p179 = scmp.ne.s32.totalorder %s164, %s178
      %p180 = scmp.eq.s32.totalorder %s28, 0
      %p181 = por %p179, %p180
      %s183 = sadd.s32 %s182, 1
      %p186 = scmp.eq.s32.totalorder %s22, 1
      %p187 = scmp.ne.s32.totalorder %s182, %s184
      %p188 = scmp.eq.s32.totalorder %s22, 0
      %p189 = por %p187, %p188
      %p190 = scmp.ne.s32.totalorder %s182, %s184
      %p191 = scmp.eq.s32.totalorder %s27, 1
      %p192 = por %p190, %p191
      %p193 = scmp.ne.s32.totalorder %s184, %s185
      %p194 = scmp.eq.s32.totalorder %s27, 0
      %p195 = por %p193, %p194
      %p196 = scmp.ne.s32.totalorder %s184, %s185
      %p197 = scmp.eq.s32.totalorder %s28, 1
      %p198 = por %p196, %p197
      %p200 = scmp.ne.s32.totalorder %s185, %s199
      %p201 = scmp.eq.s32.totalorder %s28, 0
      %p202 = por %p200, %p201
      %s204 = sadd.s32 %s203, 1
      %p207 = scmp.eq.s32.totalorder %s22, 1
      %p208 = scmp.ne.s32.totalorder %s203, %s205
      %p209 = scmp.eq.s32.totalorder %s22, 0
      %p210 = por %p208, %p209
      %p211 = scmp.ne.s32.totalorder %s203, %s205
      %p212 = scmp.eq.s32.totalorder %s27, 1
      %p213 = por %p211, %p212
      %p214 = scmp.ne.s32.totalorder %s205, %s206
      %p215 = scmp.eq.s32.totalorder %s27, 0
      %p216 = por %p214, %p215
      %p217 = scmp.ne.s32.totalorder %s205, %s206
      %p218 = scmp.eq.s32.totalorder %s28, 1
      %p219 = por %p217, %p218
      %p221 = scmp.ne.s32.totalorder %s206, %s220
      %p222 = scmp.eq.s32.totalorder %s28, 0
      %p223 = por %p221, %p222
      %s225 = sadd.s32 %s224, 1
      %p228 = scmp.eq.s32.totalorder %s22, 1
      %p229 = scmp.ne.s32.totalorder %s224, %s226
      %p230 = scmp.eq.s32.totalorder %s22, 0
      %p231 = por %p229, %p230
      %p232 = scmp.ne.s32.totalorder %s224, %s226
      %p233 = scmp.eq.s32.totalorder %s27, 1
      %p234 = por %p232, %p233
      %p235 = scmp.ne.s32.totalorder %s226, %s227
      %p236 = scmp.eq.s32.totalorder %s27, 0
      %p237 = por %p235, %p236
      %p238 = scmp.ne.s32.totalorder %s226, %s227
      %p239 = scmp.eq.s32.totalorder %s28, 1
      %p240 = por %p238, %p239
      %p242 = scmp.ne.s32.totalorder %s227, %s241
      %p243 = scmp.eq.s32.totalorder %s28, 0
      %p244 = por %p242, %p243
      %s246 = sadd.s32 %s245, 1
      %p249 = scmp.eq.s32.totalorder %s22, 1
      %p250 = scmp.ne.s32.totalorder %s245, %s247
      %p251 = scmp.eq.s32.totalorder %s22, 0
      %p252 = por %p250, %p251
      %p253 = scmp.ne.s32.totalorder %s245, %s247
      %p254 = scmp.eq.s32.totalorder %s27, 1
      %p255 = por %p253, %p254
      %p256 = scmp.ne.s32.totalorder %s247, %s248
      %p257 = scmp.eq.s32.totalorder %s27, 0
      %p258 = por %p256, %p257
      %p259 = scmp.ne.s32.totalorder %s247, %s248
      %p260 = scmp.eq.s32.totalorder %s28, 1
      %p261 = por %p259, %p260
      %p263 = scmp.ne.s32.totalorder %s248, %s262
      %p264 = scmp.eq.s32.totalorder %s28, 0
      %p265 = por %p263, %p264
      %s267 = sadd.s32 %s266, 1
      %p270 = scmp.eq.s32.totalorder %s22, 1
      %p271 = scmp.ne.s32.totalorder %s266, %s268
      %p272 = scmp.eq.s32.totalorder %s22, 0
      %p273 = por %p271, %p272
      %p274 = scmp.ne.s32.totalorder %s266, %s268
      %p275 = scmp.eq.s32.totalorder %s27, 1
      %p276 = por %p274, %p275
      %p277 = scmp.ne.s32.totalorder %s268, %s269
      %p278 = scmp.eq.s32.totalorder %s27, 0
      %p279 = por %p277, %p278
      %p280 = scmp.ne.s32.totalorder %s268, %s269
      %p281 = scmp.eq.s32.totalorder %s28, 1
      %p282 = por %p280, %p281
      %p284 = scmp.ne.s32.totalorder %s269, %s283
      %p285 = scmp.eq.s32.totalorder %s28, 0
      %p286 = por %p284, %p285
      %s288 = sadd.s32 %s287, 1
      %p291 = scmp.eq.s32.totalorder %s22, 1
      %p292 = scmp.ne.s32.totalorder %s287, %s289
      %p293 = scmp.eq.s32.totalorder %s22, 0
      %p294 = por %p292, %p293
      %p295 = scmp.ne.s32.totalorder %s287, %s289
      %p296 = scmp.eq.s32.totalorder %s27, 1
      %p297 = por %p295, %p296
      %p298 = scmp.ne.s32.totalorder %s289, %s290
      %p299 = scmp.eq.s32.totalorder %s27, 0
      %p300 = por %p298, %p299
      %p301 = scmp.ne.s32.totalorder %s289, %s290
      %p302 = scmp.eq.s32.totalorder %s28, 1
      %p303 = por %p301, %p302
      %p305 = scmp.ne.s32.totalorder %s290, %s304
      %p306 = scmp.eq.s32.totalorder %s28, 0
      %p307 = por %p305, %p306
      %s308 = ssub.s32 %s22, %s29
      %p309 = scmp.eq.s32.totalorder %s308, 0
      %s311 = sadd.s32 %s310, 1
      %s312 = scalar_select %p309, %s310, %s311
      %p315 = pneg %p309
      %p316 = scmp.eq.s32.totalorder %s22, 1
      %p317 = por %p315, %p316
      %p318 = scmp.ne.s32.totalorder %s310, %s313
      %p319 = scmp.eq.s32.totalorder %s22, 0
      %p320 = por %p318, %p319
      %p321 = scmp.ne.s32.totalorder %s310, %s313
      %p322 = scmp.eq.s32.totalorder %s27, 1
      %p323 = por %p321, %p322
      %p324 = scmp.ne.s32.totalorder %s313, %s314
      %p325 = scmp.eq.s32.totalorder %s27, 0
      %p326 = por %p324, %p325
      %p327 = scmp.ne.s32.totalorder %s313, %s314
      %p328 = scmp.eq.s32.totalorder %s28, 1
      %p329 = por %p327, %p328
      %p331 = scmp.ne.s32.totalorder %s314, %s330
      %p332 = scmp.eq.s32.totalorder %s28, 0
      %p333 = por %p331, %p332
      %p334 = scmp.le.s32.totalorder 1, %s22
      %p335 = scmp.lt.s32.totalorder %s22, 3
      %p336 = pnand %p334, %p335
      %p337 = pneg %p336
      // Predicated region
      $region9: #{cnn_forward.1} parent=5 // pred_check
        _
      $region10: #{cnn_forward.1} parent=5 // pred_check_branch
        %339 = sbr.rel (%p336) target = $region12
      $region11: #{cnn_forward.1} parent=5 // pred_region
        %s340 = ssub.s32 %s22, 1
        // Predicated region
        $region13: #{cnn_forward.1} parent=11 // pred_check
          %p341 = pneg %p69
        $region14: #{cnn_forward.1} parent=11 // pred_check_branch
          %343 = sbr.rel (%p341) target = $region16
        $region15: #{cnn_forward.1} parent=11 // pred_region
          _
        $region16: #{cnn_forward.1} parent=11 // pred_fallthru
          _
        // Predicated region
        $region17: #{cnn_forward.1} parent=11 // pred_check
          %p344 = pneg %p90
        $region18: #{cnn_forward.1} parent=11 // pred_check_branch
          %346 = sbr.rel (%p344) target = $region20
        $region19: #{cnn_forward.1} parent=11 // pred_region
          _
        $region20: #{cnn_forward.1} parent=11 // pred_fallthru
          _
        // Predicated region
        $region21: #{cnn_forward.1} parent=11 // pred_check
          %p347 = pneg %p111
        $region22: #{cnn_forward.1} parent=11 // pred_check_branch
          %349 = sbr.rel (%p347) target = $region24
        $region23: #{cnn_forward.1} parent=11 // pred_region
          _
        $region24: #{cnn_forward.1} parent=11 // pred_fallthru
          _
        // Predicated region
        $region25: #{cnn_forward.1} parent=11 // pred_check
          %p350 = pneg %p132
        $region26: #{cnn_forward.1} parent=11 // pred_check_branch
          %352 = sbr.rel (%p350) target = $region28
        $region27: #{cnn_forward.1} parent=11 // pred_region
          _
        $region28: #{cnn_forward.1} parent=11 // pred_fallthru
          _
        // Predicated region
        $region29: #{cnn_forward.1} parent=11 // pred_check
          %p353 = pneg %p153
        $region30: #{cnn_forward.1} parent=11 // pred_check_branch
          %355 = sbr.rel (%p353) target = $region32
        $region31: #{cnn_forward.1} parent=11 // pred_region
          _
        $region32: #{cnn_forward.1} parent=11 // pred_fallthru
          _
        // Predicated region
        $region33: #{cnn_forward.1} parent=11 // pred_check
          %p356 = pneg %p174
        $region34: #{cnn_forward.1} parent=11 // pred_check_branch
          %358 = sbr.rel (%p356) target = $region36
        $region35: #{cnn_forward.1} parent=11 // pred_region
          _
        $region36: #{cnn_forward.1} parent=11 // pred_fallthru
          _
        // Predicated region
        $region37: #{cnn_forward.1} parent=11 // pred_check
          %p359 = pneg %p195
        $region38: #{cnn_forward.1} parent=11 // pred_check_branch
          %361 = sbr.rel (%p359) target = $region40
        $region39: #{cnn_forward.1} parent=11 // pred_region
          _
        $region40: #{cnn_forward.1} parent=11 // pred_fallthru
          _
        // Predicated region
        $region41: #{cnn_forward.1} parent=11 // pred_check
          %p362 = pneg %p216
        $region42: #{cnn_forward.1} parent=11 // pred_check_branch
          %364 = sbr.rel (%p362) target = $region44
        $region43: #{cnn_forward.1} parent=11 // pred_region
          _
        $region44: #{cnn_forward.1} parent=11 // pred_fallthru
          _
        // Predicated region
        $region45: #{cnn_forward.1} parent=11 // pred_check
          %p365 = pneg %p237
        $region46: #{cnn_forward.1} parent=11 // pred_check_branch
          %367 = sbr.rel (%p365) target = $region48
        $region47: #{cnn_forward.1} parent=11 // pred_region
          _
        $region48: #{cnn_forward.1} parent=11 // pred_fallthru
          _
        // Predicated region
        $region49: #{cnn_forward.1} parent=11 // pred_check
          %p368 = pneg %p258
        $region50: #{cnn_forward.1} parent=11 // pred_check_branch
          %370 = sbr.rel (%p368) target = $region52
        $region51: #{cnn_forward.1} parent=11 // pred_region
          _
        $region52: #{cnn_forward.1} parent=11 // pred_fallthru
          _
        // Predicated region
        $region53: #{cnn_forward.1} parent=11 // pred_check
          %p371 = pneg %p279
        $region54: #{cnn_forward.1} parent=11 // pred_check_branch
          %373 = sbr.rel (%p371) target = $region56
        $region55: #{cnn_forward.1} parent=11 // pred_region
          _
        $region56: #{cnn_forward.1} parent=11 // pred_fallthru
          _
        // Predicated region
        $region57: #{cnn_forward.1} parent=11 // pred_check
          %p374 = pneg %p300
        $region58: #{cnn_forward.1} parent=11 // pred_check_branch
          %376 = sbr.rel (%p374) target = $region60
        $region59: #{cnn_forward.1} parent=11 // pred_region
          _
        $region60: #{cnn_forward.1} parent=11 // pred_fallthru
          _
      $region12: #{cnn_forward.1} parent=5 // pred_fallthru
        _
      %p377 = scmp.lt.s32.totalorder %s22, 2
      // Predicated region
      $region61: #{cnn_forward.1} parent=5 // pred_check
        %p378 = pneg %p377
      $region62: #{cnn_forward.1} parent=5 // pred_check_branch
        %380 = sbr.rel (%p378) target = $region64
      $region63: #{cnn_forward.1} parent=5 // pred_region
        // Predicated region
        $region65: #{cnn_forward.1} parent=63 // pred_check
          %p381 = pneg %p42
        $region66: #{cnn_forward.1} parent=63 // pred_check_branch
          %383 = sbr.rel (%p381) target = $region68
        $region67: #{cnn_forward.1} parent=63 // pred_region
          %p384 = scmp.lt.s32.totalorder %s22, 1
          %s385 = scalar_select %p384, %s22, 1
          %s386 = smul.addr %s385, 8
          %s387 = scalar_lea.vmem %s0, %s386
        $region68: #{cnn_forward.1} parent=63 // pred_fallthru
          _
      $region64: #{cnn_forward.1} parent=5 // pred_fallthru
        _
      %p388 = scmp.le.s32.totalorder 1, %s22
      %p389 = scmp.lt.s32.totalorder %s22, 3
      %p390 = pnand %p388, %p389
      %p391 = pneg %p390
      // Predicated region
      $region69: #{cnn_forward.1} parent=5 // pred_check
        _
      $region70: #{cnn_forward.1} parent=5 // pred_check_branch
        %393 = sbr.rel (%p390) target = $region72
      $region71: #{cnn_forward.1} parent=5 // pred_region
        %s394 = ssub.s32 %s22, 1
        %p395 = scmp.lt.s32.totalorder %s27, 1
        %s396 = scalar_select %p395, %s27, 1
        %s397 = smul.addr %s396, 8
        %s398 = scalar_lea.vmem %s0, %s397
        %p399 = pneg %p48
        %p400 = pneg %p45
        %p401 = pneg %p69
        %p402 = pneg %p66
        %p403 = pneg %p90
        %p404 = pneg %p87
        %p405 = pneg %p111
        %p406 = pneg %p108
        %p407 = pneg %p132
        %p408 = pneg %p129
        %p409 = pneg %p153
        %p410 = pneg %p150
        %p411 = pneg %p174
        %p412 = pneg %p171
        %p413 = pneg %p195
        %p414 = pneg %p192
        %p415 = pneg %p216
        %p416 = pneg %p213
        %p417 = pneg %p237
        %p418 = pneg %p234
        %p419 = pneg %p258
        %p420 = pneg %p255
        %p421 = pneg %p279
        %p422 = pneg %p276
        %p423 = pneg %p300
        %p424 = pneg %p297
        %p425 = pneg %p326
        %p426 = pneg %p323
        %s427 = sand.u32 %s313, 1
        %s428 = scalar_lea.sflag [#allocation3], %s427
        %s429 = sand.u32 %s313, 1
        %s430 = scalar_lea.vmem [#allocation2], %s429
        %p431 = scmp.lt.s32.totalorder %s27, 1
        %s432 = scalar_select %p431, %s27, 1
        %s433 = smul.addr %s432, 8
        %s434 = scalar_lea.vmem %s0, %s433
        %v435 = vld [vmem:[%s434] sm:$0xff]
        %v436 = vld [vmem:[%s1] sm:$0xff]
        %v437 = vld [vmem:[%s2] sm:$0xff]
        %v438 = vld [vmem:[%s3] sm:$0xff]
        %v439 = vld [vmem:[%s3 + $0x8] sm:$0xff]
        %v440 = vld [vmem:[%s4] sm:$0xff]
        %v441 = vld [vmem:[%s4 + $0x8] sm:$0xff]
        %v442 = vld [vmem:[%s5] sm:$0xff]
        %v443 = vld [vmem:[%s6] sm:$0xff]
        %v444 = vld [vmem:[%s6 + $0x8] sm:$0xff]
        %v445 = vld [vmem:[%s6 + $0x10] sm:$0xff]
        %v446 = vld [vmem:[%s6 + $0x18] sm:$0xff]
        %v447 = vld [vmem:[%s6 + $0x20] sm:$0xff]
        %v448 = vld [vmem:[%s6 + $0x28] sm:$0xff]
        %v449 = vld [vmem:[%s6 + $0x30] sm:$0xff]
        %v450 = vld [vmem:[%s6 + $0x38] sm:$0xff]
        %v451 = vld [vmem:[%s6 + $0x40] sm:$0xff]
        %v452 = vld [vmem:[%s6 + $0x48] sm:$0xff]
        %v453 = vld [vmem:[%s6 + $0x50] sm:$0xff]
        %v454 = vld [vmem:[%s6 + $0x58] sm:$0xff]
        %v455 = vld [vmem:[%s6 + $0x60] sm:$0xff]
        %v456 = vld [vmem:[%s6 + $0x68] sm:$0xff]
        %v457 = vld [vmem:[%s6 + $0x70] sm:$0xff]
        %v458 = vld [vmem:[%s6 + $0x78] sm:$0xff]
        %v459 = vld [vmem:[%s6 + $0x80] sm:$0xff]
        %v460 = vld [vmem:[%s6 + $0x88] sm:$0xff]
        %v461 = vld [vmem:[%s6 + $0x90] sm:$0xff]
        %v462 = vld [vmem:[%s6 + $0x98] sm:$0xff]
        %v463 = vld [vmem:[%s6 + $0xa0] sm:$0xff]
        %v464 = vld [vmem:[%s6 + $0xa8] sm:$0xff]
        %v465 = vld [vmem:[%s6 + $0xb0] sm:$0xff]
        %v466 = vld [vmem:[%s6 + $0xb8] sm:$0xff]
        %v467 = vld [vmem:[%s6 + $0xc0] sm:$0xff]
        %v468 = vld [vmem:[%s6 + $0xc8] sm:$0xff]
        %v469 = vld [vmem:[%s6 + $0xd0] sm:$0xff]
        %v470 = vld [vmem:[%s6 + $0xd8] sm:$0xff]
        %v471 = vld [vmem:[%s6 + $0xe0] sm:$0xff]
        %v472 = vld [vmem:[%s6 + $0xe8] sm:$0xff]
        %v473 = vld [vmem:[%s6 + $0xf0] sm:$0xff]
        %v474 = vld [vmem:[%s6 + $0xf8] sm:$0xff]
        %v475 = vld [vmem:[%s6 + $0x100] sm:$0xff]
        %v476 = vld [vmem:[%s6 + $0x108] sm:$0xff]
        %v477 = vld [vmem:[%s6 + $0x110] sm:$0xff]
        %v478 = vld [vmem:[%s6 + $0x118] sm:$0xff]
        %v479 = vld [vmem:[%s6 + $0x120] sm:$0xff]
        %v480 = vld [vmem:[%s6 + $0x128] sm:$0xff]
        %v481 = vld [vmem:[%s6 + $0x130] sm:$0xff]
        %v482 = vld [vmem:[%s6 + $0x138] sm:$0xff]
        %v483 = vld [vmem:[%s6 + $0x140] sm:$0xff]
        %v484 = vld [vmem:[%s6 + $0x148] sm:$0xff]
        %v485 = vld [vmem:[%s6 + $0x150] sm:$0xff]
        %v486 = vld [vmem:[%s6 + $0x158] sm:$0xff]
        %v487 = vld [vmem:[%s6 + $0x160] sm:$0xff]
        %v488 = vld [vmem:[%s6 + $0x168] sm:$0xff]
        %v489 = vld [vmem:[%s6 + $0x170] sm:$0xff]
        %v490 = vld [vmem:[%s6 + $0x178] sm:$0xff]
        %v491 = vld [vmem:[%s6 + $0x180] sm:$0xff]
        %v492 = vld [vmem:[%s6 + $0x188] sm:$0xff]
        %v493 = vld [vmem:[%s6 + $0x190] sm:$0xff]
        %v494 = vld [vmem:[%s6 + $0x198] sm:$0xff]
        %v495 = vld [vmem:[%s6 + $0x1a0] sm:$0xff]
        %v496 = vld [vmem:[%s6 + $0x1a8] sm:$0xff]
        %v497 = vld [vmem:[%s6 + $0x1b0] sm:$0xff]
        %v498 = vld [vmem:[%s6 + $0x1b8] sm:$0xff]
        %v499 = vld [vmem:[%s6 + $0x1c0] sm:$0xff]
        %v500 = vld [vmem:[%s6 + $0x1c8] sm:$0xff]
        %v501 = vld [vmem:[%s6 + $0x1d0] sm:$0xff]
        %v502 = vld [vmem:[%s6 + $0x1d8] sm:$0xff]
        %v503 = vld [vmem:[%s6 + $0x1e0] sm:$0xff]
        %v504 = vld [vmem:[%s6 + $0x1e8] sm:$0xff]
        %v505 = vld [vmem:[%s6 + $0x1f0] sm:$0xff]
        %v506 = vld [vmem:[%s6 + $0x1f8] sm:$0xff]
        %v507 = vld [vmem:[%s6 + $0x200] sm:$0xff]
        %v508 = vld [vmem:[%s6 + $0x208] sm:$0xff]
        %v509 = vld [vmem:[%s6 + $0x210] sm:$0xff]
        %v510 = vld [vmem:[%s6 + $0x218] sm:$0xff]
        %v511 = vld [vmem:[%s6 + $0x220] sm:$0xff]
        %v512 = vld [vmem:[%s6 + $0x228] sm:$0xff]
        %v513 = vld [vmem:[%s6 + $0x230] sm:$0xff]
        %v514 = vld [vmem:[%s6 + $0x238] sm:$0xff]
        %v515 = vld [vmem:[%s6 + $0x240] sm:$0xff]
        %v516 = vld [vmem:[%s6 + $0x248] sm:$0xff]
        %v517 = vld [vmem:[%s6 + $0x250] sm:$0xff]
        %v518 = vld [vmem:[%s6 + $0x258] sm:$0xff]
        %v519 = vld [vmem:[%s6 + $0x260] sm:$0xff]
        %v520 = vld [vmem:[%s6 + $0x268] sm:$0xff]
        %v521 = vld [vmem:[%s6 + $0x270] sm:$0xff]
        %v522 = vld [vmem:[%s6 + $0x278] sm:$0xff]
        %v523 = vld [vmem:[%s6 + $0x280] sm:$0xff]
        %v524 = vld [vmem:[%s6 + $0x288] sm:$0xff]
        %v525 = vld [vmem:[%s6 + $0x290] sm:$0xff]
        %v526 = vld [vmem:[%s6 + $0x298] sm:$0xff]
        %v527 = vld [vmem:[%s6 + $0x2a0] sm:$0xff]
        %v528 = vld [vmem:[%s6 + $0x2a8] sm:$0xff]
        %v529 = vld [vmem:[%s6 + $0x2b0] sm:$0xff]
        %v530 = vld [vmem:[%s6 + $0x2b8] sm:$0xff]
        %v531 = vld [vmem:[%s6 + $0x2c0] sm:$0xff]
        %v532 = vld [vmem:[%s6 + $0x2c8] sm:$0xff]
        %v533 = vld [vmem:[%s6 + $0x2d0] sm:$0xff]
        %v534 = vld [vmem:[%s6 + $0x2d8] sm:$0xff]
        %v535 = vld [vmem:[%s6 + $0x2e0] sm:$0xff]
        %v536 = vld [vmem:[%s6 + $0x2e8] sm:$0x1]
        %538 = vset.pattern.permute.xlu0 0
        %539 = vperm.xlu0 %538, %v436
        %v540 = vpop.permute.xlu0 %539
        %v543 = vlaneseq
        %v544 = vshrl.u32 %v543, 7
        %v545 = vsub.s32 0, %v544
        %v546 = vrot.slane %v435, %v545
        %v547 = vlaneseq
        %v548 = vshrl.u32 %v547, 7
        %v549 = vsub.s32 1, %v548
        %v550 = vrot.slane %v435, %v549
        %v551 = vlaneseq
        %v552 = vshrl.u32 %v551, 7
        %v553 = vsub.s32 2, %v552
        %v554 = vrot.slane %v435, %v553
        %v555 = vlaneseq
        %v556 = vshrl.u32 %v555, 7
        %v557 = vsub.s32 3, %v556
        %v558 = vrot.slane %v435, %v557
        %v559 = vlaneseq
        %v560 = vshrl.u32 %v559, 7
        %v561 = vsub.s32 4, %v560
        %v562 = vrot.slane %v435, %v561
        %v563 = vlaneseq
        %v564 = vshrl.u32 %v563, 7
        %v565 = vsub.s32 5, %v564
        %v566 = vrot.slane %v435, %v565
        %v567 = vlaneseq
        %v568 = vshrl.u32 %v567, 7
        %v569 = vsub.s32 6, %v568
        %v570 = vrot.slane %v435, %v569
        %v571 = vlaneseq
        %v572 = vshrl.u32 %v571, 7
        %v573 = vsub.s32 7, %v572
        %v574 = vrot.slane %v435, %v573
        %v583 = vmul.f32 %v540, %v546
        %v584 = vmul.f32 %v540, %v550
        %v585 = vmul.f32 %v540, %v554
        %v586 = vmul.f32 %v540, %v558
        %v587 = vmul.f32 %v540, %v562
        %v588 = vmul.f32 %v540, %v566
        %v589 = vmul.f32 %v540, %v570
        %v590 = vmul.f32 %v540, %v574
        %v591 = vadd.f32 %v583, 0.0
        %v592 = vadd.f32 %v584, 0.0
        %v593 = vadd.f32 %v585, 0.0
        %v594 = vadd.f32 %v586, 0.0
        %v595 = vadd.f32 %v587, 0.0
        %v596 = vadd.f32 %v588, 0.0
        %v597 = vadd.f32 %v589, 0.0
        %v598 = vadd.f32 %v590, 0.0
        %599 = vset.pattern.permute.xlu0 1
        %600 = vperm.xlu0 %599, %v436
        %v601 = vpop.permute.xlu0 %600
        %v603 = vmul.f32 %v601, %v546
        %v604 = vmul.f32 %v601, %v550
        %v605 = vmul.f32 %v601, %v554
        %v606 = vmul.f32 %v601, %v558
        %v607 = vmul.f32 %v601, %v562
        %v608 = vmul.f32 %v601, %v566
        %v609 = vmul.f32 %v601, %v570
        %v610 = vmul.f32 %v601, %v574
        %619 = vrot.lane.b32.xlu0 %v603, 127
        %v620 = vpop.permute.xlu0 %619
        %621 = vrot.lane.b32.xlu0 %v604, 127
        %v622 = vpop.permute.xlu0 %621
        %623 = vrot.lane.b32.xlu0 %v605, 127
        %v624 = vpop.permute.xlu0 %623
        %625 = vrot.lane.b32.xlu0 %v606, 127
        %v626 = vpop.permute.xlu0 %625
        %627 = vrot.lane.b32.xlu0 %v607, 127
        %v628 = vpop.permute.xlu0 %627
        %629 = vrot.lane.b32.xlu0 %v608, 127
        %v630 = vpop.permute.xlu0 %629
        %631 = vrot.lane.b32.xlu0 %v609, 127
        %v632 = vpop.permute.xlu0 %631
        %633 = vrot.lane.b32.xlu0 %v610, 127
        %v634 = vpop.permute.xlu0 %633
        %vm635 = vcmask 1039360
        %v636 = vsel %vm635, %v620, %v622
        %v637 = vsel %vm635, %v622, %v624
        %v638 = vsel %vm635, %v624, %v626
        %v639 = vsel %vm635, %v626, %v628
        %v640 = vsel %vm635, %v628, %v630
        %v641 = vsel %vm635, %v630, %v632
        %v642 = vsel %vm635, %v632, %v634
        %v651 = vadd.f32 %v591, %v636
        %v652 = vadd.f32 %v592, %v637
        %v653 = vadd.f32 %v593, %v638
        %v654 = vadd.f32 %v594, %v639
        %v655 = vadd.f32 %v595, %v640
        %v656 = vadd.f32 %v596, %v641
        %v657 = vadd.f32 %v597, %v642
        %v658 = vadd.f32 %v598, %v634
        %659 = vset.pattern.permute.xlu0 2
        %660 = vperm.xlu0 %659, %v436
        %v661 = vpop.permute.xlu0 %660
        %v663 = vmul.f32 %v661, %v546
        %v664 = vmul.f32 %v661, %v550
        %v665 = vmul.f32 %v661, %v554
        %v666 = vmul.f32 %v661, %v558
        %v667 = vmul.f32 %v661, %v562
        %v668 = vmul.f32 %v661, %v566
        %v669 = vmul.f32 %v661, %v570
        %v670 = vmul.f32 %v661, %v574
        %679 = vrot.lane.b32.xlu0 %v663, 126
        %v680 = vpop.permute.xlu0 %679
        %681 = vrot.lane.b32.xlu0 %v664, 126
        %v682 = vpop.permute.xlu0 %681
        %683 = vrot.lane.b32.xlu0 %v665, 126
        %v684 = vpop.permute.xlu0 %683
        %685 = vrot.lane.b32.xlu0 %v666, 126
        %v686 = vpop.permute.xlu0 %685
        %687 = vrot.lane.b32.xlu0 %v667, 126
        %v688 = vpop.permute.xlu0 %687
        %689 = vrot.lane.b32.xlu0 %v668, 126
        %v690 = vpop.permute.xlu0 %689
        %691 = vrot.lane.b32.xlu0 %v669, 126
        %v692 = vpop.permute.xlu0 %691
        %693 = vrot.lane.b32.xlu0 %v670, 126
        %v694 = vpop.permute.xlu0 %693
        %vm695 = vcmask 1031168
        %v696 = vsel %vm695, %v680, %v682
        %v697 = vsel %vm695, %v682, %v684
        %v698 = vsel %vm695, %v684, %v686
        %v699 = vsel %vm695, %v686, %v688
        %v700 = vsel %vm695, %v688, %v690
        %v701 = vsel %vm695, %v690, %v692
        %v702 = vsel %vm695, %v692, %v694
        %v711 = vadd.f32 %v651, %v696
        %v712 = vadd.f32 %v652, %v697
        %v713 = vadd.f32 %v653, %v698
        %v714 = vadd.f32 %v654, %v699
        %v715 = vadd.f32 %v655, %v700
        %v716 = vadd.f32 %v656, %v701
        %v717 = vadd.f32 %v657, %v702
        %v718 = vadd.f32 %v658, %v694
        %719 = vset.pattern.permute.xlu0 3
        %720 = vperm.xlu0 %719, %v436
        %v721 = vpop.permute.xlu0 %720
        %v723 = vmul.f32 %v721, %v546
        %v724 = vmul.f32 %v721, %v550
        %v725 = vmul.f32 %v721, %v554
        %v726 = vmul.f32 %v721, %v558
        %v727 = vmul.f32 %v721, %v562
        %v728 = vmul.f32 %v721, %v566
        %v729 = vmul.f32 %v721, %v570
        %v730 = vmul.f32 %v721, %v574
        %739 = vrot.lane.b32.xlu0 %v723, 98
        %v740 = vpop.permute.xlu0 %739
        %741 = vrot.lane.b32.xlu0 %v724, 98
        %v742 = vpop.permute.xlu0 %741
        %743 = vrot.lane.b32.xlu0 %v725, 98
        %v744 = vpop.permute.xlu0 %743
        %745 = vrot.lane.b32.xlu0 %v726, 98
        %v746 = vpop.permute.xlu0 %745
        %747 = vrot.lane.b32.xlu0 %v727, 98
        %v748 = vpop.permute.xlu0 %747
        %749 = vrot.lane.b32.xlu0 %v728, 98
        %v750 = vpop.permute.xlu0 %749
        %751 = vrot.lane.b32.xlu0 %v729, 98
        %v752 = vpop.permute.xlu0 %751
        %753 = vrot.lane.b32.xlu0 %v730, 98
        %v754 = vpop.permute.xlu0 %753
        %vm755 = vcmask 801792
        %v756 = vsel %vm755, %v740, %v742
        %v757 = vsel %vm755, %v742, %v744
        %v758 = vsel %vm755, %v744, %v746
        %v759 = vsel %vm755, %v746, %v748
        %v760 = vsel %vm755, %v748, %v750
        %v761 = vsel %vm755, %v750, %v752
        %v762 = vsel %vm755, %v752, %v754
        %v771 = vadd.f32 %v711, %v756
        %v772 = vadd.f32 %v712, %v757
        %v773 = vadd.f32 %v713, %v758
        %v774 = vadd.f32 %v714, %v759
        %v775 = vadd.f32 %v715, %v760
        %v776 = vadd.f32 %v716, %v761
        %v777 = vadd.f32 %v717, %v762
        %v778 = vadd.f32 %v718, %v754
        %779 = vset.pattern.permute.xlu0 4
        %780 = vperm.xlu0 %779, %v436
        %v781 = vpop.permute.xlu0 %780
        %v783 = vmul.f32 %v781, %v546
        %v784 = vmul.f32 %v781, %v550
        %v785 = vmul.f32 %v781, %v554
        %v786 = vmul.f32 %v781, %v558
        %v787 = vmul.f32 %v781, %v562
        %v788 = vmul.f32 %v781, %v566
        %v789 = vmul.f32 %v781, %v570
        %v790 = vmul.f32 %v781, %v574
        %799 = vrot.lane.b32.xlu0 %v783, 97
        %v800 = vpop.permute.xlu0 %799
        %801 = vrot.lane.b32.xlu0 %v784, 97
        %v802 = vpop.permute.xlu0 %801
        %803 = vrot.lane.b32.xlu0 %v785, 97
        %v804 = vpop.permute.xlu0 %803
        %805 = vrot.lane.b32.xlu0 %v786, 97
        %v806 = vpop.permute.xlu0 %805
        %807 = vrot.lane.b32.xlu0 %v787, 97
        %v808 = vpop.permute.xlu0 %807
        %809 = vrot.lane.b32.xlu0 %v788, 97
        %v810 = vpop.permute.xlu0 %809
        %811 = vrot.lane.b32.xlu0 %v789, 97
        %v812 = vpop.permute.xlu0 %811
        %813 = vrot.lane.b32.xlu0 %v790, 97
        %v814 = vpop.permute.xlu0 %813
        %vm815 = vcmask 793600
        %v816 = vsel %vm815, %v800, %v802
        %v817 = vsel %vm815, %v802, %v804
        %v818 = vsel %vm815, %v804, %v806
        %v819 = vsel %vm815, %v806, %v808
        %v820 = vsel %vm815, %v808, %v810
        %v821 = vsel %vm815, %v810, %v812
        %v822 = vsel %vm815, %v812, %v814
        %v831 = vadd.f32 %v771, %v816
        %v832 = vadd.f32 %v772, %v817
        %v833 = vadd.f32 %v773, %v818
        %v834 = vadd.f32 %v774, %v819
        %v835 = vadd.f32 %v775, %v820
        %v836 = vadd.f32 %v776, %v821
        %v837 = vadd.f32 %v777, %v822
        %v838 = vadd.f32 %v778, %v814
        %839 = vset.pattern.permute.xlu0 5
        %840 = vperm.xlu0 %839, %v436
        %v841 = vpop.permute.xlu0 %840
        %v843 = vmul.f32 %v841, %v546
        %v844 = vmul.f32 %v841, %v550
        %v845 = vmul.f32 %v841, %v554
        %v846 = vmul.f32 %v841, %v558
        %v847 = vmul.f32 %v841, %v562
        %v848 = vmul.f32 %v841, %v566
        %v849 = vmul.f32 %v841, %v570
        %v850 = vmul.f32 %v841, %v574
        %859 = vrot.lane.b32.xlu0 %v843, 96
        %v860 = vpop.permute.xlu0 %859
        %861 = vrot.lane.b32.xlu0 %v844, 96
        %v862 = vpop.permute.xlu0 %861
        %863 = vrot.lane.b32.xlu0 %v845, 96
        %v864 = vpop.permute.xlu0 %863
        %865 = vrot.lane.b32.xlu0 %v846, 96
        %v866 = vpop.permute.xlu0 %865
        %867 = vrot.lane.b32.xlu0 %v847, 96
        %v868 = vpop.permute.xlu0 %867
        %869 = vrot.lane.b32.xlu0 %v848, 96
        %v870 = vpop.permute.xlu0 %869
        %871 = vrot.lane.b32.xlu0 %v849, 96
        %v872 = vpop.permute.xlu0 %871
        %873 = vrot.lane.b32.xlu0 %v850, 96
        %v874 = vpop.permute.xlu0 %873
        %vm875 = vcmask 785408
        %v876 = vsel %vm875, %v860, %v862
        %v877 = vsel %vm875, %v862, %v864
        %v878 = vsel %vm875, %v864, %v866
        %v879 = vsel %vm875, %v866, %v868
        %v880 = vsel %vm875, %v868, %v870
        %v881 = vsel %vm875, %v870, %v872
        %v882 = vsel %vm875, %v872, %v874
        %v891 = vadd.f32 %v831, %v876
        %v892 = vadd.f32 %v832, %v877
        %v893 = vadd.f32 %v833, %v878
        %v894 = vadd.f32 %v834, %v879
        %v895 = vadd.f32 %v835, %v880
        %v896 = vadd.f32 %v836, %v881
        %v897 = vadd.f32 %v837, %v882
        %v898 = vadd.f32 %v838, %v874
        %899 = vset.pattern.permute.xlu0 6
        %900 = vperm.xlu0 %899, %v436
        %v901 = vpop.permute.xlu0 %900
        %v903 = vmul.f32 %v901, %v546
        %v904 = vmul.f32 %v901, %v550
        %v905 = vmul.f32 %v901, %v554
        %v906 = vmul.f32 %v901, %v558
        %v907 = vmul.f32 %v901, %v562
        %v908 = vmul.f32 %v901, %v566
        %v909 = vmul.f32 %v901, %v570
        %v910 = vmul.f32 %v901, %v574
        %919 = vrot.lane.b32.xlu0 %v903, 68
        %v920 = vpop.permute.xlu0 %919
        %921 = vrot.lane.b32.xlu0 %v904, 68
        %v922 = vpop.permute.xlu0 %921
        %923 = vrot.lane.b32.xlu0 %v905, 68
        %v924 = vpop.permute.xlu0 %923
        %925 = vrot.lane.b32.xlu0 %v906, 68
        %v926 = vpop.permute.xlu0 %925
        %927 = vrot.lane.b32.xlu0 %v907, 68
        %v928 = vpop.permute.xlu0 %927
        %929 = vrot.lane.b32.xlu0 %v908, 68
        %v930 = vpop.permute.xlu0 %929
        %931 = vrot.lane.b32.xlu0 %v909, 68
        %v932 = vpop.permute.xlu0 %931
        %933 = vrot.lane.b32.xlu0 %v910, 68
        %v934 = vpop.permute.xlu0 %933
        %vm935 = vcmask 556032
        %v936 = vsel %vm935, %v920, %v922
        %v937 = vsel %vm935, %v922, %v924
        %v938 = vsel %vm935, %v924, %v926
        %v939 = vsel %vm935, %v926, %v928
        %v940 = vsel %vm935, %v928, %v930
        %v941 = vsel %vm935, %v930, %v932
        %v942 = vsel %vm935, %v932, %v934
        %v951 = vadd.f32 %v891, %v936
        %v952 = vadd.f32 %v892, %v937
        %v953 = vadd.f32 %v893, %v938
        %v954 = vadd.f32 %v894, %v939
        %v955 = vadd.f32 %v895, %v940
        %v956 = vadd.f32 %v896, %v941
        %v957 = vadd.f32 %v897, %v942
        %v958 = vadd.f32 %v898, %v934
        %959 = vset.pattern.permute.xlu0 7
        %960 = vperm.xlu0 %959, %v436
        %v961 = vpop.permute.xlu0 %960
        %v963 = vmul.f32 %v961, %v546
        %v964 = vmul.f32 %v961, %v550
        %v965 = vmul.f32 %v961, %v554
        %v966 = vmul.f32 %v961, %v558
        %v967 = vmul.f32 %v961, %v562
        %v968 = vmul.f32 %v961, %v566
        %v969 = vmul.f32 %v961, %v570
        %v970 = vmul.f32 %v961, %v574
        %979 = vrot.lane.b32.xlu0 %v963, 67
        %v980 = vpop.permute.xlu0 %979
        %981 = vrot.lane.b32.xlu0 %v964, 67
        %v982 = vpop.permute.xlu0 %981
        %983 = vrot.lane.b32.xlu0 %v965, 67
        %v984 = vpop.permute.xlu0 %983
        %985 = vrot.lane.b32.xlu0 %v966, 67
        %v986 = vpop.permute.xlu0 %985
        %987 = vrot.lane.b32.xlu0 %v967, 67
        %v988 = vpop.permute.xlu0 %987
        %989 = vrot.lane.b32.xlu0 %v968, 67
        %v990 = vpop.permute.xlu0 %989
        %991 = vrot.lane.b32.xlu0 %v969, 67
        %v992 = vpop.permute.xlu0 %991
        %993 = vrot.lane.b32.xlu0 %v970, 67
        %v994 = vpop.permute.xlu0 %993
        %vm995 = vcmask 547840
        %v996 = vsel %vm995, %v980, %v982
        %v997 = vsel %vm995, %v982, %v984
        %v998 = vsel %vm995, %v984, %v986
        %v999 = vsel %vm995, %v986, %v988
        %v1000 = vsel %vm995, %v988, %v990
        %v1001 = vsel %vm995, %v990, %v992
        %v1002 = vsel %vm995, %v992, %v994
        %v1011 = vadd.f32 %v951, %v996
        %v1012 = vadd.f32 %v952, %v997
        %v1013 = vadd.f32 %v953, %v998
        %v1014 = vadd.f32 %v954, %v999
        %v1015 = vadd.f32 %v955, %v1000
        %v1016 = vadd.f32 %v956, %v1001
        %v1017 = vadd.f32 %v957, %v1002
        %v1018 = vadd.f32 %v958, %v994
        %1019 = vset.pattern.permute.xlu0 8
        %1020 = vperm.xlu0 %1019, %v436
        %v1021 = vpop.permute.xlu0 %1020
        %v1023 = vmul.f32 %v1021, %v546
        %v1024 = vmul.f32 %v1021, %v550
        %v1025 = vmul.f32 %v1021, %v554
        %v1026 = vmul.f32 %v1021, %v558
        %v1027 = vmul.f32 %v1021, %v562
        %v1028 = vmul.f32 %v1021, %v566
        %v1029 = vmul.f32 %v1021, %v570
        %v1030 = vmul.f32 %v1021, %v574
        %1039 = vrot.lane.b32.xlu0 %v1023, 66
        %v1040 = vpop.permute.xlu0 %1039
        %1041 = vrot.lane.b32.xlu0 %v1024, 66
        %v1042 = vpop.permute.xlu0 %1041
        %1043 = vrot.lane.b32.xlu0 %v1025, 66
        %v1044 = vpop.permute.xlu0 %1043
        %1045 = vrot.lane.b32.xlu0 %v1026, 66
        %v1046 = vpop.permute.xlu0 %1045
        %1047 = vrot.lane.b32.xlu0 %v1027, 66
        %v1048 = vpop.permute.xlu0 %1047
        %1049 = vrot.lane.b32.xlu0 %v1028, 66
        %v1050 = vpop.permute.xlu0 %1049
        %1051 = vrot.lane.b32.xlu0 %v1029, 66
        %v1052 = vpop.permute.xlu0 %1051
        %1053 = vrot.lane.b32.xlu0 %v1030, 66
        %v1054 = vpop.permute.xlu0 %1053
        %vm1055 = vcmask 539648
        %v1056 = vsel %vm1055, %v1040, %v1042
        %v1057 = vsel %vm1055, %v1042, %v1044
        %v1058 = vsel %vm1055, %v1044, %v1046
        %v1059 = vsel %vm1055, %v1046, %v1048
        %v1060 = vsel %vm1055, %v1048, %v1050
        %v1061 = vsel %vm1055, %v1050, %v1052
        %v1062 = vsel %vm1055, %v1052, %v1054
        %v1071 = vadd.f32 %v1011, %v1056
        %v1072 = vadd.f32 %v1012, %v1057
        %v1073 = vadd.f32 %v1013, %v1058
        %v1074 = vadd.f32 %v1014, %v1059
        %v1075 = vadd.f32 %v1015, %v1060
        %v1076 = vadd.f32 %v1016, %v1061
        %v1077 = vadd.f32 %v1017, %v1062
        %v1078 = vadd.f32 %v1018, %v1054
        %1080 = vset.pattern.permute.xlu0 0
        %1081 = vperm.xlu0 %1080, %v437
        %v1082 = vpop.permute.xlu0 %1081
        %v1084 = vadd.f32 %v1071, %v1082
        %v1085 = vadd.f32 %v1072, %v1082
        %v1086 = vadd.f32 %v1073, %v1082
        %v1087 = vadd.f32 %v1074, %v1082
        %v1088 = vadd.f32 %v1075, %v1082
        %v1089 = vadd.f32 %v1076, %v1082
        %v1090 = vadd.f32 %v1077, %v1082
        %v1091 = vadd.f32 %v1078, %v1082
        %v1092 = vmax.f32 %v1084, 0.0
        %v1093 = vmax.f32 %v1085, 0.0
        %v1094 = vmax.f32 %v1086, 0.0
        %v1095 = vmax.f32 %v1087, 0.0
        %v1096 = vmax.f32 %v1088, 0.0
        %v1097 = vmax.f32 %v1089, 0.0
        %v1098 = vmax.f32 %v1090, 0.0
        %v1099 = vmax.f32 %v1091, 0.0
        %1108 = vrot.lane.b32.xlu0 %v1092, 127
        %v1109 = vpop.permute.xlu0 %1108
        %1110 = vrot.lane.b32.xlu0 %v1093, 127
        %v1111 = vpop.permute.xlu0 %1110
        %1112 = vrot.lane.b32.xlu0 %v1094, 127
        %v1113 = vpop.permute.xlu0 %1112
        %1114 = vrot.lane.b32.xlu0 %v1095, 127
        %v1115 = vpop.permute.xlu0 %1114
        %1116 = vrot.lane.b32.xlu0 %v1096, 127
        %v1117 = vpop.permute.xlu0 %1116
        %1118 = vrot.lane.b32.xlu0 %v1097, 127
        %v1119 = vpop.permute.xlu0 %1118
        %1120 = vrot.lane.b32.xlu0 %v1098, 127
        %v1121 = vpop.permute.xlu0 %1120
        %1122 = vrot.lane.b32.xlu0 %v1099, 127
        %v1123 = vpop.permute.xlu0 %1122
        %v1124 = vsel %vm635, %v1109, %v1111
        %v1125 = vsel %vm635, %v1111, %v1113
        %v1126 = vsel %vm635, %v1113, %v1115
        %v1127 = vsel %vm635, %v1115, %v1117
        %v1128 = vsel %vm635, %v1117, %v1119
        %v1129 = vsel %vm635, %v1119, %v1121
        %v1130 = vsel %vm635, %v1121, %v1123
        %v1139 = vmax.f32 %v1092, %v1124
        %v1140 = vmax.f32 %v1093, %v1125
        %v1141 = vmax.f32 %v1094, %v1126
        %v1142 = vmax.f32 %v1095, %v1127
        %v1143 = vmax.f32 %v1096, %v1128
        %v1144 = vmax.f32 %v1097, %v1129
        %v1145 = vmax.f32 %v1098, %v1130
        %v1146 = vmax.f32 %v1099, %v1123
        %1155 = vrot.lane.b32.xlu0 %v1139, 98
        %v1156 = vpop.permute.xlu0 %1155
        %1157 = vrot.lane.b32.xlu0 %v1140, 98
        %v1158 = vpop.permute.xlu0 %1157
        %1159 = vrot.lane.b32.xlu0 %v1141, 98
        %v1160 = vpop.permute.xlu0 %1159
        %1161 = vrot.lane.b32.xlu0 %v1142, 98
        %v1162 = vpop.permute.xlu0 %1161
        %1163 = vrot.lane.b32.xlu0 %v1143, 98
        %v1164 = vpop.permute.xlu0 %1163
        %1165 = vrot.lane.b32.xlu0 %v1144, 98
        %v1166 = vpop.permute.xlu0 %1165
        %1167 = vrot.lane.b32.xlu0 %v1145, 98
        %v1168 = vpop.permute.xlu0 %1167
        %1169 = vrot.lane.b32.xlu0 %v1146, 98
        %v1170 = vpop.permute.xlu0 %1169
        %v1171 = vsel %vm755, %v1156, %v1158
        %v1172 = vsel %vm755, %v1158, %v1160
        %v1173 = vsel %vm755, %v1160, %v1162
        %v1174 = vsel %vm755, %v1162, %v1164
        %v1175 = vsel %vm755, %v1164, %v1166
        %v1176 = vsel %vm755, %v1166, %v1168
        %v1177 = vsel %vm755, %v1168, %v1170
        %v1186 = vmax.f32 %v1139, %v1171
        %v1187 = vmax.f32 %v1140, %v1172
        %v1188 = vmax.f32 %v1141, %v1173
        %v1189 = vmax.f32 %v1142, %v1174
        %v1190 = vmax.f32 %v1143, %v1175
        %v1191 = vmax.f32 %v1144, %v1176
        %v1192 = vmax.f32 %v1145, %v1177
        %v1193 = vmax.f32 %v1146, %v1170
        %v1195 = vlaneseq
        %v1196 = vshrl.u32 %v1195, 7
        %v1197 = vsub.s32 0, %v1196
        %v1198 = vrot.slane %v442, %v1197
        %v1199 = vlaneseq
        %v1200 = vshrl.u32 %v1199, 7
        %v1201 = vsub.s32 1, %v1200
        %v1202 = vrot.slane %v442, %v1201
        %v1203 = vlaneseq
        %v1204 = vshrl.u32 %v1203, 7
        %v1205 = vsub.s32 2, %v1204
        %v1206 = vrot.slane %v442, %v1205
        %v1207 = vlaneseq
        %v1208 = vshrl.u32 %v1207, 7
        %v1209 = vsub.s32 3, %v1208
        %v1210 = vrot.slane %v442, %v1209
        %v1211 = vlaneseq
        %v1212 = vshrl.u32 %v1211, 7
        %v1213 = vsub.s32 4, %v1212
        %v1214 = vrot.slane %v442, %v1213
        %v1215 = vlaneseq
        %v1216 = vshrl.u32 %v1215, 7
        %v1217 = vsub.s32 5, %v1216
        %v1218 = vrot.slane %v442, %v1217
        %v1219 = vlaneseq
        %v1220 = vshrl.u32 %v1219, 7
        %v1221 = vsub.s32 6, %v1220
        %v1222 = vrot.slane %v442, %v1221
        %v1223 = vlaneseq
        %v1224 = vshrl.u32 %v1223, 7
        %v1225 = vsub.s32 7, %v1224
        %v1226 = vrot.slane %v442, %v1225
        %v1235 = vmul.f32 %v1186, %v1198
        %v1236 = vmul.f32 %v1187, %v1202
        %v1237 = vmul.f32 %v1188, %v1206
        %v1238 = vmul.f32 %v1189, %v1210
        %v1239 = vmul.f32 %v1190, %v1214
        %v1240 = vmul.f32 %v1191, %v1218
        %v1241 = vmul.f32 %v1192, %v1222
        %v1242 = vmul.f32 %v1193, %v1226
        %1250 = vrot.lane.b32.xlu0 %v1235, 126
        %v1251 = vpop.permute.xlu0 %1250
        %1252 = vrot.lane.b32.xlu0 %v1236, 126
        %v1253 = vpop.permute.xlu0 %1252
        %1254 = vrot.lane.b32.xlu0 %v1237, 126
        %v1255 = vpop.permute.xlu0 %1254
        %1256 = vrot.lane.b32.xlu0 %v1238, 126
        %v1257 = vpop.permute.xlu0 %1256
        %1258 = vrot.lane.b32.xlu0 %v1239, 126
        %v1259 = vpop.permute.xlu0 %1258
        %1260 = vrot.lane.b32.xlu0 %v1240, 126
        %v1261 = vpop.permute.xlu0 %1260
        %1262 = vrot.lane.b32.xlu0 %v1241, 126
        %v1263 = vpop.permute.xlu0 %1262
        %v1264 = vsel %vm695, %v1251, %v1253
        %v1265 = vsel %vm695, %v1253, %v1255
        %v1266 = vsel %vm695, %v1255, %v1257
        %v1267 = vsel %vm695, %v1257, %v1259
        %v1268 = vsel %vm695, %v1259, %v1261
        %v1269 = vsel %vm695, %v1261, %v1263
        %1277 = vrot.lane.b32.xlu0 %v1235, 124
        %v1278 = vpop.permute.xlu0 %1277
        %1279 = vrot.lane.b32.xlu0 %v1236, 124
        %v1280 = vpop.permute.xlu0 %1279
        %1281 = vrot.lane.b32.xlu0 %v1237, 124
        %v1282 = vpop.permute.xlu0 %1281
        %1283 = vrot.lane.b32.xlu0 %v1238, 124
        %v1284 = vpop.permute.xlu0 %1283
        %1285 = vrot.lane.b32.xlu0 %v1239, 124
        %v1286 = vpop.permute.xlu0 %1285
        %1287 = vrot.lane.b32.xlu0 %v1240, 124
        %v1288 = vpop.permute.xlu0 %1287
        %1289 = vrot.lane.b32.xlu0 %v1241, 124
        %v1290 = vpop.permute.xlu0 %1289
        %vm1291 = vcmask 1014784
        %v1292 = vsel %vm1291, %v1278, %v1280
        %v1293 = vsel %vm1291, %v1280, %v1282
        %v1294 = vsel %vm1291, %v1282, %v1284
        %v1295 = vsel %vm1291, %v1284, %v1286
        %v1296 = vsel %vm1291, %v1286, %v1288
        %v1297 = vsel %vm1291, %v1288, %v1290
        %1305 = vrot.lane.b32.xlu0 %v1235, 68
        %v1306 = vpop.permute.xlu0 %1305
        %1307 = vrot.lane.b32.xlu0 %v1236, 68
        %v1308 = vpop.permute.xlu0 %1307
        %1309 = vrot.lane.b32.xlu0 %v1237, 68
        %v1310 = vpop.permute.xlu0 %1309
        %1311 = vrot.lane.b32.xlu0 %v1238, 68
        %v1312 = vpop.permute.xlu0 %1311
        %1313 = vrot.lane.b32.xlu0 %v1239, 68
        %v1314 = vpop.permute.xlu0 %1313
        %1315 = vrot.lane.b32.xlu0 %v1240, 68
        %v1316 = vpop.permute.xlu0 %1315
        %1317 = vrot.lane.b32.xlu0 %v1241, 68
        %v1318 = vpop.permute.xlu0 %1317
        %v1319 = vsel %vm935, %v1306, %v1308
        %v1320 = vsel %vm935, %v1308, %v1310
        %v1321 = vsel %vm935, %v1310, %v1312
        %v1322 = vsel %vm935, %v1312, %v1314
        %v1323 = vsel %vm935, %v1314, %v1316
        %v1324 = vsel %vm935, %v1316, %v1318
        %1332 = vrot.lane.b32.xlu0 %v1235, 66
        %v1333 = vpop.permute.xlu0 %1332
        %1334 = vrot.lane.b32.xlu0 %v1236, 66
        %v1335 = vpop.permute.xlu0 %1334
        %1336 = vrot.lane.b32.xlu0 %v1237, 66
        %v1337 = vpop.permute.xlu0 %1336
        %1338 = vrot.lane.b32.xlu0 %v1238, 66
        %v1339 = vpop.permute.xlu0 %1338
        %1340 = vrot.lane.b32.xlu0 %v1239, 66
        %v1341 = vpop.permute.xlu0 %1340
        %1342 = vrot.lane.b32.xlu0 %v1240, 66
        %v1343 = vpop.permute.xlu0 %1342
        %1344 = vrot.lane.b32.xlu0 %v1241, 66
        %v1345 = vpop.permute.xlu0 %1344
        %v1346 = vsel %vm1055, %v1333, %v1335
        %v1347 = vsel %vm1055, %v1335, %v1337
        %v1348 = vsel %vm1055, %v1337, %v1339
        %v1349 = vsel %vm1055, %v1339, %v1341
        %v1350 = vsel %vm1055, %v1341, %v1343
        %v1351 = vsel %vm1055, %v1343, %v1345
        %1359 = vrot.lane.b32.xlu0 %v1235, 64
        %v1360 = vpop.permute.xlu0 %1359
        %1361 = vrot.lane.b32.xlu0 %v1236, 64
        %v1362 = vpop.permute.xlu0 %1361
        %1363 = vrot.lane.b32.xlu0 %v1237, 64
        %v1364 = vpop.permute.xlu0 %1363
        %1365 = vrot.lane.b32.xlu0 %v1238, 64
        %v1366 = vpop.permute.xlu0 %1365
        %1367 = vrot.lane.b32.xlu0 %v1239, 64
        %v1368 = vpop.permute.xlu0 %1367
        %1369 = vrot.lane.b32.xlu0 %v1240, 64
        %v1370 = vpop.permute.xlu0 %1369
        %1371 = vrot.lane.b32.xlu0 %v1241, 64
        %v1372 = vpop.permute.xlu0 %1371
        %vm1373 = vcmask 523264
        %v1374 = vsel %vm1373, %v1360, %v1362
        %v1375 = vsel %vm1373, %v1362, %v1364
        %v1376 = vsel %vm1373, %v1364, %v1366
        %v1377 = vsel %vm1373, %v1366, %v1368
        %v1378 = vsel %vm1373, %v1368, %v1370
        %v1379 = vsel %vm1373, %v1370, %v1372
        %1388 = vrot.lane.b32.xlu0 %v1235, 8
        %v1389 = vpop.permute.xlu0 %1388
        %1390 = vrot.lane.b32.xlu0 %v1236, 8
        %v1391 = vpop.permute.xlu0 %1390
        %1392 = vrot.lane.b32.xlu0 %v1237, 8
        %v1393 = vpop.permute.xlu0 %1392
        %1394 = vrot.lane.b32.xlu0 %v1238, 8
        %v1395 = vpop.permute.xlu0 %1394
        %1396 = vrot.lane.b32.xlu0 %v1239, 8
        %v1397 = vpop.permute.xlu0 %1396
        %1398 = vrot.lane.b32.xlu0 %v1240, 8
        %v1399 = vpop.permute.xlu0 %1398
        %1400 = vrot.lane.b32.xlu0 %v1241, 8
        %v1401 = vpop.permute.xlu0 %1400
        %1402 = vrot.lane.b32.xlu0 %v1242, 8
        %v1403 = vpop.permute.xlu0 %1402
        %vm1404 = vcmask 64512
        %v1405 = vsel %vm1404, %v1389, %v1391
        %v1406 = vsel %vm1404, %v1391, %v1393
        %v1407 = vsel %vm1404, %v1393, %v1395
        %v1408 = vsel %vm1404, %v1395, %v1397
        %v1409 = vsel %vm1404, %v1397, %v1399
        %v1410 = vsel %vm1404, %v1399, %v1401
        %v1411 = vsel %vm1404, %v1401, %v1403
        %1419 = vrot.lane.b32.xlu0 %v1235, 6
        %v1420 = vpop.permute.xlu0 %1419
        %1421 = vrot.lane.b32.xlu0 %v1236, 6
        %v1422 = vpop.permute.xlu0 %1421
        %1423 = vrot.lane.b32.xlu0 %v1237, 6
        %v1424 = vpop.permute.xlu0 %1423
        %1425 = vrot.lane.b32.xlu0 %v1238, 6
        %v1426 = vpop.permute.xlu0 %1425
        %1427 = vrot.lane.b32.xlu0 %v1239, 6
        %v1428 = vpop.permute.xlu0 %1427
        %1429 = vrot.lane.b32.xlu0 %v1240, 6
        %v1430 = vpop.permute.xlu0 %1429
        %1431 = vrot.lane.b32.xlu0 %v1241, 6
        %v1432 = vpop.permute.xlu0 %1431
        %1433 = vrot.lane.b32.xlu0 %v1242, 6
        %v1434 = vpop.permute.xlu0 %1433
        %vm1435 = vcmask 48128
        %v1436 = vsel %vm1435, %v1420, %v1422
        %v1437 = vsel %vm1435, %v1422, %v1424
        %v1438 = vsel %vm1435, %v1424, %v1426
        %v1439 = vsel %vm1435, %v1426, %v1428
        %v1440 = vsel %vm1435, %v1428, %v1430
        %v1441 = vsel %vm1435, %v1430, %v1432
        %v1442 = vsel %vm1435, %v1432, %v1434
        %1450 = vrot.lane.b32.xlu0 %v1235, 4
        %v1451 = vpop.permute.xlu0 %1450
        %1452 = vrot.lane.b32.xlu0 %v1236, 4
        %v1453 = vpop.permute.xlu0 %1452
        %1454 = vrot.lane.b32.xlu0 %v1237, 4
        %v1455 = vpop.permute.xlu0 %1454
        %1456 = vrot.lane.b32.xlu0 %v1238, 4
        %v1457 = vpop.permute.xlu0 %1456
        %1458 = vrot.lane.b32.xlu0 %v1239, 4
        %v1459 = vpop.permute.xlu0 %1458
        %1460 = vrot.lane.b32.xlu0 %v1240, 4
        %v1461 = vpop.permute.xlu0 %1460
        %1462 = vrot.lane.b32.xlu0 %v1241, 4
        %v1463 = vpop.permute.xlu0 %1462
        %1464 = vrot.lane.b32.xlu0 %v1242, 4
        %v1465 = vpop.permute.xlu0 %1464
        %vm1466 = vcmask 31744
        %v1467 = vsel %vm1466, %v1451, %v1453
        %v1468 = vsel %vm1466, %v1453, %v1455
        %v1469 = vsel %vm1466, %v1455, %v1457
        %v1470 = vsel %vm1466, %v1457, %v1459
        %v1471 = vsel %vm1466, %v1459, %v1461
        %v1472 = vsel %vm1466, %v1461, %v1463
        %v1473 = vsel %vm1466, %v1463, %v1465
        %1482 = vset.pattern.permute.xlu0 0
        %1483 = vperm.xlu0 %1482, %v440
        %v1484 = vpop.permute.xlu0 %1483
        %1487 = vset.pattern.permute.xlu0 0
        %1488 = vperm.xlu0 %1487, %v441
        %v1489 = vpop.permute.xlu0 %1488
        %vm1491 = vcmask 588800
        %v1493 = vsel %vm1491, %v438, 0
        %v1496 = vsel %vm1491, %v439, 0
        %1498 = vmatprep.subr.mxu0 %v1236
        %1499 = vmatpush1.msra.mxu0 %v1235
        %1500 = vmatprep.subr.mxu0 %v1265
        %1501 = vmatpush1.msra.mxu0 %v1264
        %1502 = vmatprep.subr.mxu0 %v1293
        %1503 = vmatpush1.msra.mxu0 %v1292
        %1504 = vmatprep.subr.mxu0 %v1320
        %1505 = vmatpush1.msra.mxu0 %v1319
        %1506 = vmatprep.subr.mxu0 %v1347
        %1507 = vmatpush1.msra.mxu0 %v1346
        %1508 = vmatprep.subr.mxu0 %v1375
        %1509 = vmatpush1.msra.mxu0 %v1374
        %1510 = vmatprep.subr.mxu0 %v1406
        %1511 = vmatpush1.msra.mxu0 %v1405
        %1512 = vmatprep.subr.mxu0 %v1437
        %1513 = vmatpush1.msra.mxu0 %v1436
        %1514 = vmatprep.subr.mxu0 %v1468
        %1515 = vmatpush1.msra.mxu0 %v1467
        %1516 = vmatprep.subr.mxu0 0.0
        %1517 = vmatpush1.msra.mxu0 0.0
        %1518 = vmatprep.subr.mxu0 0.0
        %1519 = vmatpush1.msra.mxu0 0.0
        %1520 = vmatprep.subr.mxu0 0.0
        %1521 = vmatpush1.msra.mxu0 0.0
        %1522 = vmatprep.subr.mxu0 0.0
        %1523 = vmatpush1.msra.mxu0 0.0
        %1524 = vmatprep.subr.mxu0 0.0
        %1525 = vmatpush1.msra.mxu0 0.0
        %1526 = vmatprep.subr.mxu0 0.0
        %1527 = vmatpush1.msra.mxu0 0.0
        %1528 = vmatprep.subr.mxu0 0.0
        %1529 = vmatpush1.msra.mxu0 0.0
        %1530 = vmatprep.subr.mxu0 0.0
        %1531 = vmatpush1.msra.mxu0 0.0
        %1532 = vmatprep.subr.mxu0 0.0
        %1533 = vmatpush1.msra.mxu0 0.0
        %1534 = vmatprep.subr.mxu0 0.0
        %1535 = vmatpush1.msra.mxu0 0.0
        %1536 = vmatprep.subr.mxu0 0.0
        %1537 = vmatpush1.msra.mxu0 0.0
        %1538 = vmatprep.subr.mxu0 0.0
        %1539 = vmatpush1.msra.mxu0 0.0
        %1540 = vmatprep.subr.mxu0 0.0
        %1541 = vmatpush1.msra.mxu0 0.0
        %1542 = vmatprep.subr.mxu0 0.0
        %1543 = vmatpush1.msra.mxu0 0.0
        %1544 = vmatprep.subr.mxu0 0.0
        %1545 = vmatpush1.msra.mxu0 0.0
        %1546 = vmatprep.subr.mxu0 0.0
        %1547 = vmatpush1.msra.mxu0 0.0
        %1548 = vmatprep.subr.mxu0 0.0
        %1549 = vmatpush1.msra.mxu0 0.0
        %1550 = vmatprep.subr.mxu0 0.0
        %1551 = vmatpush1.msra.mxu0 0.0
        %1552 = vmatprep.subr.mxu0 0.0
        %1553 = vmatpush1.msra.mxu0 0.0
        %1554 = vmatprep.subr.mxu0 0.0
        %1555 = vmatpush1.msra.mxu0 0.0
        %1556 = vmatprep.subr.mxu0 0.0
        %1557 = vmatpush1.msra.mxu0 0.0
        %1558 = vmatprep.subr.mxu0 0.0
        %1559 = vmatpush1.msra.mxu0 0.0
        %1560 = vmatprep.subr.mxu0 0.0
        %1561 = vmatpush1.msra.mxu0 0.0
        %1562 = vmatprep.mubr.f32.mxu0 0.0
        %1563 = vmatmul.mubr.f32.gmra.mrb[0].mxu0 %v1493
        %v1564 = vpop.f32.mrb[0].mxu0
        %v1565 = vadd.f32 %v1484, %v1564
        %v1566 = vpop.f32.mrb[0].mxu0
        %v1567 = vadd.f32 %v1484, %v1566
        %1568 = vmatprep.mubr.f32.mxu0 0.0
        %1569 = vmatmul.mubr.f32.gmra.mrb[0].mxu0 %v1496
        %v1570 = vpop.f32.mrb[0].mxu0
        %v1571 = vadd.f32 %v1489, %v1570
        %v1572 = vpop.f32.mrb[0].mxu0
        %v1573 = vadd.f32 %v1489, %v1572
        %1574 = vdwg.mxu0
        %1575 = vmatprep.subr.mxu0 %v1238
        %1576 = vmatpush1.msra.mxu0 %v1237
        %1577 = vmatprep.subr.mxu0 %v1267
        %1578 = vmatpush1.msra.mxu0 %v1266
        %1579 = vmatprep.subr.mxu0 %v1295
        %1580 = vmatpush1.msra.mxu0 %v1294
        %1581 = vmatprep.subr.mxu0 %v1322
        %1582 = vmatpush1.msra.mxu0 %v1321
        %1583 = vmatprep.subr.mxu0 %v1349
        %1584 = vmatpush1.msra.mxu0 %v1348
        %1585 = vmatprep.subr.mxu0 %v1377
        %1586 = vmatpush1.msra.mxu0 %v1376
        %1587 = vmatprep.subr.mxu0 %v1408
        %1588 = vmatpush1.msra.mxu0 %v1407
        %1589 = vmatprep.subr.mxu0 %v1439
        %1590 = vmatpush1.msra.mxu0 %v1438
        %1591 = vmatprep.subr.mxu0 %v1470
        %1592 = vmatpush1.msra.mxu0 %v1469
        %1593 = vmatprep.subr.mxu0 0.0
        %1594 = vmatpush1.msra.mxu0 0.0
        %1595 = vmatprep.subr.mxu0 0.0
        %1596 = vmatpush1.msra.mxu0 0.0
        %1597 = vmatprep.subr.mxu0 0.0
        %1598 = vmatpush1.msra.mxu0 0.0
        %1599 = vmatprep.subr.mxu0 0.0
        %1600 = vmatpush1.msra.mxu0 0.0
        %1601 = vmatprep.subr.mxu0 0.0
        %1602 = vmatpush1.msra.mxu0 0.0
        %1603 = vmatprep.subr.mxu0 0.0
        %1604 = vmatpush1.msra.mxu0 0.0
        %1605 = vmatprep.subr.mxu0 0.0
        %1606 = vmatpush1.msra.mxu0 0.0
        %1607 = vmatprep.subr.mxu0 0.0
        %1608 = vmatpush1.msra.mxu0 0.0
        %1609 = vmatprep.subr.mxu0 0.0
        %1610 = vmatpush1.msra.mxu0 0.0
        %1611 = vmatprep.subr.mxu0 0.0
        %1612 = vmatpush1.msra.mxu0 0.0
        %1613 = vmatprep.subr.mxu0 0.0
        %1614 = vmatpush1.msra.mxu0 0.0
        %1615 = vmatprep.subr.mxu0 0.0
        %1616 = vmatpush1.msra.mxu0 0.0
        %1617 = vmatprep.subr.mxu0 0.0
        %1618 = vmatpush1.msra.mxu0 0.0
        %1619 = vmatprep.subr.mxu0 0.0
        %1620 = vmatpush1.msra.mxu0 0.0
        %1621 = vmatprep.subr.mxu0 0.0
        %1622 = vmatpush1.msra.mxu0 0.0
        %1623 = vmatprep.subr.mxu0 0.0
        %1624 = vmatpush1.msra.mxu0 0.0
        %1625 = vmatprep.subr.mxu0 0.0
        %1626 = vmatpush1.msra.mxu0 0.0
        %1627 = vmatprep.subr.mxu0 0.0
        %1628 = vmatpush1.msra.mxu0 0.0
        %1629 = vmatprep.subr.mxu0 0.0
        %1630 = vmatpush1.msra.mxu0 0.0
        %1631 = vmatprep.subr.mxu0 0.0
        %1632 = vmatpush1.msra.mxu0 0.0
        %1633 = vmatprep.subr.mxu0 0.0
        %1634 = vmatpush1.msra.mxu0 0.0
        %1635 = vmatprep.subr.mxu0 0.0
        %1636 = vmatpush1.msra.mxu0 0.0
        %1637 = vmatprep.subr.mxu0 0.0
        %1638 = vmatpush1.msra.mxu0 0.0
        %1639 = vmatprep.mubr.f32.mxu0 0.0
        %1640 = vmatmul.mubr.f32.gmra.mrb[0].mxu0 %v1493
        %v1641 = vpop.f32.mrb[0].mxu0
        %v1642 = vadd.f32 %v1484, %v1641
        %v1643 = vpop.f32.mrb[0].mxu0
        %v1644 = vadd.f32 %v1484, %v1643
        %1645 = vmatprep.mubr.f32.mxu0 0.0
        %1646 = vmatmul.mubr.f32.gmra.mrb[0].mxu0 %v1496
        %v1647 = vpop.f32.mrb[0].mxu0
        %v1648 = vadd.f32 %v1489, %v1647
        %v1649 = vpop.f32.mrb[0].mxu0
        %v1650 = vadd.f32 %v1489, %v1649
        %1651 = vdwg.mxu0
        %1652 = vmatprep.subr.mxu0 %v1240
        %1653 = vmatpush1.msra.mxu0 %v1239
        %1654 = vmatprep.subr.mxu0 %v1269
        %1655 = vmatpush1.msra.mxu0 %v1268
        %1656 = vmatprep.subr.mxu0 %v1297
        %1657 = vmatpush1.msra.mxu0 %v1296
        %1658 = vmatprep.subr.mxu0 %v1324
        %1659 = vmatpush1.msra.mxu0 %v1323
        %1660 = vmatprep.subr.mxu0 %v1351
        %1661 = vmatpush1.msra.mxu0 %v1350
        %1662 = vmatprep.subr.mxu0 %v1379
        %1663 = vmatpush1.msra.mxu0 %v1378
        %1664 = vmatprep.subr.mxu0 %v1410
        %1665 = vmatpush1.msra.mxu0 %v1409
        %1666 = vmatprep.subr.mxu0 %v1441
        %1667 = vmatpush1.msra.mxu0 %v1440
        %1668 = vmatprep.subr.mxu0 %v1472
        %1669 = vmatpush1.msra.mxu0 %v1471
        %1670 = vmatprep.subr.mxu0 0.0
        %1671 = vmatpush1.msra.mxu0 0.0
        %1672 = vmatprep.subr.mxu0 0.0
        %1673 = vmatpush1.msra.mxu0 0.0
        %1674 = vmatprep.subr.mxu0 0.0
        %1675 = vmatpush1.msra.mxu0 0.0
        %1676 = vmatprep.subr.mxu0 0.0
        %1677 = vmatpush1.msra.mxu0 0.0
        %1678 = vmatprep.subr.mxu0 0.0
        %1679 = vmatpush1.msra.mxu0 0.0
        %1680 = vmatprep.subr.mxu0 0.0
        %1681 = vmatpush1.msra.mxu0 0.0
        %1682 = vmatprep.subr.mxu0 0.0
        %1683 = vmatpush1.msra.mxu0 0.0
        %1684 = vmatprep.subr.mxu0 0.0
        %1685 = vmatpush1.msra.mxu0 0.0
        %1686 = vmatprep.subr.mxu0 0.0
        %1687 = vmatpush1.msra.mxu0 0.0
        %1688 = vmatprep.subr.mxu0 0.0
        %1689 = vmatpush1.msra.mxu0 0.0
        %1690 = vmatprep.subr.mxu0 0.0
        %1691 = vmatpush1.msra.mxu0 0.0
        %1692 = vmatprep.subr.mxu0 0.0
        %1693 = vmatpush1.msra.mxu0 0.0
        %1694 = vmatprep.subr.mxu0 0.0
        %1695 = vmatpush1.msra.mxu0 0.0
        %1696 = vmatprep.subr.mxu0 0.0
        %1697 = vmatpush1.msra.mxu0 0.0
        %1698 = vmatprep.subr.mxu0 0.0
        %1699 = vmatpush1.msra.mxu0 0.0
        %1700 = vmatprep.subr.mxu0 0.0
        %1701 = vmatpush1.msra.mxu0 0.0
        %1702 = vmatprep.subr.mxu0 0.0
        %1703 = vmatpush1.msra.mxu0 0.0
        %1704 = vmatprep.subr.mxu0 0.0
        %1705 = vmatpush1.msra.mxu0 0.0
        %1706 = vmatprep.subr.mxu0 0.0
        %1707 = vmatpush1.msra.mxu0 0.0
        %1708 = vmatprep.subr.mxu0 0.0
        %1709 = vmatpush1.msra.mxu0 0.0
        %1710 = vmatprep.subr.mxu0 0.0
        %1711 = vmatpush1.msra.mxu0 0.0
        %1712 = vmatprep.subr.mxu0 0.0
        %1713 = vmatpush1.msra.mxu0 0.0
        %1714 = vmatprep.subr.mxu0 0.0
        %1715 = vmatpush1.msra.mxu0 0.0
        %1716 = vmatprep.mubr.f32.mxu0 0.0
        %1717 = vmatmul.mubr.f32.gmra.mrb[0].mxu0 %v1493
        %v1718 = vpop.f32.mrb[0].mxu0
        %v1719 = vadd.f32 %v1484, %v1718
        %v1720 = vpop.f32.mrb[0].mxu0
        %v1721 = vadd.f32 %v1484, %v1720
        %1722 = vmatprep.mubr.f32.mxu0 0.0
        %1723 = vmatmul.mubr.f32.gmra.mrb[0].mxu0 %v1496
        %v1724 = vpop.f32.mrb[0].mxu0
        %v1725 = vadd.f32 %v1489, %v1724
        %v1726 = vpop.f32.mrb[0].mxu0
        %v1727 = vadd.f32 %v1489, %v1726
        %1728 = vdwg.mxu0
        %1729 = vmatprep.subr.mxu0 0.0
        %1730 = vmatpush1.msra.mxu0 %v1241
        %1731 = vmatprep.subr.mxu0 0.0
        %1732 = vmatpush1.msra.mxu0 %v1263
        %1733 = vmatprep.subr.mxu0 0.0
        %1734 = vmatpush1.msra.mxu0 %v1290
        %1735 = vmatprep.subr.mxu0 0.0
        %1736 = vmatpush1.msra.mxu0 %v1318
        %1737 = vmatprep.subr.mxu0 0.0
        %1738 = vmatpush1.msra.mxu0 %v1345
        %1739 = vmatprep.subr.mxu0 0.0
        %1740 = vmatpush1.msra.mxu0 %v1372
        %1741 = vmatprep.subr.mxu0 0.0
        %1742 = vmatpush1.msra.mxu0 %v1411
        %1743 = vmatprep.subr.mxu0 0.0
        %1744 = vmatpush1.msra.mxu0 %v1442
        %1745 = vmatprep.subr.mxu0 0.0
        %1746 = vmatpush1.msra.mxu0 %v1473
        %1747 = vmatprep.subr.mxu0 0.0
        %1748 = vmatpush1.msra.mxu0 0.0
        %1749 = vmatprep.subr.mxu0 0.0
        %1750 = vmatpush1.msra.mxu0 0.0
        %1751 = vmatprep.subr.mxu0 0.0
        %1752 = vmatpush1.msra.mxu0 0.0
        %1753 = vmatprep.subr.mxu0 0.0
        %1754 = vmatpush1.msra.mxu0 0.0
        %1755 = vmatprep.subr.mxu0 0.0
        %1756 = vmatpush1.msra.mxu0 0.0
        %1757 = vmatprep.subr.mxu0 0.0
        %1758 = vmatpush1.msra.mxu0 0.0
        %1759 = vmatprep.subr.mxu0 0.0
        %1760 = vmatpush1.msra.mxu0 0.0
        %1761 = vmatprep.subr.mxu0 0.0
        %1762 = vmatpush1.msra.mxu0 0.0
        %1763 = vmatprep.subr.mxu0 0.0
        %1764 = vmatpush1.msra.mxu0 0.0
        %1765 = vmatprep.subr.mxu0 0.0
        %1766 = vmatpush1.msra.mxu0 0.0
        %1767 = vmatprep.subr.mxu0 0.0
        %1768 = vmatpush1.msra.mxu0 0.0
        %1769 = vmatprep.subr.mxu0 0.0
        %1770 = vmatpush1.msra.mxu0 0.0
        %1771 = vmatprep.subr.mxu0 0.0
        %1772 = vmatpush1.msra.mxu0 0.0
        %1773 = vmatprep.subr.mxu0 0.0
        %1774 = vmatpush1.msra.mxu0 0.0
        %1775 = vmatprep.subr.mxu0 0.0
        %1776 = vmatpush1.msra.mxu0 0.0
        %1777 = vmatprep.subr.mxu0 0.0
        %1778 = vmatpush1.msra.mxu0 0.0
        %1779 = vmatprep.subr.mxu0 0.0
        %1780 = vmatpush1.msra.mxu0 0.0
        %1781 = vmatprep.subr.mxu0 0.0
        %1782 = vmatpush1.msra.mxu0 0.0
        %1783 = vmatprep.subr.mxu0 0.0
        %1784 = vmatpush1.msra.mxu0 0.0
        %1785 = vmatprep.subr.mxu0 0.0
        %1786 = vmatpush1.msra.mxu0 0.0
        %1787 = vmatprep.subr.mxu0 0.0
        %1788 = vmatpush1.msra.mxu0 0.0
        %1789 = vmatprep.subr.mxu0 0.0
        %1790 = vmatpush1.msra.mxu0 0.0
        %1791 = vmatprep.subr.mxu0 0.0
        %1792 = vmatpush1.msra.mxu0 0.0
        %1793 = vmatprep.mubr.f32.mxu0 0.0
        %1794 = vmatmul.mubr.f32.gmra.mrb[0].mxu0 %v1493
        %v1795 = vpop.f32.mrb[0].mxu0
        %v1796 = vadd.f32 %v1484, %v1795
        %v1797 = vpop.f32.mrb[0].mxu0
        %1798 = vmatprep.mubr.f32.mxu0 0.0
        %1799 = vmatmul.mubr.f32.gmra.mrb[0].mxu0 %v1496
        %v1800 = vpop.f32.mrb[0].mxu0
        %v1801 = vadd.f32 %v1489, %v1800
        %v1802 = vpop.f32.mrb[0].mxu0
        %1803 = vdwg.mxu0
        %v1804 = vmax.f32 %v1565, 0.0
        %v1805 = vmax.f32 %v1567, 0.0
        %v1806 = vmax.f32 %v1642, 0.0
        %v1807 = vmax.f32 %v1644, 0.0
        %v1808 = vmax.f32 %v1719, 0.0
        %v1809 = vmax.f32 %v1721, 0.0
        %v1810 = vmax.f32 %v1796, 0.0
        %v1811 = vmax.f32 %v1571, 0.0
        %v1812 = vmax.f32 %v1573, 0.0
        %v1813 = vmax.f32 %v1648, 0.0
        %v1814 = vmax.f32 %v1650, 0.0
        %v1815 = vmax.f32 %v1725, 0.0
        %v1816 = vmax.f32 %v1727, 0.0
        %v1817 = vmax.f32 %v1801, 0.0
        %1830 = vrot.lane.b32.xlu0 %v1804, 126
        %v1831 = vpop.permute.xlu0 %1830
        %1832 = vrot.lane.b32.xlu0 %v1805, 126
        %v1833 = vpop.permute.xlu0 %1832
        %1834 = vrot.lane.b32.xlu0 %v1806, 126
        %v1835 = vpop.permute.xlu0 %1834
        %1836 = vrot.lane.b32.xlu0 %v1807, 126
        %v1837 = vpop.permute.xlu0 %1836
        %1838 = vrot.lane.b32.xlu0 %v1808, 126
        %v1839 = vpop.permute.xlu0 %1838
        %1840 = vrot.lane.b32.xlu0 %v1809, 126
        %v1841 = vpop.permute.xlu0 %1840
        %1842 = vrot.lane.b32.xlu0 %v1811, 126
        %v1843 = vpop.permute.xlu0 %1842
        %1844 = vrot.lane.b32.xlu0 %v1812, 126
        %v1845 = vpop.permute.xlu0 %1844
        %1846 = vrot.lane.b32.xlu0 %v1813, 126
        %v1847 = vpop.permute.xlu0 %1846
        %1848 = vrot.lane.b32.xlu0 %v1814, 126
        %v1849 = vpop.permute.xlu0 %1848
        %1850 = vrot.lane.b32.xlu0 %v1815, 126
        %v1851 = vpop.permute.xlu0 %1850
        %1852 = vrot.lane.b32.xlu0 %v1816, 126
        %v1853 = vpop.permute.xlu0 %1852
        %v1854 = vsel %vm695, %v1831, %v1833
        %v1855 = vsel %vm695, %v1833, %v1835
        %v1856 = vsel %vm695, %v1835, %v1837
        %v1857 = vsel %vm695, %v1837, %v1839
        %v1858 = vsel %vm695, %v1839, %v1841
        %v1859 = vsel %vm695, %v1843, %v1845
        %v1860 = vsel %vm695, %v1845, %v1847
        %v1861 = vsel %vm695, %v1847, %v1849
        %v1862 = vsel %vm695, %v1849, %v1851
        %v1863 = vsel %vm695, %v1851, %v1853
        %v1876 = vmax.f32 %v1804, %v1854
        %v1877 = vmax.f32 %v1805, %v1855
        %v1878 = vmax.f32 %v1806, %v1856
        %v1879 = vmax.f32 %v1807, %v1857
        %v1880 = vmax.f32 %v1808, %v1858
        %v1881 = vmax.f32 %v1809, %v1841
        %v1882 = vmax.f32 %v1811, %v1859
        %v1883 = vmax.f32 %v1812, %v1860
        %v1884 = vmax.f32 %v1813, %v1861
        %v1885 = vmax.f32 %v1814, %v1862
        %v1886 = vmax.f32 %v1815, %v1863
        %v1887 = vmax.f32 %v1816, %v1853
        %1890 = vrot.lane.b32.xlu0 %v1810, 126
        %v1891 = vpop.permute.xlu0 %1890
        %1892 = vrot.lane.b32.xlu0 %v1817, 126
        %v1893 = vpop.permute.xlu0 %1892
        %v1894 = vsel %vm695, %v1841, %v1891
        %v1895 = vsel %vm695, %v1853, %v1893
        %v1900 = vmax.f32 %v1809, %v1894
        %v1901 = vmax.f32 %v1810, %v1891
        %v1902 = vmax.f32 %v1816, %v1895
        %v1903 = vmax.f32 %v1817, %v1893
        %1918 = vrot.lane.b32.xlu0 %v1876, 68
        %v1919 = vpop.permute.xlu0 %1918
        %1920 = vrot.lane.b32.xlu0 %v1877, 68
        %v1921 = vpop.permute.xlu0 %1920
        %1922 = vrot.lane.b32.xlu0 %v1878, 68
        %v1923 = vpop.permute.xlu0 %1922
        %1924 = vrot.lane.b32.xlu0 %v1879, 68
        %v1925 = vpop.permute.xlu0 %1924
        %1926 = vrot.lane.b32.xlu0 %v1880, 68
        %v1927 = vpop.permute.xlu0 %1926
        %1928 = vrot.lane.b32.xlu0 %v1900, 68
        %v1929 = vpop.permute.xlu0 %1928
        %1930 = vrot.lane.b32.xlu0 %v1901, 68
        %v1931 = vpop.permute.xlu0 %1930
        %1932 = vrot.lane.b32.xlu0 %v1882, 68
        %v1933 = vpop.permute.xlu0 %1932
        %1934 = vrot.lane.b32.xlu0 %v1883, 68
        %v1935 = vpop.permute.xlu0 %1934
        %1936 = vrot.lane.b32.xlu0 %v1884, 68
        %v1937 = vpop.permute.xlu0 %1936
        %1938 = vrot.lane.b32.xlu0 %v1885, 68
        %v1939 = vpop.permute.xlu0 %1938
        %1940 = vrot.lane.b32.xlu0 %v1886, 68
        %v1941 = vpop.permute.xlu0 %1940
        %1942 = vrot.lane.b32.xlu0 %v1902, 68
        %v1943 = vpop.permute.xlu0 %1942
        %1944 = vrot.lane.b32.xlu0 %v1903, 68
        %v1945 = vpop.permute.xlu0 %1944
        %v1946 = vsel %vm935, %v1919, %v1921
        %v1947 = vsel %vm935, %v1921, %v1923
        %v1948 = vsel %vm935, %v1923, %v1925
        %v1949 = vsel %vm935, %v1925, %v1927
        %v1950 = vsel %vm935, %v1927, %v1929
        %v1951 = vsel %vm935, %v1929, %v1931
        %v1952 = vsel %vm935, %v1933, %v1935
        %v1953 = vsel %vm935, %v1935, %v1937
        %v1954 = vsel %vm935, %v1937, %v1939
        %v1955 = vsel %vm935, %v1939, %v1941
        %v1956 = vsel %vm935, %v1941, %v1943
        %v1957 = vsel %vm935, %v1943, %v1945
        %v1970 = vmax.f32 %v1876, %v1946
        %v1971 = vmax.f32 %v1877, %v1947
        %v1972 = vmax.f32 %v1878, %v1948
        %v1973 = vmax.f32 %v1879, %v1949
        %v1974 = vmax.f32 %v1880, %v1950
        %v1975 = vmax.f32 %v1881, %v1951
        %v1976 = vmax.f32 %v1882, %v1952
        %v1977 = vmax.f32 %v1883, %v1953
        %v1978 = vmax.f32 %v1884, %v1954
        %v1979 = vmax.f32 %v1885, %v1955
        %v1980 = vmax.f32 %v1886, %v1956
        %v1981 = vmax.f32 %v1887, %v1957
        %vm1982 = vcmask 859136
        %v1984 = vsel %vm1982, %v1975, 0
        %v1987 = vsel %vm1982, %v1981, 0
        %vm1989 = vcmask 1040384
        %v1991 = vsel %vm1989, %v536, 0
        %1993 = vmatprep.subr.mxu0 0.0
        %1994 = vmatpush1.msra.mxu0 %v443
        %1995 = vmatprep.subr.mxu0 0.0
        %1996 = vmatpush1.msra.mxu0 %v444
        %1997 = vmatprep.subr.mxu0 0.0
        %1998 = vmatpush1.msra.mxu0 %v445
        %1999 = vmatprep.subr.mxu0 0.0
        %2000 = vmatpush1.msra.mxu0 %v446
        %2001 = vmatprep.subr.mxu0 0.0
        %2002 = vmatpush1.msra.mxu0 %v447
        %2003 = vmatprep.subr.mxu0 0.0
        %2004 = vmatpush1.msra.mxu0 %v448
        %2005 = vmatprep.subr.mxu0 0.0
        %2006 = vmatpush1.msra.mxu0 %v449
        %2007 = vmatprep.subr.mxu0 0.0
        %2008 = vmatpush1.msra.mxu0 %v450
        %2009 = vmatprep.subr.mxu0 0.0
        %2010 = vmatpush1.msra.mxu0 %v451
        %2011 = vmatprep.subr.mxu0 0.0
        %2012 = vmatpush1.msra.mxu0 %v452
        %2013 = vmatprep.subr.mxu0 0.0
        %2014 = vmatpush1.msra.mxu0 %v453
        %2015 = vmatprep.subr.mxu0 0.0
        %2016 = vmatpush1.msra.mxu0 %v454
        %2017 = vmatprep.subr.mxu0 0.0
        %2018 = vmatpush1.msra.mxu0 %v455
        %2019 = vmatprep.subr.mxu0 0.0
        %2020 = vmatpush1.msra.mxu0 %v456
        %2021 = vmatprep.subr.mxu0 0.0
        %2022 = vmatpush1.msra.mxu0 %v457
        %2023 = vmatprep.subr.mxu0 0.0
        %2024 = vmatpush1.msra.mxu0 %v458
        %2025 = vmatprep.subr.mxu0 0.0
        %2026 = vmatpush1.msra.mxu0 %v459
        %2027 = vmatprep.subr.mxu0 0.0
        %2028 = vmatpush1.msra.mxu0 %v460
        %2029 = vmatprep.subr.mxu0 0.0
        %2030 = vmatpush1.msra.mxu0 %v461
        %2031 = vmatprep.subr.mxu0 0.0
        %2032 = vmatpush1.msra.mxu0 %v462
        %2033 = vmatprep.subr.mxu0 0.0
        %2034 = vmatpush1.msra.mxu0 %v463
        %2035 = vmatprep.subr.mxu0 0.0
        %2036 = vmatpush1.msra.mxu0 %v464
        %2037 = vmatprep.subr.mxu0 0.0
        %2038 = vmatpush1.msra.mxu0 %v465
        %2039 = vmatprep.subr.mxu0 0.0
        %2040 = vmatpush1.msra.mxu0 %v466
        %2041 = vmatprep.subr.mxu0 0.0
        %2042 = vmatpush1.msra.mxu0 %v467
        %2043 = vmatprep.subr.mxu0 0.0
        %2044 = vmatpush1.msra.mxu0 %v468
        %2045 = vmatprep.subr.mxu0 0.0
        %2046 = vmatpush1.msra.mxu0 %v469
        %2047 = vmatprep.subr.mxu0 0.0
        %2048 = vmatpush1.msra.mxu0 %v470
        %2049 = vmatprep.subr.mxu0 0.0
        %2050 = vmatpush1.msra.mxu0 %v471
        %2051 = vmatprep.subr.mxu0 0.0
        %2052 = vmatpush1.msra.mxu0 %v472
        %2053 = vmatprep.subr.mxu0 0.0
        %2054 = vmatpush1.msra.mxu0 %v473
        %2055 = vmatprep.subr.mxu0 0.0
        %2056 = vmatpush1.msra.mxu0 %v474
        %2057 = vmatprep.mubr.f32.mxu0 %v1971
        %2058 = vmatmul.mubr.f32.gmra.mrb[0].mxu0 %v1970
        %v2059 = vpop.f32.mrb[0].mxu0
        %v2060 = vadd.f32 0.0, %v2059
        %v2061 = vpop.f32.mrb[0].mxu0
        %2062 = vmatprep.mubr.f32.mxu0 %v1977
        %2063 = vmatmul.mubr.f32.gmra.mrb[0].mxu0 %v1976
        %v2064 = vpop.f32.mrb[0].mxu0
        %v2065 = vadd.f32 0.0, %v2064
        %v2066 = vpop.f32.mrb[0].mxu0
        %2067 = vdwg.mxu0
        %2068 = vmatprep.subr.mxu0 0.0
        %2069 = vmatpush1.msra.mxu0 %v475
        %2070 = vmatprep.subr.mxu0 0.0
        %2071 = vmatpush1.msra.mxu0 %v476
        %2072 = vmatprep.subr.mxu0 0.0
        %2073 = vmatpush1.msra.mxu0 %v477
        %2074 = vmatprep.subr.mxu0 0.0
        %2075 = vmatpush1.msra.mxu0 %v478
        %2076 = vmatprep.subr.mxu0 0.0
        %2077 = vmatpush1.msra.mxu0 %v479
        %2078 = vmatprep.subr.mxu0 0.0
        %2079 = vmatpush1.msra.mxu0 %v480
        %2080 = vmatprep.subr.mxu0 0.0
        %2081 = vmatpush1.msra.mxu0 %v481
        %2082 = vmatprep.subr.mxu0 0.0
        %2083 = vmatpush1.msra.mxu0 %v482
        %2084 = vmatprep.subr.mxu0 0.0
        %2085 = vmatpush1.msra.mxu0 %v483
        %2086 = vmatprep.subr.mxu0 0.0
        %2087 = vmatpush1.msra.mxu0 %v484
        %2088 = vmatprep.subr.mxu0 0.0
        %2089 = vmatpush1.msra.mxu0 %v485
        %2090 = vmatprep.subr.mxu0 0.0
        %2091 = vmatpush1.msra.mxu0 %v486
        %2092 = vmatprep.subr.mxu0 0.0
        %2093 = vmatpush1.msra.mxu0 %v487
        %2094 = vmatprep.subr.mxu0 0.0
        %2095 = vmatpush1.msra.mxu0 %v488
        %2096 = vmatprep.subr.mxu0 0.0
        %2097 = vmatpush1.msra.mxu0 %v489
        %2098 = vmatprep.subr.mxu0 0.0
        %2099 = vmatpush1.msra.mxu0 %v490
        %2100 = vmatprep.subr.mxu0 0.0
        %2101 = vmatpush1.msra.mxu0 %v491
        %2102 = vmatprep.subr.mxu0 0.0
        %2103 = vmatpush1.msra.mxu0 %v492
        %2104 = vmatprep.subr.mxu0 0.0
        %2105 = vmatpush1.msra.mxu0 %v493
        %2106 = vmatprep.subr.mxu0 0.0
        %2107 = vmatpush1.msra.mxu0 %v494
        %2108 = vmatprep.subr.mxu0 0.0
        %2109 = vmatpush1.msra.mxu0 %v495
        %2110 = vmatprep.subr.mxu0 0.0
        %2111 = vmatpush1.msra.mxu0 %v496
        %2112 = vmatprep.subr.mxu0 0.0
        %2113 = vmatpush1.msra.mxu0 %v497
        %2114 = vmatprep.subr.mxu0 0.0
        %2115 = vmatpush1.msra.mxu0 %v498
        %2116 = vmatprep.subr.mxu0 0.0
        %2117 = vmatpush1.msra.mxu0 %v499
        %2118 = vmatprep.subr.mxu0 0.0
        %2119 = vmatpush1.msra.mxu0 %v500
        %2120 = vmatprep.subr.mxu0 0.0
        %2121 = vmatpush1.msra.mxu0 %v501
        %2122 = vmatprep.subr.mxu0 0.0
        %2123 = vmatpush1.msra.mxu0 %v502
        %2124 = vmatprep.subr.mxu0 0.0
        %2125 = vmatpush1.msra.mxu0 %v503
        %2126 = vmatprep.subr.mxu0 0.0
        %2127 = vmatpush1.msra.mxu0 %v504
        %2128 = vmatprep.subr.mxu0 0.0
        %2129 = vmatpush1.msra.mxu0 %v505
        %2130 = vmatprep.subr.mxu0 0.0
        %2131 = vmatpush1.msra.mxu0 %v506
        %2132 = vmatprep.mubr.f32.mxu0 %v1973
        %2133 = vmatmul.mubr.f32.gmra.mrb[0].mxu0 %v1972
        %v2134 = vpop.f32.mrb[0].mxu0
        %v2135 = vadd.f32 %v2060, %v2134
        %v2136 = vpop.f32.mrb[0].mxu0
        %2137 = vmatprep.mubr.f32.mxu0 %v1979
        %2138 = vmatmul.mubr.f32.gmra.mrb[0].mxu0 %v1978
        %v2139 = vpop.f32.mrb[0].mxu0
        %v2140 = vadd.f32 %v2065, %v2139
        %v2141 = vpop.f32.mrb[0].mxu0
        %2142 = vdwg.mxu0
        %2143 = vmatprep.subr.mxu0 0.0
        %2144 = vmatpush1.msra.mxu0 %v507
        %2145 = vmatprep.subr.mxu0 0.0
        %2146 = vmatpush1.msra.mxu0 %v508
        %2147 = vmatprep.subr.mxu0 0.0
        %2148 = vmatpush1.msra.mxu0 %v509
        %2149 = vmatprep.subr.mxu0 0.0
        %2150 = vmatpush1.msra.mxu0 %v510
        %2151 = vmatprep.subr.mxu0 0.0
        %2152 = vmatpush1.msra.mxu0 %v511
        %2153 = vmatprep.subr.mxu0 0.0
        %2154 = vmatpush1.msra.mxu0 %v512
        %2155 = vmatprep.subr.mxu0 0.0
        %2156 = vmatpush1.msra.mxu0 %v513
        %2157 = vmatprep.subr.mxu0 0.0
        %2158 = vmatpush1.msra.mxu0 %v514
        %2159 = vmatprep.subr.mxu0 0.0
        %2160 = vmatpush1.msra.mxu0 %v515
        %2161 = vmatprep.subr.mxu0 0.0
        %2162 = vmatpush1.msra.mxu0 %v516
        %2163 = vmatprep.subr.mxu0 0.0
        %2164 = vmatpush1.msra.mxu0 %v517
        %2165 = vmatprep.subr.mxu0 0.0
        %2166 = vmatpush1.msra.mxu0 %v518
        %2167 = vmatprep.subr.mxu0 0.0
        %2168 = vmatpush1.msra.mxu0 %v519
        %2169 = vmatprep.subr.mxu0 0.0
        %2170 = vmatpush1.msra.mxu0 %v520
        %2171 = vmatprep.subr.mxu0 0.0
        %2172 = vmatpush1.msra.mxu0 %v521
        %2173 = vmatprep.subr.mxu0 0.0
        %2174 = vmatpush1.msra.mxu0 %v522
        %2175 = vmatprep.subr.mxu0 0.0
        %2176 = vmatpush1.msra.mxu0 %v523
        %2177 = vmatprep.subr.mxu0 0.0
        %2178 = vmatpush1.msra.mxu0 %v524
        %2179 = vmatprep.subr.mxu0 0.0
        %2180 = vmatpush1.msra.mxu0 %v525
        %2181 = vmatprep.subr.mxu0 0.0
        %2182 = vmatpush1.msra.mxu0 %v526
        %2183 = vmatprep.subr.mxu0 0.0
        %2184 = vmatpush1.msra.mxu0 %v527
        %2185 = vmatprep.subr.mxu0 0.0
        %2186 = vmatpush1.msra.mxu0 %v528
        %2187 = vmatprep.subr.mxu0 0.0
        %2188 = vmatpush1.msra.mxu0 %v529
        %2189 = vmatprep.subr.mxu0 0.0
        %2190 = vmatpush1.msra.mxu0 %v530
        %2191 = vmatprep.subr.mxu0 0.0
        %2192 = vmatpush1.msra.mxu0 %v531
        %2193 = vmatprep.subr.mxu0 0.0
        %2194 = vmatpush1.msra.mxu0 %v532
        %2195 = vmatprep.subr.mxu0 0.0
        %2196 = vmatpush1.msra.mxu0 %v533
        %2197 = vmatprep.subr.mxu0 0.0
        %2198 = vmatpush1.msra.mxu0 %v534
        %2199 = vmatprep.subr.mxu0 0.0
        %2200 = vmatpush1.msra.mxu0 %v535
        %2201 = vmatprep.subr.mxu0 0.0
        %2202 = vmatpush1.msra.mxu0 %v1991
        %2203 = vmatprep.subr.mxu0 0.0
        %2204 = vmatpush1.msra.mxu0 0.0
        %2205 = vmatprep.subr.mxu0 0.0
        %2206 = vmatpush1.msra.mxu0 0.0
        %2207 = vmatprep.mubr.f32.mxu0 %v1984
        %2208 = vmatmul.mubr.f32.gmra.mrb[0].mxu0 %v1974
        %v2209 = vpop.f32.mrb[0].mxu0
        %v2210 = vadd.f32 %v2135, %v2209
        %v2211 = vpop.f32.mrb[0].mxu0
        %2212 = vmatprep.mubr.f32.mxu0 %v1987
        %2213 = vmatmul.mubr.f32.gmra.mrb[0].mxu0 %v1980
        %v2214 = vpop.f32.mrb[0].mxu0
        %v2215 = vadd.f32 %v2140, %v2214
        %v2216 = vpop.f32.mrb[0].mxu0
        %2217 = vdwg.mxu0
        %v2219 = vrot.slane %v2210, 1
        %v2221 = vrot.slane %v2210, 2
        %v2223 = vrot.slane %v2210, 3
        %v2225 = vrot.slane %v2210, 4
        %v2227 = vrot.slane %v2210, 5
        %v2229 = vrot.slane %v2210, 6
        %v2231 = vrot.slane %v2210, 7
        %v2234 = vrot.slane %v2215, 1
        %v2236 = vrot.slane %v2215, 2
        %v2238 = vrot.slane %v2215, 3
        %v2240 = vrot.slane %v2215, 4
        %v2242 = vrot.slane %v2215, 5
        %v2244 = vrot.slane %v2215, 6
        %v2246 = vrot.slane %v2215, 7
        %v2248 = vld [vmem:[%s7] sm:$0xff]
        %v2249 = vld [vmem:[%s7 + $0x8] sm:$0xff]
        %v2250 = vld [vmem:[%s7 + $0x10] sm:$0xff]
        %v2251 = vld [vmem:[%s7 + $0x18] sm:$0xff]
        %v2252 = vld [vmem:[%s7 + $0x20] sm:$0xff]
        %v2253 = vld [vmem:[%s7 + $0x28] sm:$0xff]
        %v2254 = vld [vmem:[%s7 + $0x30] sm:$0xff]
        %v2255 = vld [vmem:[%s7 + $0x38] sm:$0xff]
        %v2256 = vld [vmem:[%s7 + $0x40] sm:$0xff]
        %v2257 = vld [vmem:[%s7 + $0x48] sm:$0xff]
        %v2258 = vld [vmem:[%s7 + $0x50] sm:$0xff]
        %v2259 = vld [vmem:[%s7 + $0x58] sm:$0xff]
        %v2260 = vld [vmem:[%s7 + $0x60] sm:$0xff]
        %v2261 = vld [vmem:[%s7 + $0x68] sm:$0xff]
        %v2262 = vld [vmem:[%s7 + $0x70] sm:$0xff]
        %v2263 = vld [vmem:[%s7 + $0x78] sm:$0xff]
        %v2264 = vld [vmem:[%s7 + $0x80] sm:$0xff]
        %v2265 = vld [vmem:[%s7 + $0x88] sm:$0xff]
        %v2266 = vld [vmem:[%s7 + $0x90] sm:$0xff]
        %v2267 = vld [vmem:[%s7 + $0x98] sm:$0xff]
        %v2268 = vld [vmem:[%s7 + $0xa0] sm:$0xff]
        %v2269 = vld [vmem:[%s7 + $0xa8] sm:$0xff]
        %v2270 = vld [vmem:[%s7 + $0xb0] sm:$0xff]
        %v2271 = vld [vmem:[%s7 + $0xb8] sm:$0xff]
        %v2272 = vld [vmem:[%s7 + $0xc0] sm:$0xff]
        %v2273 = vld [vmem:[%s7 + $0xc8] sm:$0xff]
        %v2274 = vld [vmem:[%s7 + $0xd0] sm:$0xff]
        %v2275 = vld [vmem:[%s7 + $0xd8] sm:$0xff]
        %v2276 = vld [vmem:[%s7 + $0xe0] sm:$0xff]
        %v2277 = vld [vmem:[%s7 + $0xe8] sm:$0xff]
        %v2278 = vld [vmem:[%s7 + $0xf0] sm:$0xff]
        %v2279 = vld [vmem:[%s7 + $0xf8] sm:$0xff]
        %v2280 = vld [vmem:[%s7 + $0x100] sm:$0xff]
        %v2281 = vld [vmem:[%s7 + $0x108] sm:$0xff]
        %v2282 = vld [vmem:[%s7 + $0x110] sm:$0xff]
        %v2283 = vld [vmem:[%s7 + $0x118] sm:$0xff]
        %v2284 = vld [vmem:[%s7 + $0x120] sm:$0xff]
        %v2285 = vld [vmem:[%s7 + $0x128] sm:$0xff]
        %v2286 = vld [vmem:[%s7 + $0x130] sm:$0xff]
        %v2287 = vld [vmem:[%s7 + $0x138] sm:$0xff]
        %v2288 = vld [vmem:[%s7 + $0x140] sm:$0xff]
        %v2289 = vld [vmem:[%s7 + $0x148] sm:$0xff]
        %v2290 = vld [vmem:[%s7 + $0x150] sm:$0xff]
        %v2291 = vld [vmem:[%s7 + $0x158] sm:$0xff]
        %v2292 = vld [vmem:[%s7 + $0x160] sm:$0xff]
        %v2293 = vld [vmem:[%s7 + $0x168] sm:$0xff]
        %v2294 = vld [vmem:[%s7 + $0x170] sm:$0xff]
        %v2295 = vld [vmem:[%s7 + $0x178] sm:$0xff]
        %v2296 = vld [vmem:[%s7 + $0x180] sm:$0xff]
        %v2297 = vld [vmem:[%s7 + $0x188] sm:$0xff]
        %v2298 = vld [vmem:[%s7 + $0x190] sm:$0xff]
        %v2299 = vld [vmem:[%s7 + $0x198] sm:$0xff]
        %v2300 = vld [vmem:[%s7 + $0x1a0] sm:$0xff]
        %v2301 = vld [vmem:[%s7 + $0x1a8] sm:$0xff]
        %v2302 = vld [vmem:[%s7 + $0x1b0] sm:$0xff]
        %v2303 = vld [vmem:[%s7 + $0x1b8] sm:$0xff]
        %v2304 = vld [vmem:[%s7 + $0x1c0] sm:$0xff]
        %v2305 = vld [vmem:[%s7 + $0x1c8] sm:$0xff]
        %v2306 = vld [vmem:[%s7 + $0x1d0] sm:$0xff]
        %v2307 = vld [vmem:[%s7 + $0x1d8] sm:$0xff]
        %v2308 = vld [vmem:[%s7 + $0x1e0] sm:$0xff]
        %v2309 = vld [vmem:[%s7 + $0x1e8] sm:$0xff]
        %v2310 = vld [vmem:[%s7 + $0x1f0] sm:$0xff]
        %v2311 = vld [vmem:[%s7 + $0x1f8] sm:$0xff]
        %v2312 = vld [vmem:[%s7 + $0x200] sm:$0xff]
        %v2313 = vld [vmem:[%s7 + $0x208] sm:$0xff]
        %v2314 = vld [vmem:[%s7 + $0x210] sm:$0xff]
        %v2315 = vld [vmem:[%s7 + $0x218] sm:$0xff]
        %v2316 = vld [vmem:[%s7 + $0x220] sm:$0xff]
        %v2317 = vld [vmem:[%s7 + $0x228] sm:$0xff]
        %v2318 = vld [vmem:[%s7 + $0x230] sm:$0xff]
        %v2319 = vld [vmem:[%s7 + $0x238] sm:$0xff]
        %v2320 = vld [vmem:[%s7 + $0x240] sm:$0xff]
        %v2321 = vld [vmem:[%s7 + $0x248] sm:$0xff]
        %v2322 = vld [vmem:[%s7 + $0x250] sm:$0xff]
        %v2323 = vld [vmem:[%s7 + $0x258] sm:$0xff]
        %v2324 = vld [vmem:[%s7 + $0x260] sm:$0xff]
        %v2325 = vld [vmem:[%s7 + $0x268] sm:$0xff]
        %v2326 = vld [vmem:[%s7 + $0x270] sm:$0xff]
        %v2327 = vld [vmem:[%s7 + $0x278] sm:$0xff]
        %v2328 = vld [vmem:[%s7 + $0x280] sm:$0xff]
        %v2329 = vld [vmem:[%s7 + $0x288] sm:$0xff]
        %v2330 = vld [vmem:[%s7 + $0x290] sm:$0xff]
        %v2331 = vld [vmem:[%s7 + $0x298] sm:$0xff]
        %v2332 = vld [vmem:[%s7 + $0x2a0] sm:$0xff]
        %v2333 = vld [vmem:[%s7 + $0x2a8] sm:$0xff]
        %v2334 = vld [vmem:[%s7 + $0x2b0] sm:$0xff]
        %v2335 = vld [vmem:[%s7 + $0x2b8] sm:$0xff]
        %v2336 = vld [vmem:[%s7 + $0x2c0] sm:$0xff]
        %v2337 = vld [vmem:[%s7 + $0x2c8] sm:$0xff]
        %v2338 = vld [vmem:[%s7 + $0x2d0] sm:$0xff]
        %v2339 = vld [vmem:[%s7 + $0x2d8] sm:$0xff]
        %v2340 = vld [vmem:[%s7 + $0x2e0] sm:$0xff]
        %v2341 = vld [vmem:[%s7 + $0x2e8] sm:$0xff]
        %v2342 = vld [vmem:[%s7 + $0x2f0] sm:$0xff]
        %v2343 = vld [vmem:[%s7 + $0x2f8] sm:$0xff]
        %v2344 = vld [vmem:[%s7 + $0x300] sm:$0xff]
        %v2345 = vld [vmem:[%s7 + $0x308] sm:$0xff]
        %v2346 = vld [vmem:[%s7 + $0x310] sm:$0xff]
        %v2347 = vld [vmem:[%s7 + $0x318] sm:$0xff]
        %v2348 = vld [vmem:[%s7 + $0x320] sm:$0xff]
        %v2349 = vld [vmem:[%s7 + $0x328] sm:$0xff]
        %v2350 = vld [vmem:[%s7 + $0x330] sm:$0xff]
        %v2351 = vld [vmem:[%s7 + $0x338] sm:$0xff]
        %v2352 = vld [vmem:[%s7 + $0x340] sm:$0xff]
        %v2353 = vld [vmem:[%s7 + $0x348] sm:$0xff]
        %v2354 = vld [vmem:[%s7 + $0x350] sm:$0xff]
        %v2355 = vld [vmem:[%s7 + $0x358] sm:$0xff]
        %v2356 = vld [vmem:[%s7 + $0x360] sm:$0xff]
        %v2357 = vld [vmem:[%s7 + $0x368] sm:$0xff]
        %v2358 = vld [vmem:[%s7 + $0x370] sm:$0xff]
        %v2359 = vld [vmem:[%s7 + $0x378] sm:$0xff]
        %v2360 = vld [vmem:[%s7 + $0x380] sm:$0xff]
        %v2361 = vld [vmem:[%s7 + $0x388] sm:$0xff]
        %v2362 = vld [vmem:[%s7 + $0x390] sm:$0xff]
        %v2363 = vld [vmem:[%s7 + $0x398] sm:$0xff]
        %v2364 = vld [vmem:[%s7 + $0x3a0] sm:$0xff]
        %v2365 = vld [vmem:[%s7 + $0x3a8] sm:$0xff]
        %v2366 = vld [vmem:[%s7 + $0x3b0] sm:$0xff]
        %v2367 = vld [vmem:[%s7 + $0x3b8] sm:$0xff]
        %v2368 = vld [vmem:[%s7 + $0x3c0] sm:$0xff]
        %v2369 = vld [vmem:[%s7 + $0x3c8] sm:$0xff]
        %v2370 = vld [vmem:[%s7 + $0x3d0] sm:$0xff]
        %v2371 = vld [vmem:[%s7 + $0x3d8] sm:$0xff]
        %v2372 = vld [vmem:[%s7 + $0x3e0] sm:$0xff]
        %v2373 = vld [vmem:[%s7 + $0x3e8] sm:$0xff]
        %v2374 = vld [vmem:[%s7 + $0x3f0] sm:$0xff]
        %v2375 = vld [vmem:[%s7 + $0x3f8] sm:$0xff]
        %v2376 = vld [vmem:[%s7 + $0x400] sm:$0xff]
        %v2377 = vld [vmem:[%s7 + $0x408] sm:$0xff]
        %v2378 = vld [vmem:[%s7 + $0x410] sm:$0xff]
        %v2379 = vld [vmem:[%s7 + $0x418] sm:$0xff]
        %v2380 = vld [vmem:[%s7 + $0x420] sm:$0xff]
        %v2381 = vld [vmem:[%s7 + $0x428] sm:$0xff]
        %v2382 = vld [vmem:[%s7 + $0x430] sm:$0xff]
        %v2383 = vld [vmem:[%s7 + $0x438] sm:$0xff]
        %v2384 = vld [vmem:[%s7 + $0x440] sm:$0xff]
        %v2385 = vld [vmem:[%s7 + $0x448] sm:$0xff]
        %v2386 = vld [vmem:[%s7 + $0x450] sm:$0xff]
        %v2387 = vld [vmem:[%s7 + $0x458] sm:$0xff]
        %v2388 = vld [vmem:[%s7 + $0x460] sm:$0xff]
        %v2389 = vld [vmem:[%s7 + $0x468] sm:$0xff]
        %v2390 = vld [vmem:[%s7 + $0x470] sm:$0xff]
        %v2391 = vld [vmem:[%s7 + $0x478] sm:$0xff]
        %v2392 = vld [vmem:[%s7 + $0x480] sm:$0xff]
        %v2393 = vld [vmem:[%s7 + $0x488] sm:$0xff]
        %v2394 = vld [vmem:[%s7 + $0x490] sm:$0xff]
        %v2395 = vld [vmem:[%s7 + $0x498] sm:$0xff]
        %v2396 = vld [vmem:[%s7 + $0x4a0] sm:$0xff]
        %v2397 = vld [vmem:[%s7 + $0x4a8] sm:$0xff]
        %v2398 = vld [vmem:[%s7 + $0x4b0] sm:$0xff]
        %v2399 = vld [vmem:[%s7 + $0x4b8] sm:$0xff]
        %v2400 = vld [vmem:[%s7 + $0x4c0] sm:$0xff]
        %v2401 = vld [vmem:[%s7 + $0x4c8] sm:$0xff]
        %v2402 = vld [vmem:[%s7 + $0x4d0] sm:$0xff]
        %v2403 = vld [vmem:[%s7 + $0x4d8] sm:$0xff]
        %v2404 = vld [vmem:[%s7 + $0x4e0] sm:$0xff]
        %v2405 = vld [vmem:[%s7 + $0x4e8] sm:$0xff]
        %v2406 = vld [vmem:[%s7 + $0x4f0] sm:$0xff]
        %v2407 = vld [vmem:[%s7 + $0x4f8] sm:$0xff]
        %v2408 = vld [vmem:[%s7 + $0x500] sm:$0xff]
        %v2409 = vld [vmem:[%s7 + $0x508] sm:$0xff]
        %v2410 = vld [vmem:[%s7 + $0x510] sm:$0xff]
        %v2411 = vld [vmem:[%s7 + $0x518] sm:$0xff]
        %v2412 = vld [vmem:[%s7 + $0x520] sm:$0xff]
        %v2413 = vld [vmem:[%s7 + $0x528] sm:$0xff]
        %v2414 = vld [vmem:[%s7 + $0x530] sm:$0xff]
        %v2415 = vld [vmem:[%s7 + $0x538] sm:$0xff]
        %v2416 = vld [vmem:[%s7 + $0x540] sm:$0xff]
        %v2417 = vld [vmem:[%s7 + $0x548] sm:$0xff]
        %v2418 = vld [vmem:[%s7 + $0x550] sm:$0xff]
        %v2419 = vld [vmem:[%s7 + $0x558] sm:$0xff]
        %v2420 = vld [vmem:[%s7 + $0x560] sm:$0xff]
        %v2421 = vld [vmem:[%s7 + $0x568] sm:$0xff]
        %v2422 = vld [vmem:[%s7 + $0x570] sm:$0xff]
        %v2423 = vld [vmem:[%s7 + $0x578] sm:$0xff]
        %v2424 = vld [vmem:[%s7 + $0x580] sm:$0xff]
        %v2425 = vld [vmem:[%s7 + $0x588] sm:$0xff]
        %v2426 = vld [vmem:[%s7 + $0x590] sm:$0xff]
        %v2427 = vld [vmem:[%s7 + $0x598] sm:$0xff]
        %v2428 = vld [vmem:[%s7 + $0x5a0] sm:$0xff]
        %v2429 = vld [vmem:[%s7 + $0x5a8] sm:$0xff]
        %v2430 = vld [vmem:[%s7 + $0x5b0] sm:$0xff]
        %v2431 = vld [vmem:[%s7 + $0x5b8] sm:$0xff]
        %v2432 = vld [vmem:[%s7 + $0x5c0] sm:$0xff]
        %v2433 = vld [vmem:[%s7 + $0x5c8] sm:$0xff]
        %v2434 = vld [vmem:[%s7 + $0x5d0] sm:$0xff]
        %v2435 = vld [vmem:[%s7 + $0x5d8] sm:$0xff]
        %v2436 = vld [vmem:[%s7 + $0x5e0] sm:$0xff]
        %v2437 = vld [vmem:[%s7 + $0x5e8] sm:$0xff]
        %v2438 = vld [vmem:[%s7 + $0x5f0] sm:$0xff]
        %v2439 = vld [vmem:[%s7 + $0x5f8] sm:$0xff]
        %v2440 = vld [vmem:[%s7 + $0x600] sm:$0xff]
        %v2441 = vld [vmem:[%s7 + $0x608] sm:$0xff]
        %v2442 = vld [vmem:[%s7 + $0x610] sm:$0xff]
        %v2443 = vld [vmem:[%s7 + $0x618] sm:$0xff]
        %v2444 = vld [vmem:[%s7 + $0x620] sm:$0xff]
        %v2445 = vld [vmem:[%s7 + $0x628] sm:$0xff]
        %v2446 = vld [vmem:[%s7 + $0x630] sm:$0xff]
        %v2447 = vld [vmem:[%s7 + $0x638] sm:$0xff]
        %v2448 = vld [vmem:[%s7 + $0x640] sm:$0xff]
        %v2449 = vld [vmem:[%s7 + $0x648] sm:$0xff]
        %v2450 = vld [vmem:[%s7 + $0x650] sm:$0xff]
        %v2451 = vld [vmem:[%s7 + $0x658] sm:$0xff]
        %v2452 = vld [vmem:[%s7 + $0x660] sm:$0xff]
        %v2453 = vld [vmem:[%s7 + $0x668] sm:$0xff]
        %v2454 = vld [vmem:[%s7 + $0x670] sm:$0xff]
        %v2455 = vld [vmem:[%s7 + $0x678] sm:$0xff]
        %v2456 = vld [vmem:[%s7 + $0x680] sm:$0xff]
        %v2457 = vld [vmem:[%s7 + $0x688] sm:$0xff]
        %v2458 = vld [vmem:[%s7 + $0x690] sm:$0xff]
        %v2459 = vld [vmem:[%s7 + $0x698] sm:$0xff]
        %v2460 = vld [vmem:[%s7 + $0x6a0] sm:$0xff]
        %v2461 = vld [vmem:[%s7 + $0x6a8] sm:$0xff]
        %v2462 = vld [vmem:[%s7 + $0x6b0] sm:$0xff]
        %v2463 = vld [vmem:[%s7 + $0x6b8] sm:$0xff]
        %v2464 = vld [vmem:[%s7 + $0x6c0] sm:$0xff]
        %v2465 = vld [vmem:[%s7 + $0x6c8] sm:$0xff]
        %v2466 = vld [vmem:[%s7 + $0x6d0] sm:$0xff]
        %v2467 = vld [vmem:[%s7 + $0x6d8] sm:$0xff]
        %v2468 = vld [vmem:[%s7 + $0x6e0] sm:$0xff]
        %v2469 = vld [vmem:[%s7 + $0x6e8] sm:$0xff]
        %v2470 = vld [vmem:[%s7 + $0x6f0] sm:$0xff]
        %v2471 = vld [vmem:[%s7 + $0x6f8] sm:$0xff]
        %v2472 = vld [vmem:[%s7 + $0x700] sm:$0xff]
        %v2473 = vld [vmem:[%s7 + $0x708] sm:$0xff]
        %v2474 = vld [vmem:[%s7 + $0x710] sm:$0xff]
        %v2475 = vld [vmem:[%s7 + $0x718] sm:$0xff]
        %v2476 = vld [vmem:[%s7 + $0x720] sm:$0xff]
        %v2477 = vld [vmem:[%s7 + $0x728] sm:$0xff]
        %v2478 = vld [vmem:[%s7 + $0x730] sm:$0xff]
        %v2479 = vld [vmem:[%s7 + $0x738] sm:$0xff]
        %v2480 = vld [vmem:[%s7 + $0x740] sm:$0xff]
        %v2481 = vld [vmem:[%s7 + $0x748] sm:$0xff]
        %v2482 = vld [vmem:[%s7 + $0x750] sm:$0xff]
        %v2483 = vld [vmem:[%s7 + $0x758] sm:$0xff]
        %v2484 = vld [vmem:[%s7 + $0x760] sm:$0xff]
        %v2485 = vld [vmem:[%s7 + $0x768] sm:$0xff]
        %v2486 = vld [vmem:[%s7 + $0x770] sm:$0xff]
        %v2487 = vld [vmem:[%s7 + $0x778] sm:$0xff]
        %v2488 = vld [vmem:[%s7 + $0x780] sm:$0xff]
        %v2489 = vld [vmem:[%s7 + $0x788] sm:$0xff]
        %v2490 = vld [vmem:[%s7 + $0x790] sm:$0xff]
        %v2491 = vld [vmem:[%s7 + $0x798] sm:$0xff]
        %v2492 = vld [vmem:[%s7 + $0x7a0] sm:$0xff]
        %v2493 = vld [vmem:[%s7 + $0x7a8] sm:$0xff]
        %v2494 = vld [vmem:[%s7 + $0x7b0] sm:$0xff]
        %v2495 = vld [vmem:[%s7 + $0x7b8] sm:$0xff]
        %v2496 = vld [vmem:[%s7 + $0x7c0] sm:$0xff]
        %v2497 = vld [vmem:[%s7 + $0x7c8] sm:$0xff]
        %v2498 = vld [vmem:[%s7 + $0x7d0] sm:$0xff]
        %v2499 = vld [vmem:[%s7 + $0x7d8] sm:$0xff]
        %v2500 = vld [vmem:[%s7 + $0x7e0] sm:$0xff]
        %v2501 = vld [vmem:[%s7 + $0x7e8] sm:$0xff]
        %v2502 = vld [vmem:[%s7 + $0x7f0] sm:$0xff]
        %v2503 = vld [vmem:[%s7 + $0x7f8] sm:$0xff]
        %v2504 = vld [vmem:[%s8] sm:$0x1]
        %2505 = vmatprep.subr.mxu0 0.0
        %2506 = vmatpush1.msra.mxu0 %v2248
        %2507 = vmatprep.subr.mxu0 0.0
        %2508 = vmatpush1.msra.mxu0 %v2249
        %2509 = vmatprep.subr.mxu0 0.0
        %2510 = vmatpush1.msra.mxu0 %v2250
        %2511 = vmatprep.subr.mxu0 0.0
        %2512 = vmatpush1.msra.mxu0 %v2251
        %2513 = vmatprep.subr.mxu0 0.0
        %2514 = vmatpush1.msra.mxu0 %v2252
        %2515 = vmatprep.subr.mxu0 0.0
        %2516 = vmatpush1.msra.mxu0 %v2253
        %2517 = vmatprep.subr.mxu0 0.0
        %2518 = vmatpush1.msra.mxu0 %v2254
        %2519 = vmatprep.subr.mxu0 0.0
        %2520 = vmatpush1.msra.mxu0 %v2255
        %2521 = vmatprep.subr.mxu0 0.0
        %2522 = vmatpush1.msra.mxu0 %v2256
        %2523 = vmatprep.subr.mxu0 0.0
        %2524 = vmatpush1.msra.mxu0 %v2257
        %2525 = vmatprep.subr.mxu0 0.0
        %2526 = vmatpush1.msra.mxu0 %v2258
        %2527 = vmatprep.subr.mxu0 0.0
        %2528 = vmatpush1.msra.mxu0 %v2259
        %2529 = vmatprep.subr.mxu0 0.0
        %2530 = vmatpush1.msra.mxu0 %v2260
        %2531 = vmatprep.subr.mxu0 0.0
        %2532 = vmatpush1.msra.mxu0 %v2261
        %2533 = vmatprep.subr.mxu0 0.0
        %2534 = vmatpush1.msra.mxu0 %v2262
        %2535 = vmatprep.subr.mxu0 0.0
        %2536 = vmatpush1.msra.mxu0 %v2263
        %2537 = vmatprep.subr.mxu0 0.0
        %2538 = vmatpush1.msra.mxu0 %v2264
        %2539 = vmatprep.subr.mxu0 0.0
        %2540 = vmatpush1.msra.mxu0 %v2265
        %2541 = vmatprep.subr.mxu0 0.0
        %2542 = vmatpush1.msra.mxu0 %v2266
        %2543 = vmatprep.subr.mxu0 0.0
        %2544 = vmatpush1.msra.mxu0 %v2267
        %2545 = vmatprep.subr.mxu0 0.0
        %2546 = vmatpush1.msra.mxu0 %v2268
        %2547 = vmatprep.subr.mxu0 0.0
        %2548 = vmatpush1.msra.mxu0 %v2269
        %2549 = vmatprep.subr.mxu0 0.0
        %2550 = vmatpush1.msra.mxu0 %v2270
        %2551 = vmatprep.subr.mxu0 0.0
        %2552 = vmatpush1.msra.mxu0 %v2271
        %2553 = vmatprep.subr.mxu0 0.0
        %2554 = vmatpush1.msra.mxu0 %v2272
        %2555 = vmatprep.subr.mxu0 0.0
        %2556 = vmatpush1.msra.mxu0 %v2273
        %2557 = vmatprep.subr.mxu0 0.0
        %2558 = vmatpush1.msra.mxu0 %v2274
        %2559 = vmatprep.subr.mxu0 0.0
        %2560 = vmatpush1.msra.mxu0 %v2275
        %2561 = vmatprep.subr.mxu0 0.0
        %2562 = vmatpush1.msra.mxu0 %v2276
        %2563 = vmatprep.subr.mxu0 0.0
        %2564 = vmatpush1.msra.mxu0 %v2277
        %2565 = vmatprep.subr.mxu0 0.0
        %2566 = vmatpush1.msra.mxu0 %v2278
        %2567 = vmatprep.subr.mxu0 0.0
        %2568 = vmatpush1.msra.mxu0 %v2279
        %2569 = vmatprep.mubr.f32.mxu0 %v2219
        %2570 = vmatmul.mubr.f32.gmra.mrb[0].mxu0 %v2210
        %v2571 = vpop.f32.mrb[0].mxu0
        %v2572 = vadd.f32 %v2504, %v2571
        %v2573 = vpop.f32.mrb[0].mxu0
        %2574 = vdwg.mxu0
        %2575 = vmatprep.subr.mxu0 0.0
        %2576 = vmatpush1.msra.mxu0 %v2280
        %2577 = vmatprep.subr.mxu0 0.0
        %2578 = vmatpush1.msra.mxu0 %v2281
        %2579 = vmatprep.subr.mxu0 0.0
        %2580 = vmatpush1.msra.mxu0 %v2282
        %2581 = vmatprep.subr.mxu0 0.0
        %2582 = vmatpush1.msra.mxu0 %v2283
        %2583 = vmatprep.subr.mxu0 0.0
        %2584 = vmatpush1.msra.mxu0 %v2284
        %2585 = vmatprep.subr.mxu0 0.0
        %2586 = vmatpush1.msra.mxu0 %v2285
        %2587 = vmatprep.subr.mxu0 0.0
        %2588 = vmatpush1.msra.mxu0 %v2286
        %2589 = vmatprep.subr.mxu0 0.0
        %2590 = vmatpush1.msra.mxu0 %v2287
        %2591 = vmatprep.subr.mxu0 0.0
        %2592 = vmatpush1.msra.mxu0 %v2288
        %2593 = vmatprep.subr.mxu0 0.0
        %2594 = vmatpush1.msra.mxu0 %v2289
        %2595 = vmatprep.subr.mxu0 0.0
        %2596 = vmatpush1.msra.mxu0 %v2290
        %2597 = vmatprep.subr.mxu0 0.0
        %2598 = vmatpush1.msra.mxu0 %v2291
        %2599 = vmatprep.subr.mxu0 0.0
        %2600 = vmatpush1.msra.mxu0 %v2292
        %2601 = vmatprep.subr.mxu0 0.0
        %2602 = vmatpush1.msra.mxu0 %v2293
        %2603 = vmatprep.subr.mxu0 0.0
        %2604 = vmatpush1.msra.mxu0 %v2294
        %2605 = vmatprep.subr.mxu0 0.0
        %2606 = vmatpush1.msra.mxu0 %v2295
        %2607 = vmatprep.subr.mxu0 0.0
        %2608 = vmatpush1.msra.mxu0 %v2296
        %2609 = vmatprep.subr.mxu0 0.0
        %2610 = vmatpush1.msra.mxu0 %v2297
        %2611 = vmatprep.subr.mxu0 0.0
        %2612 = vmatpush1.msra.mxu0 %v2298
        %2613 = vmatprep.subr.mxu0 0.0
        %2614 = vmatpush1.msra.mxu0 %v2299
        %2615 = vmatprep.subr.mxu0 0.0
        %2616 = vmatpush1.msra.mxu0 %v2300
        %2617 = vmatprep.subr.mxu0 0.0
        %2618 = vmatpush1.msra.mxu0 %v2301
        %2619 = vmatprep.subr.mxu0 0.0
        %2620 = vmatpush1.msra.mxu0 %v2302
        %2621 = vmatprep.subr.mxu0 0.0
        %2622 = vmatpush1.msra.mxu0 %v2303
        %2623 = vmatprep.subr.mxu0 0.0
        %2624 = vmatpush1.msra.mxu0 %v2304
        %2625 = vmatprep.subr.mxu0 0.0
        %2626 = vmatpush1.msra.mxu0 %v2305
        %2627 = vmatprep.subr.mxu0 0.0
        %2628 = vmatpush1.msra.mxu0 %v2306
        %2629 = vmatprep.subr.mxu0 0.0
        %2630 = vmatpush1.msra.mxu0 %v2307
        %2631 = vmatprep.subr.mxu0 0.0
        %2632 = vmatpush1.msra.mxu0 %v2308
        %2633 = vmatprep.subr.mxu0 0.0
        %2634 = vmatpush1.msra.mxu0 %v2309
        %2635 = vmatprep.subr.mxu0 0.0
        %2636 = vmatpush1.msra.mxu0 %v2310
        %2637 = vmatprep.subr.mxu0 0.0
        %2638 = vmatpush1.msra.mxu0 %v2311
        %2639 = vmatprep.mubr.f32.mxu0 %v2223
        %2640 = vmatmul.mubr.f32.gmra.mrb[0].mxu0 %v2221
        %v2641 = vpop.f32.mrb[0].mxu0
        %v2642 = vadd.f32 %v2572, %v2641
        %v2643 = vpop.f32.mrb[0].mxu0
        %2644 = vdwg.mxu0
        %2645 = vmatprep.subr.mxu0 0.0
        %2646 = vmatpush1.msra.mxu0 %v2312
        %2647 = vmatprep.subr.mxu0 0.0
        %2648 = vmatpush1.msra.mxu0 %v2313
        %2649 = vmatprep.subr.mxu0 0.0
        %2650 = vmatpush1.msra.mxu0 %v2314
        %2651 = vmatprep.subr.mxu0 0.0
        %2652 = vmatpush1.msra.mxu0 %v2315
        %2653 = vmatprep.subr.mxu0 0.0
        %2654 = vmatpush1.msra.mxu0 %v2316
        %2655 = vmatprep.subr.mxu0 0.0
        %2656 = vmatpush1.msra.mxu0 %v2317
        %2657 = vmatprep.subr.mxu0 0.0
        %2658 = vmatpush1.msra.mxu0 %v2318
        %2659 = vmatprep.subr.mxu0 0.0
        %2660 = vmatpush1.msra.mxu0 %v2319
        %2661 = vmatprep.subr.mxu0 0.0
        %2662 = vmatpush1.msra.mxu0 %v2320
        %2663 = vmatprep.subr.mxu0 0.0
        %2664 = vmatpush1.msra.mxu0 %v2321
        %2665 = vmatprep.subr.mxu0 0.0
        %2666 = vmatpush1.msra.mxu0 %v2322
        %2667 = vmatprep.subr.mxu0 0.0
        %2668 = vmatpush1.msra.mxu0 %v2323
        %2669 = vmatprep.subr.mxu0 0.0
        %2670 = vmatpush1.msra.mxu0 %v2324
        %2671 = vmatprep.subr.mxu0 0.0
        %2672 = vmatpush1.msra.mxu0 %v2325
        %2673 = vmatprep.subr.mxu0 0.0
        %2674 = vmatpush1.msra.mxu0 %v2326
        %2675 = vmatprep.subr.mxu0 0.0
        %2676 = vmatpush1.msra.mxu0 %v2327
        %2677 = vmatprep.subr.mxu0 0.0
        %2678 = vmatpush1.msra.mxu0 %v2328
        %2679 = vmatprep.subr.mxu0 0.0
        %2680 = vmatpush1.msra.mxu0 %v2329
        %2681 = vmatprep.subr.mxu0 0.0
        %2682 = vmatpush1.msra.mxu0 %v2330
        %2683 = vmatprep.subr.mxu0 0.0
        %2684 = vmatpush1.msra.mxu0 %v2331
        %2685 = vmatprep.subr.mxu0 0.0
        %2686 = vmatpush1.msra.mxu0 %v2332
        %2687 = vmatprep.subr.mxu0 0.0
        %2688 = vmatpush1.msra.mxu0 %v2333
        %2689 = vmatprep.subr.mxu0 0.0
        %2690 = vmatpush1.msra.mxu0 %v2334
        %2691 = vmatprep.subr.mxu0 0.0
        %2692 = vmatpush1.msra.mxu0 %v2335
        %2693 = vmatprep.subr.mxu0 0.0
        %2694 = vmatpush1.msra.mxu0 %v2336
        %2695 = vmatprep.subr.mxu0 0.0
        %2696 = vmatpush1.msra.mxu0 %v2337
        %2697 = vmatprep.subr.mxu0 0.0
        %2698 = vmatpush1.msra.mxu0 %v2338
        %2699 = vmatprep.subr.mxu0 0.0
        %2700 = vmatpush1.msra.mxu0 %v2339
        %2701 = vmatprep.subr.mxu0 0.0
        %2702 = vmatpush1.msra.mxu0 %v2340
        %2703 = vmatprep.subr.mxu0 0.0
        %2704 = vmatpush1.msra.mxu0 %v2341
        %2705 = vmatprep.subr.mxu0 0.0
        %2706 = vmatpush1.msra.mxu0 %v2342
        %2707 = vmatprep.subr.mxu0 0.0
        %2708 = vmatpush1.msra.mxu0 %v2343
        %2709 = vmatprep.mubr.f32.mxu0 %v2227
        %2710 = vmatmul.mubr.f32.gmra.mrb[0].mxu0 %v2225
        %v2711 = vpop.f32.mrb[0].mxu0
        %v2712 = vadd.f32 %v2642, %v2711
        %v2713 = vpop.f32.mrb[0].mxu0
        %2714 = vdwg.mxu0
        %2715 = vmatprep.subr.mxu0 0.0
        %2716 = vmatpush1.msra.mxu0 %v2344
        %2717 = vmatprep.subr.mxu0 0.0
        %2718 = vmatpush1.msra.mxu0 %v2345
        %2719 = vmatprep.subr.mxu0 0.0
        %2720 = vmatpush1.msra.mxu0 %v2346
        %2721 = vmatprep.subr.mxu0 0.0
        %2722 = vmatpush1.msra.mxu0 %v2347
        %2723 = vmatprep.subr.mxu0 0.0
        %2724 = vmatpush1.msra.mxu0 %v2348
        %2725 = vmatprep.subr.mxu0 0.0
        %2726 = vmatpush1.msra.mxu0 %v2349
        %2727 = vmatprep.subr.mxu0 0.0
        %2728 = vmatpush1.msra.mxu0 %v2350
        %2729 = vmatprep.subr.mxu0 0.0
        %2730 = vmatpush1.msra.mxu0 %v2351
        %2731 = vmatprep.subr.mxu0 0.0
        %2732 = vmatpush1.msra.mxu0 %v2352
        %2733 = vmatprep.subr.mxu0 0.0
        %2734 = vmatpush1.msra.mxu0 %v2353
        %2735 = vmatprep.subr.mxu0 0.0
        %2736 = vmatpush1.msra.mxu0 %v2354
        %2737 = vmatprep.subr.mxu0 0.0
        %2738 = vmatpush1.msra.mxu0 %v2355
        %2739 = vmatprep.subr.mxu0 0.0
        %2740 = vmatpush1.msra.mxu0 %v2356
        %2741 = vmatprep.subr.mxu0 0.0
        %2742 = vmatpush1.msra.mxu0 %v2357
        %2743 = vmatprep.subr.mxu0 0.0
        %2744 = vmatpush1.msra.mxu0 %v2358
        %2745 = vmatprep.subr.mxu0 0.0
        %2746 = vmatpush1.msra.mxu0 %v2359
        %2747 = vmatprep.subr.mxu0 0.0
        %2748 = vmatpush1.msra.mxu0 %v2360
        %2749 = vmatprep.subr.mxu0 0.0
        %2750 = vmatpush1.msra.mxu0 %v2361
        %2751 = vmatprep.subr.mxu0 0.0
        %2752 = vmatpush1.msra.mxu0 %v2362
        %2753 = vmatprep.subr.mxu0 0.0
        %2754 = vmatpush1.msra.mxu0 %v2363
        %2755 = vmatprep.subr.mxu0 0.0
        %2756 = vmatpush1.msra.mxu0 %v2364
        %2757 = vmatprep.subr.mxu0 0.0
        %2758 = vmatpush1.msra.mxu0 %v2365
        %2759 = vmatprep.subr.mxu0 0.0
        %2760 = vmatpush1.msra.mxu0 %v2366
        %2761 = vmatprep.subr.mxu0 0.0
        %2762 = vmatpush1.msra.mxu0 %v2367
        %2763 = vmatprep.subr.mxu0 0.0
        %2764 = vmatpush1.msra.mxu0 %v2368
        %2765 = vmatprep.subr.mxu0 0.0
        %2766 = vmatpush1.msra.mxu0 %v2369
        %2767 = vmatprep.subr.mxu0 0.0
        %2768 = vmatpush1.msra.mxu0 %v2370
        %2769 = vmatprep.subr.mxu0 0.0
        %2770 = vmatpush1.msra.mxu0 %v2371
        %2771 = vmatprep.subr.mxu0 0.0
        %2772 = vmatpush1.msra.mxu0 %v2372
        %2773 = vmatprep.subr.mxu0 0.0
        %2774 = vmatpush1.msra.mxu0 %v2373
        %2775 = vmatprep.subr.mxu0 0.0
        %2776 = vmatpush1.msra.mxu0 %v2374
        %2777 = vmatprep.subr.mxu0 0.0
        %2778 = vmatpush1.msra.mxu0 %v2375
        %2779 = vmatprep.mubr.f32.mxu0 %v2231
        %2780 = vmatmul.mubr.f32.gmra.mrb[0].mxu0 %v2229
        %v2781 = vpop.f32.mrb[0].mxu0
        %v2782 = vadd.f32 %v2712, %v2781
        %v2783 = vpop.f32.mrb[0].mxu0
        %2784 = vdwg.mxu0
        %2785 = vmatprep.subr.mxu0 0.0
        %2786 = vmatpush1.msra.mxu0 %v2376
        %2787 = vmatprep.subr.mxu0 0.0
        %2788 = vmatpush1.msra.mxu0 %v2377
        %2789 = vmatprep.subr.mxu0 0.0
        %2790 = vmatpush1.msra.mxu0 %v2378
        %2791 = vmatprep.subr.mxu0 0.0
        %2792 = vmatpush1.msra.mxu0 %v2379
        %2793 = vmatprep.subr.mxu0 0.0
        %2794 = vmatpush1.msra.mxu0 %v2380
        %2795 = vmatprep.subr.mxu0 0.0
        %2796 = vmatpush1.msra.mxu0 %v2381
        %2797 = vmatprep.subr.mxu0 0.0
        %2798 = vmatpush1.msra.mxu0 %v2382
        %2799 = vmatprep.subr.mxu0 0.0
        %2800 = vmatpush1.msra.mxu0 %v2383
        %2801 = vmatprep.subr.mxu0 0.0
        %2802 = vmatpush1.msra.mxu0 %v2384
        %2803 = vmatprep.subr.mxu0 0.0
        %2804 = vmatpush1.msra.mxu0 %v2385
        %2805 = vmatprep.subr.mxu0 0.0
        %2806 = vmatpush1.msra.mxu0 %v2386
        %2807 = vmatprep.subr.mxu0 0.0
        %2808 = vmatpush1.msra.mxu0 %v2387
        %2809 = vmatprep.subr.mxu0 0.0
        %2810 = vmatpush1.msra.mxu0 %v2388
        %2811 = vmatprep.subr.mxu0 0.0
        %2812 = vmatpush1.msra.mxu0 %v2389
        %2813 = vmatprep.subr.mxu0 0.0
        %2814 = vmatpush1.msra.mxu0 %v2390
        %2815 = vmatprep.subr.mxu0 0.0
        %2816 = vmatpush1.msra.mxu0 %v2391
        %2817 = vmatprep.subr.mxu0 0.0
        %2818 = vmatpush1.msra.mxu0 %v2392
        %2819 = vmatprep.subr.mxu0 0.0
        %2820 = vmatpush1.msra.mxu0 %v2393
        %2821 = vmatprep.subr.mxu0 0.0
        %2822 = vmatpush1.msra.mxu0 %v2394
        %2823 = vmatprep.subr.mxu0 0.0
        %2824 = vmatpush1.msra.mxu0 %v2395
        %2825 = vmatprep.subr.mxu0 0.0
        %2826 = vmatpush1.msra.mxu0 %v2396
        %2827 = vmatprep.subr.mxu0 0.0
        %2828 = vmatpush1.msra.mxu0 %v2397
        %2829 = vmatprep.subr.mxu0 0.0
        %2830 = vmatpush1.msra.mxu0 %v2398
        %2831 = vmatprep.subr.mxu0 0.0
        %2832 = vmatpush1.msra.mxu0 %v2399
        %2833 = vmatprep.subr.mxu0 0.0
        %2834 = vmatpush1.msra.mxu0 %v2400
        %2835 = vmatprep.subr.mxu0 0.0
        %2836 = vmatpush1.msra.mxu0 %v2401
        %2837 = vmatprep.subr.mxu0 0.0
        %2838 = vmatpush1.msra.mxu0 %v2402
        %2839 = vmatprep.subr.mxu0 0.0
        %2840 = vmatpush1.msra.mxu0 %v2403
        %2841 = vmatprep.subr.mxu0 0.0
        %2842 = vmatpush1.msra.mxu0 %v2404
        %2843 = vmatprep.subr.mxu0 0.0
        %2844 = vmatpush1.msra.mxu0 %v2405
        %2845 = vmatprep.subr.mxu0 0.0
        %2846 = vmatpush1.msra.mxu0 %v2406
        %2847 = vmatprep.subr.mxu0 0.0
        %2848 = vmatpush1.msra.mxu0 %v2407
        %2849 = vmatprep.mubr.f32.mxu0 %v2234
        %2850 = vmatmul.mubr.f32.gmra.mrb[0].mxu0 %v2215
        %v2851 = vpop.f32.mrb[0].mxu0
        %v2852 = vadd.f32 %v2782, %v2851
        %v2853 = vpop.f32.mrb[0].mxu0
        %2854 = vdwg.mxu0
        %2855 = vmatprep.subr.mxu0 0.0
        %2856 = vmatpush1.msra.mxu0 %v2408
        %2857 = vmatprep.subr.mxu0 0.0
        %2858 = vmatpush1.msra.mxu0 %v2409
        %2859 = vmatprep.subr.mxu0 0.0
        %2860 = vmatpush1.msra.mxu0 %v2410
        %2861 = vmatprep.subr.mxu0 0.0
        %2862 = vmatpush1.msra.mxu0 %v2411
        %2863 = vmatprep.subr.mxu0 0.0
        %2864 = vmatpush1.msra.mxu0 %v2412
        %2865 = vmatprep.subr.mxu0 0.0
        %2866 = vmatpush1.msra.mxu0 %v2413
        %2867 = vmatprep.subr.mxu0 0.0
        %2868 = vmatpush1.msra.mxu0 %v2414
        %2869 = vmatprep.subr.mxu0 0.0
        %2870 = vmatpush1.msra.mxu0 %v2415
        %2871 = vmatprep.subr.mxu0 0.0
        %2872 = vmatpush1.msra.mxu0 %v2416
        %2873 = vmatprep.subr.mxu0 0.0
        %2874 = vmatpush1.msra.mxu0 %v2417
        %2875 = vmatprep.subr.mxu0 0.0
        %2876 = vmatpush1.msra.mxu0 %v2418
        %2877 = vmatprep.subr.mxu0 0.0
        %2878 = vmatpush1.msra.mxu0 %v2419
        %2879 = vmatprep.subr.mxu0 0.0
        %2880 = vmatpush1.msra.mxu0 %v2420
        %2881 = vmatprep.subr.mxu0 0.0
        %2882 = vmatpush1.msra.mxu0 %v2421
        %2883 = vmatprep.subr.mxu0 0.0
        %2884 = vmatpush1.msra.mxu0 %v2422
        %2885 = vmatprep.subr.mxu0 0.0
        %2886 = vmatpush1.msra.mxu0 %v2423
        %2887 = vmatprep.subr.mxu0 0.0
        %2888 = vmatpush1.msra.mxu0 %v2424
        %2889 = vmatprep.subr.mxu0 0.0
        %2890 = vmatpush1.msra.mxu0 %v2425
        %2891 = vmatprep.subr.mxu0 0.0
        %2892 = vmatpush1.msra.mxu0 %v2426
        %2893 = vmatprep.subr.mxu0 0.0
        %2894 = vmatpush1.msra.mxu0 %v2427
        %2895 = vmatprep.subr.mxu0 0.0
        %2896 = vmatpush1.msra.mxu0 %v2428
        %2897 = vmatprep.subr.mxu0 0.0
        %2898 = vmatpush1.msra.mxu0 %v2429
        %2899 = vmatprep.subr.mxu0 0.0
        %2900 = vmatpush1.msra.mxu0 %v2430
        %2901 = vmatprep.subr.mxu0 0.0
        %2902 = vmatpush1.msra.mxu0 %v2431
        %2903 = vmatprep.subr.mxu0 0.0
        %2904 = vmatpush1.msra.mxu0 %v2432
        %2905 = vmatprep.subr.mxu0 0.0
        %2906 = vmatpush1.msra.mxu0 %v2433
        %2907 = vmatprep.subr.mxu0 0.0
        %2908 = vmatpush1.msra.mxu0 %v2434
        %2909 = vmatprep.subr.mxu0 0.0
        %2910 = vmatpush1.msra.mxu0 %v2435
        %2911 = vmatprep.subr.mxu0 0.0
        %2912 = vmatpush1.msra.mxu0 %v2436
        %2913 = vmatprep.subr.mxu0 0.0
        %2914 = vmatpush1.msra.mxu0 %v2437
        %2915 = vmatprep.subr.mxu0 0.0
        %2916 = vmatpush1.msra.mxu0 %v2438
        %2917 = vmatprep.subr.mxu0 0.0
        %2918 = vmatpush1.msra.mxu0 %v2439
        %2919 = vmatprep.mubr.f32.mxu0 %v2238
        %2920 = vmatmul.mubr.f32.gmra.mrb[0].mxu0 %v2236
        %v2921 = vpop.f32.mrb[0].mxu0
        %v2922 = vadd.f32 %v2852, %v2921
        %v2923 = vpop.f32.mrb[0].mxu0
        %2924 = vdwg.mxu0
        %2925 = vmatprep.subr.mxu0 0.0
        %2926 = vmatpush1.msra.mxu0 %v2440
        %2927 = vmatprep.subr.mxu0 0.0
        %2928 = vmatpush1.msra.mxu0 %v2441
        %2929 = vmatprep.subr.mxu0 0.0
        %2930 = vmatpush1.msra.mxu0 %v2442
        %2931 = vmatprep.subr.mxu0 0.0
        %2932 = vmatpush1.msra.mxu0 %v2443
        %2933 = vmatprep.subr.mxu0 0.0
        %2934 = vmatpush1.msra.mxu0 %v2444
        %2935 = vmatprep.subr.mxu0 0.0
        %2936 = vmatpush1.msra.mxu0 %v2445
        %2937 = vmatprep.subr.mxu0 0.0
        %2938 = vmatpush1.msra.mxu0 %v2446
        %2939 = vmatprep.subr.mxu0 0.0
        %2940 = vmatpush1.msra.mxu0 %v2447
        %2941 = vmatprep.subr.mxu0 0.0
        %2942 = vmatpush1.msra.mxu0 %v2448
        %2943 = vmatprep.subr.mxu0 0.0
        %2944 = vmatpush1.msra.mxu0 %v2449
        %2945 = vmatprep.subr.mxu0 0.0
        %2946 = vmatpush1.msra.mxu0 %v2450
        %2947 = vmatprep.subr.mxu0 0.0
        %2948 = vmatpush1.msra.mxu0 %v2451
        %2949 = vmatprep.subr.mxu0 0.0
        %2950 = vmatpush1.msra.mxu0 %v2452
        %2951 = vmatprep.subr.mxu0 0.0
        %2952 = vmatpush1.msra.mxu0 %v2453
        %2953 = vmatprep.subr.mxu0 0.0
        %2954 = vmatpush1.msra.mxu0 %v2454
        %2955 = vmatprep.subr.mxu0 0.0
        %2956 = vmatpush1.msra.mxu0 %v2455
        %2957 = vmatprep.subr.mxu0 0.0
        %2958 = vmatpush1.msra.mxu0 %v2456
        %2959 = vmatprep.subr.mxu0 0.0
        %2960 = vmatpush1.msra.mxu0 %v2457
        %2961 = vmatprep.subr.mxu0 0.0
        %2962 = vmatpush1.msra.mxu0 %v2458
        %2963 = vmatprep.subr.mxu0 0.0
        %2964 = vmatpush1.msra.mxu0 %v2459
        %2965 = vmatprep.subr.mxu0 0.0
        %2966 = vmatpush1.msra.mxu0 %v2460
        %2967 = vmatprep.subr.mxu0 0.0
        %2968 = vmatpush1.msra.mxu0 %v2461
        %2969 = vmatprep.subr.mxu0 0.0
        %2970 = vmatpush1.msra.mxu0 %v2462
        %2971 = vmatprep.subr.mxu0 0.0
        %2972 = vmatpush1.msra.mxu0 %v2463
        %2973 = vmatprep.subr.mxu0 0.0
        %2974 = vmatpush1.msra.mxu0 %v2464
        %2975 = vmatprep.subr.mxu0 0.0
        %2976 = vmatpush1.msra.mxu0 %v2465
        %2977 = vmatprep.subr.mxu0 0.0
        %2978 = vmatpush1.msra.mxu0 %v2466
        %2979 = vmatprep.subr.mxu0 0.0
        %2980 = vmatpush1.msra.mxu0 %v2467
        %2981 = vmatprep.subr.mxu0 0.0
        %2982 = vmatpush1.msra.mxu0 %v2468
        %2983 = vmatprep.subr.mxu0 0.0
        %2984 = vmatpush1.msra.mxu0 %v2469
        %2985 = vmatprep.subr.mxu0 0.0
        %2986 = vmatpush1.msra.mxu0 %v2470
        %2987 = vmatprep.subr.mxu0 0.0
        %2988 = vmatpush1.msra.mxu0 %v2471
        %2989 = vmatprep.mubr.f32.mxu0 %v2242
        %2990 = vmatmul.mubr.f32.gmra.mrb[0].mxu0 %v2240
        %v2991 = vpop.f32.mrb[0].mxu0
        %v2992 = vadd.f32 %v2922, %v2991
        %v2993 = vpop.f32.mrb[0].mxu0
        %2994 = vdwg.mxu0
        %2995 = vmatprep.subr.mxu0 0.0
        %2996 = vmatpush1.msra.mxu0 %v2472
        %2997 = vmatprep.subr.mxu0 0.0
        %2998 = vmatpush1.msra.mxu0 %v2473
        %2999 = vmatprep.subr.mxu0 0.0
        %3000 = vmatpush1.msra.mxu0 %v2474
        %3001 = vmatprep.subr.mxu0 0.0
        %3002 = vmatpush1.msra.mxu0 %v2475
        %3003 = vmatprep.subr.mxu0 0.0
        %3004 = vmatpush1.msra.mxu0 %v2476
        %3005 = vmatprep.subr.mxu0 0.0
        %3006 = vmatpush1.msra.mxu0 %v2477
        %3007 = vmatprep.subr.mxu0 0.0
        %3008 = vmatpush1.msra.mxu0 %v2478
        %3009 = vmatprep.subr.mxu0 0.0
        %3010 = vmatpush1.msra.mxu0 %v2479
        %3011 = vmatprep.subr.mxu0 0.0
        %3012 = vmatpush1.msra.mxu0 %v2480
        %3013 = vmatprep.subr.mxu0 0.0
        %3014 = vmatpush1.msra.mxu0 %v2481
        %3015 = vmatprep.subr.mxu0 0.0
        %3016 = vmatpush1.msra.mxu0 %v2482
        %3017 = vmatprep.subr.mxu0 0.0
        %3018 = vmatpush1.msra.mxu0 %v2483
        %3019 = vmatprep.subr.mxu0 0.0
        %3020 = vmatpush1.msra.mxu0 %v2484
        %3021 = vmatprep.subr.mxu0 0.0
        %3022 = vmatpush1.msra.mxu0 %v2485
        %3023 = vmatprep.subr.mxu0 0.0
        %3024 = vmatpush1.msra.mxu0 %v2486
        %3025 = vmatprep.subr.mxu0 0.0
        %3026 = vmatpush1.msra.mxu0 %v2487
        %3027 = vmatprep.subr.mxu0 0.0
        %3028 = vmatpush1.msra.mxu0 %v2488
        %3029 = vmatprep.subr.mxu0 0.0
        %3030 = vmatpush1.msra.mxu0 %v2489
        %3031 = vmatprep.subr.mxu0 0.0
        %3032 = vmatpush1.msra.mxu0 %v2490
        %3033 = vmatprep.subr.mxu0 0.0
        %3034 = vmatpush1.msra.mxu0 %v2491
        %3035 = vmatprep.subr.mxu0 0.0
        %3036 = vmatpush1.msra.mxu0 %v2492
        %3037 = vmatprep.subr.mxu0 0.0
        %3038 = vmatpush1.msra.mxu0 %v2493
        %3039 = vmatprep.subr.mxu0 0.0
        %3040 = vmatpush1.msra.mxu0 %v2494
        %3041 = vmatprep.subr.mxu0 0.0
        %3042 = vmatpush1.msra.mxu0 %v2495
        %3043 = vmatprep.subr.mxu0 0.0
        %3044 = vmatpush1.msra.mxu0 %v2496
        %3045 = vmatprep.subr.mxu0 0.0
        %3046 = vmatpush1.msra.mxu0 %v2497
        %3047 = vmatprep.subr.mxu0 0.0
        %3048 = vmatpush1.msra.mxu0 %v2498
        %3049 = vmatprep.subr.mxu0 0.0
        %3050 = vmatpush1.msra.mxu0 %v2499
        %3051 = vmatprep.subr.mxu0 0.0
        %3052 = vmatpush1.msra.mxu0 %v2500
        %3053 = vmatprep.subr.mxu0 0.0
        %3054 = vmatpush1.msra.mxu0 %v2501
        %3055 = vmatprep.subr.mxu0 0.0
        %3056 = vmatpush1.msra.mxu0 %v2502
        %3057 = vmatprep.subr.mxu0 0.0
        %3058 = vmatpush1.msra.mxu0 %v2503
        %3059 = vmatprep.mubr.f32.mxu0 %v2246
        %3060 = vmatmul.mubr.f32.gmra.mrb[0].mxu0 %v2244
        %v3061 = vpop.f32.mrb[0].mxu0
        %v3062 = vadd.f32 %v2992, %v3061
        %v3063 = vpop.f32.mrb[0].mxu0
        %3064 = vdwg.mxu0
        %v3065 = vld [vmem:[%s9] sm:$0xff]
        %v3066 = vld [vmem:[%s9 + $0x8] sm:$0xff]
        %v3067 = vld [vmem:[%s9 + $0x10] sm:$0xff]
        %v3068 = vld [vmem:[%s9 + $0x18] sm:$0xff]
        %v3069 = vld [vmem:[%s9 + $0x20] sm:$0xff]
        %v3070 = vld [vmem:[%s9 + $0x28] sm:$0xff]
        %v3071 = vld [vmem:[%s9 + $0x30] sm:$0xff]
        %v3072 = vld [vmem:[%s9 + $0x38] sm:$0xff]
        %v3073 = vld [vmem:[%s9 + $0x40] sm:$0xff]
        %v3074 = vld [vmem:[%s9 + $0x48] sm:$0xff]
        %v3075 = vld [vmem:[%s9 + $0x50] sm:$0xff]
        %v3076 = vld [vmem:[%s9 + $0x58] sm:$0xff]
        %v3077 = vld [vmem:[%s9 + $0x60] sm:$0xff]
        %v3078 = vld [vmem:[%s9 + $0x68] sm:$0xff]
        %v3079 = vld [vmem:[%s9 + $0x70] sm:$0xff]
        %v3080 = vld [vmem:[%s10] sm:$0x1]
        %vm3081 = vcmask 982016
        %v3083 = vsel %vm3081, %v3062, 0
        %3085 = vmatprep.subr.mxu0 0.0
        %3086 = vmatpush1.msra.mxu0 %v3065
        %3087 = vmatprep.subr.mxu0 0.0
        %3088 = vmatpush1.msra.mxu0 %v3066
        %3089 = vmatprep.subr.mxu0 0.0
        %3090 = vmatpush1.msra.mxu0 %v3067
        %3091 = vmatprep.subr.mxu0 0.0
        %3092 = vmatpush1.msra.mxu0 %v3068
        %3093 = vmatprep.subr.mxu0 0.0
        %3094 = vmatpush1.msra.mxu0 %v3069
        %3095 = vmatprep.subr.mxu0 0.0
        %3096 = vmatpush1.msra.mxu0 %v3070
        %3097 = vmatprep.subr.mxu0 0.0
        %3098 = vmatpush1.msra.mxu0 %v3071
        %3099 = vmatprep.subr.mxu0 0.0
        %3100 = vmatpush1.msra.mxu0 %v3072
        %3101 = vmatprep.subr.mxu0 0.0
        %3102 = vmatpush1.msra.mxu0 %v3073
        %3103 = vmatprep.subr.mxu0 0.0
        %3104 = vmatpush1.msra.mxu0 %v3074
        %3105 = vmatprep.subr.mxu0 0.0
        %3106 = vmatpush1.msra.mxu0 %v3075
        %3107 = vmatprep.subr.mxu0 0.0
        %3108 = vmatpush1.msra.mxu0 %v3076
        %3109 = vmatprep.subr.mxu0 0.0
        %3110 = vmatpush1.msra.mxu0 %v3077
        %3111 = vmatprep.subr.mxu0 0.0
        %3112 = vmatpush1.msra.mxu0 %v3078
        %3113 = vmatprep.subr.mxu0 0.0
        %3114 = vmatpush1.msra.mxu0 %v3079
        %3115 = vmatprep.subr.mxu0 0.0
        %3116 = vmatpush1.msra.mxu0 0.0
        %3117 = vmatprep.subr.mxu0 0.0
        %3118 = vmatpush1.msra.mxu0 0.0
        %3119 = vmatprep.subr.mxu0 0.0
        %3120 = vmatpush1.msra.mxu0 0.0
        %3121 = vmatprep.subr.mxu0 0.0
        %3122 = vmatpush1.msra.mxu0 0.0
        %3123 = vmatprep.subr.mxu0 0.0
        %3124 = vmatpush1.msra.mxu0 0.0
        %3125 = vmatprep.subr.mxu0 0.0
        %3126 = vmatpush1.msra.mxu0 0.0
        %3127 = vmatprep.subr.mxu0 0.0
        %3128 = vmatpush1.msra.mxu0 0.0
        %3129 = vmatprep.subr.mxu0 0.0
        %3130 = vmatpush1.msra.mxu0 0.0
        %3131 = vmatprep.subr.mxu0 0.0
        %3132 = vmatpush1.msra.mxu0 0.0
        %3133 = vmatprep.subr.mxu0 0.0
        %3134 = vmatpush1.msra.mxu0 0.0
        %3135 = vmatprep.subr.mxu0 0.0
        %3136 = vmatpush1.msra.mxu0 0.0
        %3137 = vmatprep.subr.mxu0 0.0
        %3138 = vmatpush1.msra.mxu0 0.0
        %3139 = vmatprep.subr.mxu0 0.0
        %3140 = vmatpush1.msra.mxu0 0.0
        %3141 = vmatprep.subr.mxu0 0.0
        %3142 = vmatpush1.msra.mxu0 0.0
        %3143 = vmatprep.subr.mxu0 0.0
        %3144 = vmatpush1.msra.mxu0 0.0
        %3145 = vmatprep.subr.mxu0 0.0
        %3146 = vmatpush1.msra.mxu0 0.0
        %3147 = vmatprep.subr.mxu0 0.0
        %3148 = vmatpush1.msra.mxu0 0.0
        %3149 = vmatprep.mubr.f32.mxu0 0.0
        %3150 = vmatmul.mubr.f32.gmra.mrb[0].mxu0 %v3083
        %v3151 = vpop.f32.mrb[0].mxu0
        %v3152 = vadd.f32 %v3080, %v3151
        %v3153 = vpop.f32.mrb[0].mxu0
        %3154 = vdwg.mxu0
        %v3155 = vmax.f32 %v3152, 0.0
        %v3156 = vld [vmem:[%s11] sm:$0xff]
        %v3157 = vld [vmem:[%s11 + $0x8] sm:$0xff]
        %v3158 = vld [vmem:[%s11 + $0x10] sm:$0xff]
        %v3159 = vld [vmem:[%s11 + $0x18] sm:$0xff]
        %v3160 = vld [vmem:[%s11 + $0x20] sm:$0xff]
        %v3161 = vld [vmem:[%s11 + $0x28] sm:$0xff]
        %v3162 = vld [vmem:[%s11 + $0x30] sm:$0xff]
        %v3163 = vld [vmem:[%s11 + $0x38] sm:$0xf]
        %v3164 = vld [vmem:[%s12] sm:$0x1]
        %vm3165 = vcmask 490496
        %v3167 = vsel %vm3165, %v3155, 0
        %vm3169 = vcmask 1043456
        %v3171 = vsel %vm3169, %v3163, 0
        %3173 = vmatprep.subr.mxu0 0.0
        %3174 = vmatpush1.msra.mxu0 %v3156
        %3175 = vmatprep.subr.mxu0 0.0
        %3176 = vmatpush1.msra.mxu0 %v3157
        %3177 = vmatprep.subr.mxu0 0.0
        %3178 = vmatpush1.msra.mxu0 %v3158
        %3179 = vmatprep.subr.mxu0 0.0
        %3180 = vmatpush1.msra.mxu0 %v3159
        %3181 = vmatprep.subr.mxu0 0.0
        %3182 = vmatpush1.msra.mxu0 %v3160
        %3183 = vmatprep.subr.mxu0 0.0
        %3184 = vmatpush1.msra.mxu0 %v3161
        %3185 = vmatprep.subr.mxu0 0.0
        %3186 = vmatpush1.msra.mxu0 %v3162
        %3187 = vmatprep.subr.mxu0 0.0
        %3188 = vmatpush1.msra.mxu0 %v3171
        %3189 = vmatprep.subr.mxu0 0.0
        %3190 = vmatpush1.msra.mxu0 0.0
        %3191 = vmatprep.subr.mxu0 0.0
        %3192 = vmatpush1.msra.mxu0 0.0
        %3193 = vmatprep.subr.mxu0 0.0
        %3194 = vmatpush1.msra.mxu0 0.0
        %3195 = vmatprep.subr.mxu0 0.0
        %3196 = vmatpush1.msra.mxu0 0.0
        %3197 = vmatprep.subr.mxu0 0.0
        %3198 = vmatpush1.msra.mxu0 0.0
        %3199 = vmatprep.subr.mxu0 0.0
        %3200 = vmatpush1.msra.mxu0 0.0
        %3201 = vmatprep.subr.mxu0 0.0
        %3202 = vmatpush1.msra.mxu0 0.0
        %3203 = vmatprep.subr.mxu0 0.0
        %3204 = vmatpush1.msra.mxu0 0.0
        %3205 = vmatprep.subr.mxu0 0.0
        %3206 = vmatpush1.msra.mxu0 0.0
        %3207 = vmatprep.subr.mxu0 0.0
        %3208 = vmatpush1.msra.mxu0 0.0
        %3209 = vmatprep.subr.mxu0 0.0
        %3210 = vmatpush1.msra.mxu0 0.0
        %3211 = vmatprep.subr.mxu0 0.0
        %3212 = vmatpush1.msra.mxu0 0.0
        %3213 = vmatprep.subr.mxu0 0.0
        %3214 = vmatpush1.msra.mxu0 0.0
        %3215 = vmatprep.subr.mxu0 0.0
        %3216 = vmatpush1.msra.mxu0 0.0
        %3217 = vmatprep.subr.mxu0 0.0
        %3218 = vmatpush1.msra.mxu0 0.0
        %3219 = vmatprep.subr.mxu0 0.0
        %3220 = vmatpush1.msra.mxu0 0.0
        %3221 = vmatprep.subr.mxu0 0.0
        %3222 = vmatpush1.msra.mxu0 0.0
        %3223 = vmatprep.subr.mxu0 0.0
        %3224 = vmatpush1.msra.mxu0 0.0
        %3225 = vmatprep.subr.mxu0 0.0
        %3226 = vmatpush1.msra.mxu0 0.0
        %3227 = vmatprep.subr.mxu0 0.0
        %3228 = vmatpush1.msra.mxu0 0.0
        %3229 = vmatprep.subr.mxu0 0.0
        %3230 = vmatpush1.msra.mxu0 0.0
        %3231 = vmatprep.subr.mxu0 0.0
        %3232 = vmatpush1.msra.mxu0 0.0
        %3233 = vmatprep.subr.mxu0 0.0
        %3234 = vmatpush1.msra.mxu0 0.0
        %3235 = vmatprep.subr.mxu0 0.0
        %3236 = vmatpush1.msra.mxu0 0.0
        %3237 = vmatprep.mubr.f32.mxu0 0.0
        %3238 = vmatmul.mubr.f32.gmra.mrb[0].mxu0 %v3167
        %v3239 = vpop.f32.mrb[0].mxu0
        %v3240 = vadd.f32 %v3164, %v3239
        %v3241 = vpop.f32.mrb[0].mxu0
        %3242 = vdwg.mxu0
        %vm3243 = vcmask 73728
        %3244 = vst.msk [vmem:[%s430] sm:$0x1] %vm3243, %v3240
        %s3245 = sand.u32 %s313, 1
        %s3246 = scalar_lea.sflag [#allocation3], %s3245
        %s3247 = sand.u32 %s313, 1
        %s3248 = scalar_lea.vmem [#allocation2], %s3247
        // Predicated region
        $region73: #{cnn_forward.1} parent=71 // pred_check
          %p3249 = pneg %p323
        $region74: #{cnn_forward.1} parent=71 // pred_check_branch
          %3251 = sbr.rel (%p3249) target = $region76
        $region75: #{cnn_forward.1} parent=71 // pred_region
          %s3253 = ssub.s32 16, 16
          %3254 = vsyncadd %s3246, %s3253
          %s3255 = smul.addr %s27, 16
          %s3256 = scalar_lea.hbm %s13, %s3255
          %s3258 = sshll.u32 %s3248, 4
          %s3259 = int_to_ptr.vmem [resolvable:$true] %s3258
          %3261 = dma.vmem_to_hbm [thread:$0]  %s3259, 16, %s3256, %s3246
        $region76: #{cnn_forward.1} parent=71 // pred_fallthru
          _
      $region72: #{cnn_forward.1} parent=5 // pred_fallthru
        _
      %p3262 = scmp.le.s32.totalorder 2, %s22
      // Predicated region
      $region77: #{cnn_forward.1} parent=5 // pred_check
        %p3263 = pneg %p3262
      $region78: #{cnn_forward.1} parent=5 // pred_check_branch
        %3265 = sbr.rel (%p3263) target = $region80
      $region79: #{cnn_forward.1} parent=5 // pred_region
        %s3266 = ssub.s32 %s22, 2
        // Predicated region
        $region81: #{cnn_forward.1} parent=79 // pred_check
          %p3267 = pneg %p329
        $region82: #{cnn_forward.1} parent=79 // pred_check_branch
          %3269 = sbr.rel (%p3267) target = $region84
        $region83: #{cnn_forward.1} parent=79 // pred_region
          %s3270 = sand.u32 %s314, 1
          %s3271 = scalar_lea.sflag [#allocation3], %s3270
          %s3272 = sand.u32 %s314, 1
          %s3273 = scalar_lea.vmem [#allocation2], %s3272
          %3274 = dma.done %s3271, 16
        $region84: #{cnn_forward.1} parent=79 // pred_fallthru
          _
      $region80: #{cnn_forward.1} parent=5 // pred_fallthru
        _
    $region6: #{cnn_forward.1} parent=1 // loop_footer
      %s26 = sadd.s32 1, %s22
    $region7: #{cnn_forward.1} parent=1 // loop_footer_branch
      %21 = sbr.rel target = $region3
    $region8: #{cnn_forward.1} parent=1 // loop_exit
      _
    %3275 = vsyncpa [#allocation3], 1
    %s3276 = scalar_lea.sflag [#allocation3], 1
    %3277 = vsyncpa %s3276, 1

</llo_original>
